<compile_context>
chip_gen: v7x
topology: tpu7x:2x2x1
jax: 0.10.0
libtpu: 0.0.40
codegen_flags: <defaults>
</compile_context>

<pallas_src>
import jax
import jax.numpy as jnp
from jax.experimental import pallas as pl
from jax.experimental.pallas import tpu as pltpu


def make_gru_model_kernel(BP, T, HP, L, OP):
    """Kernel closed over static (padded) sizes.

    Ref order:
      [x_slab (T*BP, F0)]
      + L * [Wi_all (F_l, 3*HP), Wh_all (HP, 3*HP), bi_all (1, 3*HP), bhn (1, HP)]
      + [Wlin_flat (T*HP, OP), blin (1, OP)]
      + [out (BP, OP)]
      + scratches [seq (T*BP, HP), flat (BP, T*HP)]
    """

    def kernel(*refs):
        x_ref = refs[0]
        layer_refs = refs[1:1 + 4 * L]
        wlin_ref = refs[1 + 4 * L]      # (T*HP, OP)
        blin_ref = refs[2 + 4 * L]      # (1, OP)
        out_ref = refs[3 + 4 * L]       # (BP, OP)
        seq_ref = refs[4 + 4 * L]       # VMEM scratch (T*BP, HP): inter-layer slab
        flat_ref = refs[5 + 4 * L]      # VMEM scratch (BP, T*HP): readout slab

        stack = x_ref[...]              # (T*BP, F), row t*BP + b == timestep t, batch b

        for l in range(L):
            wi_r, wh_r, bi_r, bhn_r = layer_refs[4 * l:4 * (l + 1)]

            # One batched input projection for all T timesteps (bir+bhr, biz+bhz, bin
            # folded into bi_all).  (T*BP, 3*HP); gate g lives at lanes [g*HP,(g+1)*HP).
            gi_all = (jnp.dot(stack, wi_r[...], preferred_element_type=jnp.float32)
                      + bi_r[...])
            wh = wh_r[...]                                           # (HP, 3*HP)
            bhn_b = jnp.broadcast_to(bhn_r[...], (BP, HP))           # hoisted broadcast

            h = jnp.zeros((BP, HP), dtype=jnp.float32)
            for t in range(T):
                gi_t = gi_all[t * BP:(t + 1) * BP, :]                # tile-aligned slice
                gh = jnp.dot(h, wh, preferred_element_type=jnp.float32)  # (BP, 3*HP)

                # 128-aligned gate extraction (plain vreg selection, no lane rotates).
                rz = jax.nn.sigmoid(gi_t[:, :2 * HP] + gh[:, :2 * HP])
                r = rz[:, :HP]
                z = rz[:, HP:]
                n = jnp.tanh(gi_t[:, 2 * HP:] + r * (gh[:, 2 * HP:] + bhn_b))
                h = n + z * (h - n)        # == (1-z)*n + z*h, one fewer VPU op

                if l < L - 1:
                    # full (8,128)-tile store into the next layer's time-major slab
                    seq_ref[t * BP:(t + 1) * BP, :] = h
                else:
                    # 128-lane-aligned, unmasked store into the readout slab
                    flat_ref[:, t * HP:(t + 1) * HP] = h

            if l < L - 1:
                stack = seq_ref[...]                                 # (T*BP, HP)

        # TODO(synk): nn.Dropout is stochastic; identity at inference, so omitted.
        # tanh + Flatten(window, hidden) + Linear == tanh(flat) @ Wlin_flat + blin
        # (padded lanes of flat are exactly 0 and padded Wlin rows are 0).
        out_ref[...] = (jnp.dot(jnp.tanh(flat_ref[...]), wlin_ref[...],
                                preferred_element_type=jnp.float32)
                        + blin_ref[...])

    return kernel


def init_params(key, I, H, T, L):
    """Deterministic synthetic params (PyTorch-style uniform(-1/sqrt(H), 1/sqrt(H))).
    Gate weights are stored already transposed per gate: W_* has shape (in_feat, H)."""
    bound = 1.0 / (H ** 0.5)
    params = {"layers": []}
    for l in range(L):
        in_feat = I if l == 0 else H
        key, *ks = jax.random.split(key, 13)
        u = lambda k, shape: jax.random.uniform(k, shape, jnp.float32, -bound, bound)
        layer = {
            "Wir": u(ks[0], (in_feat, H)), "Wiz": u(ks[1], (in_feat, H)), "Win": u(ks[2], (in_feat, H)),
            "Whr": u(ks[3], (H, H)), "Whz": u(ks[4], (H, H)), "Whn": u(ks[5], (H, H)),
            "bir": u(ks[6], (1, H)), "biz": u(ks[7], (1, H)), "bin": u(ks[8], (1, H)),
            "bhr": u(ks[9], (1, H)), "bhz": u(ks[10], (1, H)), "bhn": u(ks[11], (1, H)),
        }
        params["layers"].append(layer)
    key, k1, k2 = jax.random.split(key, 3)
    lb = 1.0 / ((H * T) ** 0.5)
    # nn.Linear(hidden*window, input): weight (I, T*H); stored transposed as (T, H, I).
    params["Wlin"] = jax.random.uniform(k1, (T, H, I), jnp.float32, -lb, lb)
    params["blin"] = jax.random.uniform(k2, (1, I), jnp.float32, -lb, lb)
    return params


def _pad2(a, rows, cols):
    return jnp.pad(a, ((0, rows - a.shape[0]), (0, cols - a.shape[1])))


def prepare_params(params, I, H, T, L):
    """One-time fusion + zero-padding of weights into the TPU-friendly layout.
    Each gate block is padded to HP=128 lanes; padded rows/cols are zero, so padded
    lanes of the hidden state stay exactly 0 and contribute nothing downstream."""
    HP = ((H + 127) // 128) * 128
    OP = ((I + 127) // 128) * 128
    prep = {"layers": []}
    for l in range(L):
        lp = params["layers"][l]
        rows = I if l == 0 else HP                      # layer>0 consumes padded slab
        wi = jnp.concatenate([_pad2(lp["Wir"], rows, HP),
                              _pad2(lp["Wiz"], rows, HP),
                              _pad2(lp["Win"], rows, HP)], axis=1)           # (rows, 3*HP)
        wh = jnp.concatenate([_pad2(lp["Whr"], HP, HP),
                              _pad2(lp["Whz"], HP, HP),
                              _pad2(lp["Whn"], HP, HP)], axis=1)             # (HP, 3*HP)
        bi = jnp.concatenate([_pad2(lp["bir"] + lp["bhr"], 1, HP),
                              _pad2(lp["biz"] + lp["bhz"], 1, HP),
                              _pad2(lp["bin"], 1, HP)], axis=1)              # (1, 3*HP)
        bhn = _pad2(lp["bhn"], 1, HP)                                        # (1, HP)
        prep["layers"].append((wi, wh, bi, bhn))
    # (T, H, I) -> (T, HP, OP) -> (T*HP, OP): row t*HP + j holds Wlin[t, j, :]
    prep["wlin"] = jnp.pad(params["Wlin"],
                           ((0, 0), (0, HP - H), (0, OP - I))).reshape(T * HP, OP)
    prep["blin"] = _pad2(params["blin"], 1, OP)
    return prep


@jax.jit
def gru_model_forward(x, prep):
    """x: (batch, input_size, window) as in the PyTorch forward; prep from prepare_params."""
    B, I, T = x.shape
    BP = max(8, ((B + 7) // 8) * 8)                     # batch padded to 8 sublanes
    HP = prep["layers"][0][1].shape[0]                  # padded hidden (128)
    OP = prep["blin"].shape[1]                          # padded output lanes (128)
    L = len(prep["layers"])

    # (B, I, T) -> (T, B, I) -> pad batch to BP -> (T*BP, I); padded rows are zero.
    xt = jnp.transpose(x, (2, 0, 1)).astype(jnp.float32)
    x_slab = jnp.pad(xt, ((0, 0), (0, BP - B), (0, 0))).reshape(T * BP, I)

    flat_inputs = [x_slab]
    for layer in prep["layers"]:
        flat_inputs += list(layer)
    flat_inputs += [prep["wlin"], prep["blin"]]

    kernel = make_gru_model_kernel(BP, T, HP, L, OP)
    out = pl.pallas_call(
        kernel,
        out_shape=jax.ShapeDtypeStruct((BP, OP), jnp.float32),
        in_specs=[pl.BlockSpec(memory_space=pltpu.MemorySpace.VMEM)] * len(flat_inputs),
        out_specs=pl.BlockSpec(memory_space=pltpu.MemorySpace.VMEM),
        scratch_shapes=[pltpu.VMEM((T * BP, HP), jnp.float32),
                        pltpu.VMEM((BP, T * HP), jnp.float32)],
    )(*flat_inputs)
    return out[:B, :I]


def reference_forward(x, params, hidden_size, num_layers):
    """Plain-JAX reference mirroring torch semantics (eval mode)."""
    B, I, T = x.shape
    H = hidden_size
    seq = jnp.transpose(x, (0, 2, 1)).astype(jnp.float32)  # (B, T, I)
    for l in range(num_layers):
        lp = params["layers"][l]
        h = jnp.zeros((B, H), jnp.float32)
        outs = []
        for t in range(T):
            x_t = seq[:, t, :]
            r = jax.nn.sigmoid(x_t @ lp["Wir"] + lp["bir"] + h @ lp["Whr"] + lp["bhr"])
            z = jax.nn.sigmoid(x_t @ lp["Wiz"] + lp["biz"] + h @ lp["Whz"] + lp["bhz"])
            n = jnp.tanh(x_t @ lp["Win"] + lp["bin"] + r * (h @ lp["Whn"] + lp["bhn"]))
            h = (1.0 - z) * n + z * h
            outs.append(h)
        seq = jnp.stack(outs, axis=1)  # (B, T, H)
    seq = jnp.tanh(seq)                                   # dropout = identity (eval)
    flat = seq.reshape(B, T * H)                          # Flatten over (window, hidden)
    wlin_flat = params["Wlin"].reshape(T * H, I)
    return flat @ wlin_flat + params["blin"]


if __name__ == "__main__":
    # Small shapes consistent with the module:
    # input_size=4 channels, window_size=8 time steps, hidden_size=32, num_layers=2.
    B, I, H, T, L = 2, 4, 32, 8, 2
    key = jax.random.PRNGKey(0)
    kx, kp = jax.random.split(key)
    x = jax.random.normal(kx, (B, I, T), jnp.float32)     # PyTorch input layout (N, C, W)
    params = init_params(kp, I, H, T, L)

    prep = prepare_params(params, I, H, T, L)             # one-time weight fusion/padding
    out = gru_model_forward(x, prep)
    out = jax.block_until_ready(out)

    ref = reference_forward(x, params, H, L)
    assert out.shape == (B, I)
    assert jnp.allclose(out, ref, atol=1e-4, rtol=1e-4), "mismatch vs reference"
    print("KERNEL_OK")
</pallas_src>

<mosaic_0001>
module attributes {stable_mosaic.version = 11 : i64} {
  func.func @kernel(%arg0: memref<64x4xf32, #tpu.memory_space<vmem>>, %arg1: memref<4x384xf32, #tpu.memory_space<vmem>>, %arg2: memref<128x384xf32, #tpu.memory_space<vmem>>, %arg3: memref<1x384xf32, #tpu.memory_space<vmem>>, %arg4: memref<1x128xf32, #tpu.memory_space<vmem>>, %arg5: memref<128x384xf32, #tpu.memory_space<vmem>>, %arg6: memref<128x384xf32, #tpu.memory_space<vmem>>, %arg7: memref<1x384xf32, #tpu.memory_space<vmem>>, %arg8: memref<1x128xf32, #tpu.memory_space<vmem>>, %arg9: memref<1024x128xf32, #tpu.memory_space<vmem>>, %arg10: memref<1x128xf32, #tpu.memory_space<vmem>>, %arg11: memref<8x128xf32, #tpu.memory_space<vmem>>, %arg12: memref<64x128xf32, #tpu.memory_space<vmem>>, %arg13: memref<8x1024xf32, #tpu.memory_space<vmem>>) attributes {dimension_semantics = [], scalar_prefetch = 0 : i64, scratch_operands = 2 : i64, tpu.core_type = #tpu.core_type<tc>} {
    %c0 = arith.constant 0 : index
    %c0_0 = arith.constant 0 : index
    %0 = vector.load %arg0[%c0, %c0_0] : memref<64x4xf32, #tpu.memory_space<vmem>>, vector<64x4xf32>
    %c0_1 = arith.constant 0 : index
    %c0_2 = arith.constant 0 : index
    %1 = vector.load %arg1[%c0_1, %c0_2] : memref<4x384xf32, #tpu.memory_space<vmem>>, vector<4x384xf32>
    %cst = arith.constant dense<0.000000e+00> : vector<64x384xf32>
    %2 = tpu.matmul %0, %1, %cst {dimension_numbers = #tpu.dot_dimension_numbers<[1], [0], [0], [1], [0, 0, 1, 1], [], []>} : vector<64x4xf32>, vector<4x384xf32>, vector<64x384xf32> -> vector<64x384xf32>
    %c0_3 = arith.constant 0 : index
    %c0_4 = arith.constant 0 : index
    %3 = vector.load %arg3[%c0_3, %c0_4] : memref<1x384xf32, #tpu.memory_space<vmem>>, vector<1x384xf32>
    %4 = vector.broadcast %3 : vector<1x384xf32> to vector<64x384xf32>
    %5 = arith.addf %2, %4 : vector<64x384xf32>
    %c0_5 = arith.constant 0 : index
    %c0_6 = arith.constant 0 : index
    %6 = vector.load %arg2[%c0_5, %c0_6] : memref<128x384xf32, #tpu.memory_space<vmem>>, vector<128x384xf32>
    %c0_7 = arith.constant 0 : index
    %c0_8 = arith.constant 0 : index
    %7 = vector.load %arg4[%c0_7, %c0_8] : memref<1x128xf32, #tpu.memory_space<vmem>>, vector<1x128xf32>
    %8 = vector.shape_cast %7 : vector<1x128xf32> to vector<1x128xf32>
    %9 = vector.broadcast %8 : vector<1x128xf32> to vector<8x128xf32>
    %cst_9 = arith.constant 0.000000e+00 : f32
    %10 = vector.broadcast %cst_9 : f32 to vector<8x128xf32>
    %11 = vector.extract_strided_slice %5 {offsets = [0, 0], sizes = [8, 384], strides = [1, 1]} : vector<64x384xf32> to vector<8x384xf32>
    %cst_10 = arith.constant dense<0.000000e+00> : vector<8x384xf32>
    %12 = tpu.matmul %10, %6, %cst_10 {dimension_numbers = #tpu.dot_dimension_numbers<[1], [0], [0], [1], [0, 0, 1, 1], [], []>} : vector<8x128xf32>, vector<128x384xf32>, vector<8x384xf32> -> vector<8x384xf32>
    %13 = vector.extract_strided_slice %11 {offsets = [0, 0], sizes = [8, 256], strides = [1, 1]} : vector<8x384xf32> to vector<8x256xf32>
    %14 = vector.extract_strided_slice %12 {offsets = [0, 0], sizes = [8, 256], strides = [1, 1]} : vector<8x384xf32> to vector<8x256xf32>
    %15 = arith.addf %13, %14 : vector<8x256xf32>
    %16 = arith.negf %15 : vector<8x256xf32>
    %17 = math.exp %16 : vector<8x256xf32>
    %cst_11 = arith.constant 1.000000e+00 : f32
    %18 = vector.broadcast %cst_11 : f32 to vector<8x256xf32>
    %19 = arith.addf %18, %17 : vector<8x256xf32>
    %20 = arith.divf %18, %19 : vector<8x256xf32>
    %21 = vector.extract_strided_slice %20 {offsets = [0, 0], sizes = [8, 128], strides = [1, 1]} : vector<8x256xf32> to vector<8x128xf32>
    %22 = vector.extract_strided_slice %20 {offsets = [0, 128], sizes = [8, 128], strides = [1, 1]} : vector<8x256xf32> to vector<8x128xf32>
    %23 = vector.extract_strided_slice %11 {offsets = [0, 256], sizes = [8, 128], strides = [1, 1]} : vector<8x384xf32> to vector<8x128xf32>
    %24 = vector.extract_strided_slice %12 {offsets = [0, 256], sizes = [8, 128], strides = [1, 1]} : vector<8x384xf32> to vector<8x128xf32>
    %25 = arith.addf %24, %9 : vector<8x128xf32>
    %26 = arith.mulf %21, %25 : vector<8x128xf32>
    %27 = arith.addf %23, %26 : vector<8x128xf32>
    %28 = math.tanh %27 : vector<8x128xf32>
    %29 = arith.subf %10, %28 : vector<8x128xf32>
    %30 = arith.mulf %22, %29 : vector<8x128xf32>
    %31 = arith.addf %28, %30 : vector<8x128xf32>
    %c0_12 = arith.constant 0 : index
    %c0_13 = arith.constant 0 : index
    %32 = vector.load %arg12[%c0_12, %c0_13] : memref<64x128xf32, #tpu.memory_space<vmem>>, vector<8x128xf32>
    tpu.vector_store %arg12[%c0_12, %c0_13], %31 {strides = array<i32>} : memref<64x128xf32, #tpu.memory_space<vmem>>, vector<8x128xf32>,
    %33 = vector.extract_strided_slice %5 {offsets = [8, 0], sizes = [8, 384], strides = [1, 1]} : vector<64x384xf32> to vector<8x384xf32>
    %cst_14 = arith.constant dense<0.000000e+00> : vector<8x384xf32>
    %34 = tpu.matmul %31, %6, %cst_14 {dimension_numbers = #tpu.dot_dimension_numbers<[1], [0], [0], [1], [0, 0, 1, 1], [], []>} : vector<8x128xf32>, vector<128x384xf32>, vector<8x384xf32> -> vector<8x384xf32>
    %35 = vector.extract_strided_slice %33 {offsets = [0, 0], sizes = [8, 256], strides = [1, 1]} : vector<8x384xf32> to vector<8x256xf32>
    %36 = vector.extract_strided_slice %34 {offsets = [0, 0], sizes = [8, 256], strides = [1, 1]} : vector<8x384xf32> to vector<8x256xf32>
    %37 = arith.addf %35, %36 : vector<8x256xf32>
    %38 = arith.negf %37 : vector<8x256xf32>
    %39 = math.exp %38 : vector<8x256xf32>
    %cst_15 = arith.constant 1.000000e+00 : f32
    %40 = vector.broadcast %cst_15 : f32 to vector<8x256xf32>
    %41 = arith.addf %40, %39 : vector<8x256xf32>
    %42 = arith.divf %40, %41 : vector<8x256xf32>
    %43 = vector.extract_strided_slice %42 {offsets = [0, 0], sizes = [8, 128], strides = [1, 1]} : vector<8x256xf32> to vector<8x128xf32>
    %44 = vector.extract_strided_slice %42 {offsets = [0, 128], sizes = [8, 128], strides = [1, 1]} : vector<8x256xf32> to vector<8x128xf32>
    %45 = vector.extract_strided_slice %33 {offsets = [0, 256], sizes = [8, 128], strides = [1, 1]} : vector<8x384xf32> to vector<8x128xf32>
    %46 = vector.extract_strided_slice %34 {offsets = [0, 256], sizes = [8, 128], strides = [1, 1]} : vector<8x384xf32> to vector<8x128xf32>
    %47 = arith.addf %46, %9 : vector<8x128xf32>
    %48 = arith.mulf %43, %47 : vector<8x128xf32>
    %49 = arith.addf %45, %48 : vector<8x128xf32>
    %50 = math.tanh %49 : vector<8x128xf32>
    %51 = arith.subf %31, %50 : vector<8x128xf32>
    %52 = arith.mulf %44, %51 : vector<8x128xf32>
    %53 = arith.addf %50, %52 : vector<8x128xf32>
    %c8 = arith.constant 8 : index
    %c0_16 = arith.constant 0 : index
    %54 = vector.load %arg12[%c8, %c0_16] : memref<64x128xf32, #tpu.memory_space<vmem>>, vector<8x128xf32>
    tpu.vector_store %arg12[%c8, %c0_16], %53 {strides = array<i32>} : memref<64x128xf32, #tpu.memory_space<vmem>>, vector<8x128xf32>,
    %55 = vector.extract_strided_slice %5 {offsets = [16, 0], sizes = [8, 384], strides = [1, 1]} : vector<64x384xf32> to vector<8x384xf32>
    %cst_17 = arith.constant dense<0.000000e+00> : vector<8x384xf32>
    %56 = tpu.matmul %53, %6, %cst_17 {dimension_numbers = #tpu.dot_dimension_numbers<[1], [0], [0], [1], [0, 0, 1, 1], [], []>} : vector<8x128xf32>, vector<128x384xf32>, vector<8x384xf32> -> vector<8x384xf32>
    %57 = vector.extract_strided_slice %55 {offsets = [0, 0], sizes = [8, 256], strides = [1, 1]} : vector<8x384xf32> to vector<8x256xf32>
    %58 = vector.extract_strided_slice %56 {offsets = [0, 0], sizes = [8, 256], strides = [1, 1]} : vector<8x384xf32> to vector<8x256xf32>
    %59 = arith.addf %57, %58 : vector<8x256xf32>
    %60 = arith.negf %59 : vector<8x256xf32>
    %61 = math.exp %60 : vector<8x256xf32>
    %cst_18 = arith.constant 1.000000e+00 : f32
    %62 = vector.broadcast %cst_18 : f32 to vector<8x256xf32>
    %63 = arith.addf %62, %61 : vector<8x256xf32>
    %64 = arith.divf %62, %63 : vector<8x256xf32>
    %65 = vector.extract_strided_slice %64 {offsets = [0, 0], sizes = [8, 128], strides = [1, 1]} : vector<8x256xf32> to vector<8x128xf32>
    %66 = vector.extract_strided_slice %64 {offsets = [0, 128], sizes = [8, 128], strides = [1, 1]} : vector<8x256xf32> to vector<8x128xf32>
    %67 = vector.extract_strided_slice %55 {offsets = [0, 256], sizes = [8, 128], strides = [1, 1]} : vector<8x384xf32> to vector<8x128xf32>
    %68 = vector.extract_strided_slice %56 {offsets = [0, 256], sizes = [8, 128], strides = [1, 1]} : vector<8x384xf32> to vector<8x128xf32>
    %69 = arith.addf %68, %9 : vector<8x128xf32>
    %70 = arith.mulf %65, %69 : vector<8x128xf32>
    %71 = arith.addf %67, %70 : vector<8x128xf32>
    %72 = math.tanh %71 : vector<8x128xf32>
    %73 = arith.subf %53, %72 : vector<8x128xf32>
    %74 = arith.mulf %66, %73 : vector<8x128xf32>
    %75 = arith.addf %72, %74 : vector<8x128xf32>
    %c16 = arith.constant 16 : index
    %c0_19 = arith.constant 0 : index
    %76 = vector.load %arg12[%c16, %c0_19] : memref<64x128xf32, #tpu.memory_space<vmem>>, vector<8x128xf32>
    tpu.vector_store %arg12[%c16, %c0_19], %75 {strides = array<i32>} : memref<64x128xf32, #tpu.memory_space<vmem>>, vector<8x128xf32>,
    %77 = vector.extract_strided_slice %5 {offsets = [24, 0], sizes = [8, 384], strides = [1, 1]} : vector<64x384xf32> to vector<8x384xf32>
    %cst_20 = arith.constant dense<0.000000e+00> : vector<8x384xf32>
    %78 = tpu.matmul %75, %6, %cst_20 {dimension_numbers = #tpu.dot_dimension_numbers<[1], [0], [0], [1], [0, 0, 1, 1], [], []>} : vector<8x128xf32>, vector<128x384xf32>, vector<8x384xf32> -> vector<8x384xf32>
    %79 = vector.extract_strided_slice %77 {offsets = [0, 0], sizes = [8, 256], strides = [1, 1]} : vector<8x384xf32> to vector<8x256xf32>
    %80 = vector.extract_strided_slice %78 {offsets = [0, 0], sizes = [8, 256], strides = [1, 1]} : vector<8x384xf32> to vector<8x256xf32>
    %81 = arith.addf %79, %80 : vector<8x256xf32>
    %82 = arith.negf %81 : vector<8x256xf32>
    %83 = math.exp %82 : vector<8x256xf32>
    %cst_21 = arith.constant 1.000000e+00 : f32
    %84 = vector.broadcast %cst_21 : f32 to vector<8x256xf32>
    %85 = arith.addf %84, %83 : vector<8x256xf32>
    %86 = arith.divf %84, %85 : vector<8x256xf32>
    %87 = vector.extract_strided_slice %86 {offsets = [0, 0], sizes = [8, 128], strides = [1, 1]} : vector<8x256xf32> to vector<8x128xf32>
    %88 = vector.extract_strided_slice %86 {offsets = [0, 128], sizes = [8, 128], strides = [1, 1]} : vector<8x256xf32> to vector<8x128xf32>
    %89 = vector.extract_strided_slice %77 {offsets = [0, 256], sizes = [8, 128], strides = [1, 1]} : vector<8x384xf32> to vector<8x128xf32>
    %90 = vector.extract_strided_slice %78 {offsets = [0, 256], sizes = [8, 128], strides = [1, 1]} : vector<8x384xf32> to vector<8x128xf32>
    %91 = arith.addf %90, %9 : vector<8x128xf32>
    %92 = arith.mulf %87, %91 : vector<8x128xf32>
    %93 = arith.addf %89, %92 : vector<8x128xf32>
    %94 = math.tanh %93 : vector<8x128xf32>
    %95 = arith.subf %75, %94 : vector<8x128xf32>
    %96 = arith.mulf %88, %95 : vector<8x128xf32>
    %97 = arith.addf %94, %96 : vector<8x128xf32>
    %c24 = arith.constant 24 : index
    %c0_22 = arith.constant 0 : index
    %98 = vector.load %arg12[%c24, %c0_22] : memref<64x128xf32, #tpu.memory_space<vmem>>, vector<8x128xf32>
    tpu.vector_store %arg12[%c24, %c0_22], %97 {strides = array<i32>} : memref<64x128xf32, #tpu.memory_space<vmem>>, vector<8x128xf32>,
    %99 = vector.extract_strided_slice %5 {offsets = [32, 0], sizes = [8, 384], strides = [1, 1]} : vector<64x384xf32> to vector<8x384xf32>
    %cst_23 = arith.constant dense<0.000000e+00> : vector<8x384xf32>
    %100 = tpu.matmul %97, %6, %cst_23 {dimension_numbers = #tpu.dot_dimension_numbers<[1], [0], [0], [1], [0, 0, 1, 1], [], []>} : vector<8x128xf32>, vector<128x384xf32>, vector<8x384xf32> -> vector<8x384xf32>
    %101 = vector.extract_strided_slice %99 {offsets = [0, 0], sizes = [8, 256], strides = [1, 1]} : vector<8x384xf32> to vector<8x256xf32>
    %102 = vector.extract_strided_slice %100 {offsets = [0, 0], sizes = [8, 256], strides = [1, 1]} : vector<8x384xf32> to vector<8x256xf32>
    %103 = arith.addf %101, %102 : vector<8x256xf32>
    %104 = arith.negf %103 : vector<8x256xf32>
    %105 = math.exp %104 : vector<8x256xf32>
    %cst_24 = arith.constant 1.000000e+00 : f32
    %106 = vector.broadcast %cst_24 : f32 to vector<8x256xf32>
    %107 = arith.addf %106, %105 : vector<8x256xf32>
    %108 = arith.divf %106, %107 : vector<8x256xf32>
    %109 = vector.extract_strided_slice %108 {offsets = [0, 0], sizes = [8, 128], strides = [1, 1]} : vector<8x256xf32> to vector<8x128xf32>
    %110 = vector.extract_strided_slice %108 {offsets = [0, 128], sizes = [8, 128], strides = [1, 1]} : vector<8x256xf32> to vector<8x128xf32>
    %111 = vector.extract_strided_slice %99 {offsets = [0, 256], sizes = [8, 128], strides = [1, 1]} : vector<8x384xf32> to vector<8x128xf32>
    %112 = vector.extract_strided_slice %100 {offsets = [0, 256], sizes = [8, 128], strides = [1, 1]} : vector<8x384xf32> to vector<8x128xf32>
    %113 = arith.addf %112, %9 : vector<8x128xf32>
    %114 = arith.mulf %109, %113 : vector<8x128xf32>
    %115 = arith.addf %111, %114 : vector<8x128xf32>
    %116 = math.tanh %115 : vector<8x128xf32>
    %117 = arith.subf %97, %116 : vector<8x128xf32>
    %118 = arith.mulf %110, %117 : vector<8x128xf32>
    %119 = arith.addf %116, %118 : vector<8x128xf32>
    %c32 = arith.constant 32 : index
    %c0_25 = arith.constant 0 : index
    %120 = vector.load %arg12[%c32, %c0_25] : memref<64x128xf32, #tpu.memory_space<vmem>>, vector<8x128xf32>
    tpu.vector_store %arg12[%c32, %c0_25], %119 {strides = array<i32>} : memref<64x128xf32, #tpu.memory_space<vmem>>, vector<8x128xf32>,
    %121 = vector.extract_strided_slice %5 {offsets = [40, 0], sizes = [8, 384], strides = [1, 1]} : vector<64x384xf32> to vector<8x384xf32>
    %cst_26 = arith.constant dense<0.000000e+00> : vector<8x384xf32>
    %122 = tpu.matmul %119, %6, %cst_26 {dimension_numbers = #tpu.dot_dimension_numbers<[1], [0], [0], [1], [0, 0, 1, 1], [], []>} : vector<8x128xf32>, vector<128x384xf32>, vector<8x384xf32> -> vector<8x384xf32>
    %123 = vector.extract_strided_slice %121 {offsets = [0, 0], sizes = [8, 256], strides = [1, 1]} : vector<8x384xf32> to vector<8x256xf32>
    %124 = vector.extract_strided_slice %122 {offsets = [0, 0], sizes = [8, 256], strides = [1, 1]} : vector<8x384xf32> to vector<8x256xf32>
    %125 = arith.addf %123, %124 : vector<8x256xf32>
    %126 = arith.negf %125 : vector<8x256xf32>
    %127 = math.exp %126 : vector<8x256xf32>
    %cst_27 = arith.constant 1.000000e+00 : f32
    %128 = vector.broadcast %cst_27 : f32 to vector<8x256xf32>
    %129 = arith.addf %128, %127 : vector<8x256xf32>
    %130 = arith.divf %128, %129 : vector<8x256xf32>
    %131 = vector.extract_strided_slice %130 {offsets = [0, 0], sizes = [8, 128], strides = [1, 1]} : vector<8x256xf32> to vector<8x128xf32>
    %132 = vector.extract_strided_slice %130 {offsets = [0, 128], sizes = [8, 128], strides = [1, 1]} : vector<8x256xf32> to vector<8x128xf32>
    %133 = vector.extract_strided_slice %121 {offsets = [0, 256], sizes = [8, 128], strides = [1, 1]} : vector<8x384xf32> to vector<8x128xf32>
    %134 = vector.extract_strided_slice %122 {offsets = [0, 256], sizes = [8, 128], strides = [1, 1]} : vector<8x384xf32> to vector<8x128xf32>
    %135 = arith.addf %134, %9 : vector<8x128xf32>
    %136 = arith.mulf %131, %135 : vector<8x128xf32>
    %137 = arith.addf %133, %136 : vector<8x128xf32>
    %138 = math.tanh %137 : vector<8x128xf32>
    %139 = arith.subf %119, %138 : vector<8x128xf32>
    %140 = arith.mulf %132, %139 : vector<8x128xf32>
    %141 = arith.addf %138, %140 : vector<8x128xf32>
    %c40 = arith.constant 40 : index
    %c0_28 = arith.constant 0 : index
    %142 = vector.load %arg12[%c40, %c0_28] : memref<64x128xf32, #tpu.memory_space<vmem>>, vector<8x128xf32>
    tpu.vector_store %arg12[%c40, %c0_28], %141 {strides = array<i32>} : memref<64x128xf32, #tpu.memory_space<vmem>>, vector<8x128xf32>,
    %143 = vector.extract_strided_slice %5 {offsets = [48, 0], sizes = [8, 384], strides = [1, 1]} : vector<64x384xf32> to vector<8x384xf32>
    %cst_29 = arith.constant dense<0.000000e+00> : vector<8x384xf32>
    %144 = tpu.matmul %141, %6, %cst_29 {dimension_numbers = #tpu.dot_dimension_numbers<[1], [0], [0], [1], [0, 0, 1, 1], [], []>} : vector<8x128xf32>, vector<128x384xf32>, vector<8x384xf32> -> vector<8x384xf32>
    %145 = vector.extract_strided_slice %143 {offsets = [0, 0], sizes = [8, 256], strides = [1, 1]} : vector<8x384xf32> to vector<8x256xf32>
    %146 = vector.extract_strided_slice %144 {offsets = [0, 0], sizes = [8, 256], strides = [1, 1]} : vector<8x384xf32> to vector<8x256xf32>
    %147 = arith.addf %145, %146 : vector<8x256xf32>
    %148 = arith.negf %147 : vector<8x256xf32>
    %149 = math.exp %148 : vector<8x256xf32>
    %cst_30 = arith.constant 1.000000e+00 : f32
    %150 = vector.broadcast %cst_30 : f32 to vector<8x256xf32>
    %151 = arith.addf %150, %149 : vector<8x256xf32>
    %152 = arith.divf %150, %151 : vector<8x256xf32>
    %153 = vector.extract_strided_slice %152 {offsets = [0, 0], sizes = [8, 128], strides = [1, 1]} : vector<8x256xf32> to vector<8x128xf32>
    %154 = vector.extract_strided_slice %152 {offsets = [0, 128], sizes = [8, 128], strides = [1, 1]} : vector<8x256xf32> to vector<8x128xf32>
    %155 = vector.extract_strided_slice %143 {offsets = [0, 256], sizes = [8, 128], strides = [1, 1]} : vector<8x384xf32> to vector<8x128xf32>
    %156 = vector.extract_strided_slice %144 {offsets = [0, 256], sizes = [8, 128], strides = [1, 1]} : vector<8x384xf32> to vector<8x128xf32>
    %157 = arith.addf %156, %9 : vector<8x128xf32>
    %158 = arith.mulf %153, %157 : vector<8x128xf32>
    %159 = arith.addf %155, %158 : vector<8x128xf32>
    %160 = math.tanh %159 : vector<8x128xf32>
    %161 = arith.subf %141, %160 : vector<8x128xf32>
    %162 = arith.mulf %154, %161 : vector<8x128xf32>
    %163 = arith.addf %160, %162 : vector<8x128xf32>
    %c48 = arith.constant 48 : index
    %c0_31 = arith.constant 0 : index
    %164 = vector.load %arg12[%c48, %c0_31] : memref<64x128xf32, #tpu.memory_space<vmem>>, vector<8x128xf32>
    tpu.vector_store %arg12[%c48, %c0_31], %163 {strides = array<i32>} : memref<64x128xf32, #tpu.memory_space<vmem>>, vector<8x128xf32>,
    %165 = vector.extract_strided_slice %5 {offsets = [56, 0], sizes = [8, 384], strides = [1, 1]} : vector<64x384xf32> to vector<8x384xf32>
    %cst_32 = arith.constant dense<0.000000e+00> : vector<8x384xf32>
    %166 = tpu.matmul %163, %6, %cst_32 {dimension_numbers = #tpu.dot_dimension_numbers<[1], [0], [0], [1], [0, 0, 1, 1], [], []>} : vector<8x128xf32>, vector<128x384xf32>, vector<8x384xf32> -> vector<8x384xf32>
    %167 = vector.extract_strided_slice %165 {offsets = [0, 0], sizes = [8, 256], strides = [1, 1]} : vector<8x384xf32> to vector<8x256xf32>
    %168 = vector.extract_strided_slice %166 {offsets = [0, 0], sizes = [8, 256], strides = [1, 1]} : vector<8x384xf32> to vector<8x256xf32>
    %169 = arith.addf %167, %168 : vector<8x256xf32>
    %170 = arith.negf %169 : vector<8x256xf32>
    %171 = math.exp %170 : vector<8x256xf32>
    %cst_33 = arith.constant 1.000000e+00 : f32
    %172 = vector.broadcast %cst_33 : f32 to vector<8x256xf32>
    %173 = arith.addf %172, %171 : vector<8x256xf32>
    %174 = arith.divf %172, %173 : vector<8x256xf32>
    %175 = vector.extract_strided_slice %174 {offsets = [0, 0], sizes = [8, 128], strides = [1, 1]} : vector<8x256xf32> to vector<8x128xf32>
    %176 = vector.extract_strided_slice %174 {offsets = [0, 128], sizes = [8, 128], strides = [1, 1]} : vector<8x256xf32> to vector<8x128xf32>
    %177 = vector.extract_strided_slice %165 {offsets = [0, 256], sizes = [8, 128], strides = [1, 1]} : vector<8x384xf32> to vector<8x128xf32>
    %178 = vector.extract_strided_slice %166 {offsets = [0, 256], sizes = [8, 128], strides = [1, 1]} : vector<8x384xf32> to vector<8x128xf32>
    %179 = arith.addf %178, %9 : vector<8x128xf32>
    %180 = arith.mulf %175, %179 : vector<8x128xf32>
    %181 = arith.addf %177, %180 : vector<8x128xf32>
    %182 = math.tanh %181 : vector<8x128xf32>
    %183 = arith.subf %163, %182 : vector<8x128xf32>
    %184 = arith.mulf %176, %183 : vector<8x128xf32>
    %185 = arith.addf %182, %184 : vector<8x128xf32>
    %c56 = arith.constant 56 : index
    %c0_34 = arith.constant 0 : index
    %186 = vector.load %arg12[%c56, %c0_34] : memref<64x128xf32, #tpu.memory_space<vmem>>, vector<8x128xf32>
    tpu.vector_store %arg12[%c56, %c0_34], %185 {strides = array<i32>} : memref<64x128xf32, #tpu.memory_space<vmem>>, vector<8x128xf32>,
    %c0_35 = arith.constant 0 : index
    %c0_36 = arith.constant 0 : index
    %187 = vector.load %arg12[%c0_35, %c0_36] : memref<64x128xf32, #tpu.memory_space<vmem>>, vector<64x128xf32>
    %c0_37 = arith.constant 0 : index
    %c0_38 = arith.constant 0 : index
    %188 = vector.load %arg5[%c0_37, %c0_38] : memref<128x384xf32, #tpu.memory_space<vmem>>, vector<128x384xf32>
    %cst_39 = arith.constant dense<0.000000e+00> : vector<64x384xf32>
    %189 = tpu.matmul %187, %188, %cst_39 {dimension_numbers = #tpu.dot_dimension_numbers<[1], [0], [0], [1], [0, 0, 1, 1], [], []>} : vector<64x128xf32>, vector<128x384xf32>, vector<64x384xf32> -> vector<64x384xf32>
    %c0_40 = arith.constant 0 : index
    %c0_41 = arith.constant 0 : index
    %190 = vector.load %arg7[%c0_40, %c0_41] : memref<1x384xf32, #tpu.memory_space<vmem>>, vector<1x384xf32>
    %191 = vector.broadcast %190 : vector<1x384xf32> to vector<64x384xf32>
    %192 = arith.addf %189, %191 : vector<64x384xf32>
    %c0_42 = arith.constant 0 : index
    %c0_43 = arith.constant 0 : index
    %193 = vector.load %arg6[%c0_42, %c0_43] : memref<128x384xf32, #tpu.memory_space<vmem>>, vector<128x384xf32>
    %c0_44 = arith.constant 0 : index
    %c0_45 = arith.constant 0 : index
    %194 = vector.load %arg8[%c0_44, %c0_45] : memref<1x128xf32, #tpu.memory_space<vmem>>, vector<1x128xf32>
    %195 = vector.shape_cast %194 : vector<1x128xf32> to vector<1x128xf32>
    %196 = vector.broadcast %195 : vector<1x128xf32> to vector<8x128xf32>
    %cst_46 = arith.constant 0.000000e+00 : f32
    %197 = vector.broadcast %cst_46 : f32 to vector<8x128xf32>
    %198 = vector.extract_strided_slice %192 {offsets = [0, 0], sizes = [8, 384], strides = [1, 1]} : vector<64x384xf32> to vector<8x384xf32>
    %cst_47 = arith.constant dense<0.000000e+00> : vector<8x384xf32>
    %199 = tpu.matmul %197, %193, %cst_47 {dimension_numbers = #tpu.dot_dimension_numbers<[1], [0], [0], [1], [0, 0, 1, 1], [], []>} : vector<8x128xf32>, vector<128x384xf32>, vector<8x384xf32> -> vector<8x384xf32>
    %200 = vector.extract_strided_slice %198 {offsets = [0, 0], sizes = [8, 256], strides = [1, 1]} : vector<8x384xf32> to vector<8x256xf32>
    %201 = vector.extract_strided_slice %199 {offsets = [0, 0], sizes = [8, 256], strides = [1, 1]} : vector<8x384xf32> to vector<8x256xf32>
    %202 = arith.addf %200, %201 : vector<8x256xf32>
    %203 = arith.negf %202 : vector<8x256xf32>
    %204 = math.exp %203 : vector<8x256xf32>
    %cst_48 = arith.constant 1.000000e+00 : f32
    %205 = vector.broadcast %cst_48 : f32 to vector<8x256xf32>
    %206 = arith.addf %205, %204 : vector<8x256xf32>
    %207 = arith.divf %205, %206 : vector<8x256xf32>
    %208 = vector.extract_strided_slice %207 {offsets = [0, 0], sizes = [8, 128], strides = [1, 1]} : vector<8x256xf32> to vector<8x128xf32>
    %209 = vector.extract_strided_slice %207 {offsets = [0, 128], sizes = [8, 128], strides = [1, 1]} : vector<8x256xf32> to vector<8x128xf32>
    %210 = vector.extract_strided_slice %198 {offsets = [0, 256], sizes = [8, 128], strides = [1, 1]} : vector<8x384xf32> to vector<8x128xf32>
    %211 = vector.extract_strided_slice %199 {offsets = [0, 256], sizes = [8, 128], strides = [1, 1]} : vector<8x384xf32> to vector<8x128xf32>
    %212 = arith.addf %211, %196 : vector<8x128xf32>
    %213 = arith.mulf %208, %212 : vector<8x128xf32>
    %214 = arith.addf %210, %213 : vector<8x128xf32>
    %215 = math.tanh %214 : vector<8x128xf32>
    %216 = arith.subf %197, %215 : vector<8x128xf32>
    %217 = arith.mulf %209, %216 : vector<8x128xf32>
    %218 = arith.addf %215, %217 : vector<8x128xf32>
    %c0_49 = arith.constant 0 : index
    %c0_50 = arith.constant 0 : index
    %219 = vector.load %arg13[%c0_49, %c0_50] : memref<8x1024xf32, #tpu.memory_space<vmem>>, vector<8x128xf32>
    tpu.vector_store %arg13[%c0_49, %c0_50], %218 {strides = array<i32>} : memref<8x1024xf32, #tpu.memory_space<vmem>>, vector<8x128xf32>,
    %220 = vector.extract_strided_slice %192 {offsets = [8, 0], sizes = [8, 384], strides = [1, 1]} : vector<64x384xf32> to vector<8x384xf32>
    %cst_51 = arith.constant dense<0.000000e+00> : vector<8x384xf32>
    %221 = tpu.matmul %218, %193, %cst_51 {dimension_numbers = #tpu.dot_dimension_numbers<[1], [0], [0], [1], [0, 0, 1, 1], [], []>} : vector<8x128xf32>, vector<128x384xf32>, vector<8x384xf32> -> vector<8x384xf32>
    %222 = vector.extract_strided_slice %220 {offsets = [0, 0], sizes = [8, 256], strides = [1, 1]} : vector<8x384xf32> to vector<8x256xf32>
    %223 = vector.extract_strided_slice %221 {offsets = [0, 0], sizes = [8, 256], strides = [1, 1]} : vector<8x384xf32> to vector<8x256xf32>
    %224 = arith.addf %222, %223 : vector<8x256xf32>
    %225 = arith.negf %224 : vector<8x256xf32>
    %226 = math.exp %225 : vector<8x256xf32>
    %cst_52 = arith.constant 1.000000e+00 : f32
    %227 = vector.broadcast %cst_52 : f32 to vector<8x256xf32>
    %228 = arith.addf %227, %226 : vector<8x256xf32>
    %229 = arith.divf %227, %228 : vector<8x256xf32>
    %230 = vector.extract_strided_slice %229 {offsets = [0, 0], sizes = [8, 128], strides = [1, 1]} : vector<8x256xf32> to vector<8x128xf32>
    %231 = vector.extract_strided_slice %229 {offsets = [0, 128], sizes = [8, 128], strides = [1, 1]} : vector<8x256xf32> to vector<8x128xf32>
    %232 = vector.extract_strided_slice %220 {offsets = [0, 256], sizes = [8, 128], strides = [1, 1]} : vector<8x384xf32> to vector<8x128xf32>
    %233 = vector.extract_strided_slice %221 {offsets = [0, 256], sizes = [8, 128], strides = [1, 1]} : vector<8x384xf32> to vector<8x128xf32>
    %234 = arith.addf %233, %196 : vector<8x128xf32>
    %235 = arith.mulf %230, %234 : vector<8x128xf32>
    %236 = arith.addf %232, %235 : vector<8x128xf32>
    %237 = math.tanh %236 : vector<8x128xf32>
    %238 = arith.subf %218, %237 : vector<8x128xf32>
    %239 = arith.mulf %231, %238 : vector<8x128xf32>
    %240 = arith.addf %237, %239 : vector<8x128xf32>
    %c0_53 = arith.constant 0 : index
    %c128 = arith.constant 128 : index
    %241 = vector.load %arg13[%c0_53, %c128] : memref<8x1024xf32, #tpu.memory_space<vmem>>, vector<8x128xf32>
    tpu.vector_store %arg13[%c0_53, %c128], %240 {strides = array<i32>} : memref<8x1024xf32, #tpu.memory_space<vmem>>, vector<8x128xf32>,
    %242 = vector.extract_strided_slice %192 {offsets = [16, 0], sizes = [8, 384], strides = [1, 1]} : vector<64x384xf32> to vector<8x384xf32>
    %cst_54 = arith.constant dense<0.000000e+00> : vector<8x384xf32>
    %243 = tpu.matmul %240, %193, %cst_54 {dimension_numbers = #tpu.dot_dimension_numbers<[1], [0], [0], [1], [0, 0, 1, 1], [], []>} : vector<8x128xf32>, vector<128x384xf32>, vector<8x384xf32> -> vector<8x384xf32>
    %244 = vector.extract_strided_slice %242 {offsets = [0, 0], sizes = [8, 256], strides = [1, 1]} : vector<8x384xf32> to vector<8x256xf32>
    %245 = vector.extract_strided_slice %243 {offsets = [0, 0], sizes = [8, 256], strides = [1, 1]} : vector<8x384xf32> to vector<8x256xf32>
    %246 = arith.addf %244, %245 : vector<8x256xf32>
    %247 = arith.negf %246 : vector<8x256xf32>
    %248 = math.exp %247 : vector<8x256xf32>
    %cst_55 = arith.constant 1.000000e+00 : f32
    %249 = vector.broadcast %cst_55 : f32 to vector<8x256xf32>
    %250 = arith.addf %249, %248 : vector<8x256xf32>
    %251 = arith.divf %249, %250 : vector<8x256xf32>
    %252 = vector.extract_strided_slice %251 {offsets = [0, 0], sizes = [8, 128], strides = [1, 1]} : vector<8x256xf32> to vector<8x128xf32>
    %253 = vector.extract_strided_slice %251 {offsets = [0, 128], sizes = [8, 128], strides = [1, 1]} : vector<8x256xf32> to vector<8x128xf32>
    %254 = vector.extract_strided_slice %242 {offsets = [0, 256], sizes = [8, 128], strides = [1, 1]} : vector<8x384xf32> to vector<8x128xf32>
    %255 = vector.extract_strided_slice %243 {offsets = [0, 256], sizes = [8, 128], strides = [1, 1]} : vector<8x384xf32> to vector<8x128xf32>
    %256 = arith.addf %255, %196 : vector<8x128xf32>
    %257 = arith.mulf %252, %256 : vector<8x128xf32>
    %258 = arith.addf %254, %257 : vector<8x128xf32>
    %259 = math.tanh %258 : vector<8x128xf32>
    %260 = arith.subf %240, %259 : vector<8x128xf32>
    %261 = arith.mulf %253, %260 : vector<8x128xf32>
    %262 = arith.addf %259, %261 : vector<8x128xf32>
    %c0_56 = arith.constant 0 : index
    %c256 = arith.constant 256 : index
    %263 = vector.load %arg13[%c0_56, %c256] : memref<8x1024xf32, #tpu.memory_space<vmem>>, vector<8x128xf32>
    tpu.vector_store %arg13[%c0_56, %c256], %262 {strides = array<i32>} : memref<8x1024xf32, #tpu.memory_space<vmem>>, vector<8x128xf32>,
    %264 = vector.extract_strided_slice %192 {offsets = [24, 0], sizes = [8, 384], strides = [1, 1]} : vector<64x384xf32> to vector<8x384xf32>
    %cst_57 = arith.constant dense<0.000000e+00> : vector<8x384xf32>
    %265 = tpu.matmul %262, %193, %cst_57 {dimension_numbers = #tpu.dot_dimension_numbers<[1], [0], [0], [1], [0, 0, 1, 1], [], []>} : vector<8x128xf32>, vector<128x384xf32>, vector<8x384xf32> -> vector<8x384xf32>
    %266 = vector.extract_strided_slice %264 {offsets = [0, 0], sizes = [8, 256], strides = [1, 1]} : vector<8x384xf32> to vector<8x256xf32>
    %267 = vector.extract_strided_slice %265 {offsets = [0, 0], sizes = [8, 256], strides = [1, 1]} : vector<8x384xf32> to vector<8x256xf32>
    %268 = arith.addf %266, %267 : vector<8x256xf32>
    %269 = arith.negf %268 : vector<8x256xf32>
    %270 = math.exp %269 : vector<8x256xf32>
    %cst_58 = arith.constant 1.000000e+00 : f32
    %271 = vector.broadcast %cst_58 : f32 to vector<8x256xf32>
    %272 = arith.addf %271, %270 : vector<8x256xf32>
    %273 = arith.divf %271, %272 : vector<8x256xf32>
    %274 = vector.extract_strided_slice %273 {offsets = [0, 0], sizes = [8, 128], strides = [1, 1]} : vector<8x256xf32> to vector<8x128xf32>
    %275 = vector.extract_strided_slice %273 {offsets = [0, 128], sizes = [8, 128], strides = [1, 1]} : vector<8x256xf32> to vector<8x128xf32>
    %276 = vector.extract_strided_slice %264 {offsets = [0, 256], sizes = [8, 128], strides = [1, 1]} : vector<8x384xf32> to vector<8x128xf32>
    %277 = vector.extract_strided_slice %265 {offsets = [0, 256], sizes = [8, 128], strides = [1, 1]} : vector<8x384xf32> to vector<8x128xf32>
    %278 = arith.addf %277, %196 : vector<8x128xf32>
    %279 = arith.mulf %274, %278 : vector<8x128xf32>
    %280 = arith.addf %276, %279 : vector<8x128xf32>
    %281 = math.tanh %280 : vector<8x128xf32>
    %282 = arith.subf %262, %281 : vector<8x128xf32>
    %283 = arith.mulf %275, %282 : vector<8x128xf32>
    %284 = arith.addf %281, %283 : vector<8x128xf32>
    %c0_59 = arith.constant 0 : index
    %c384 = arith.constant 384 : index
    %285 = vector.load %arg13[%c0_59, %c384] : memref<8x1024xf32, #tpu.memory_space<vmem>>, vector<8x128xf32>
    tpu.vector_store %arg13[%c0_59, %c384], %284 {strides = array<i32>} : memref<8x1024xf32, #tpu.memory_space<vmem>>, vector<8x128xf32>,
    %286 = vector.extract_strided_slice %192 {offsets = [32, 0], sizes = [8, 384], strides = [1, 1]} : vector<64x384xf32> to vector<8x384xf32>
    %cst_60 = arith.constant dense<0.000000e+00> : vector<8x384xf32>
    %287 = tpu.matmul %284, %193, %cst_60 {dimension_numbers = #tpu.dot_dimension_numbers<[1], [0], [0], [1], [0, 0, 1, 1], [], []>} : vector<8x128xf32>, vector<128x384xf32>, vector<8x384xf32> -> vector<8x384xf32>
    %288 = vector.extract_strided_slice %286 {offsets = [0, 0], sizes = [8, 256], strides = [1, 1]} : vector<8x384xf32> to vector<8x256xf32>
    %289 = vector.extract_strided_slice %287 {offsets = [0, 0], sizes = [8, 256], strides = [1, 1]} : vector<8x384xf32> to vector<8x256xf32>
    %290 = arith.addf %288, %289 : vector<8x256xf32>
    %291 = arith.negf %290 : vector<8x256xf32>
    %292 = math.exp %291 : vector<8x256xf32>
    %cst_61 = arith.constant 1.000000e+00 : f32
    %293 = vector.broadcast %cst_61 : f32 to vector<8x256xf32>
    %294 = arith.addf %293, %292 : vector<8x256xf32>
    %295 = arith.divf %293, %294 : vector<8x256xf32>
    %296 = vector.extract_strided_slice %295 {offsets = [0, 0], sizes = [8, 128], strides = [1, 1]} : vector<8x256xf32> to vector<8x128xf32>
    %297 = vector.extract_strided_slice %295 {offsets = [0, 128], sizes = [8, 128], strides = [1, 1]} : vector<8x256xf32> to vector<8x128xf32>
    %298 = vector.extract_strided_slice %286 {offsets = [0, 256], sizes = [8, 128], strides = [1, 1]} : vector<8x384xf32> to vector<8x128xf32>
    %299 = vector.extract_strided_slice %287 {offsets = [0, 256], sizes = [8, 128], strides = [1, 1]} : vector<8x384xf32> to vector<8x128xf32>
    %300 = arith.addf %299, %196 : vector<8x128xf32>
    %301 = arith.mulf %296, %300 : vector<8x128xf32>
    %302 = arith.addf %298, %301 : vector<8x128xf32>
    %303 = math.tanh %302 : vector<8x128xf32>
    %304 = arith.subf %284, %303 : vector<8x128xf32>
    %305 = arith.mulf %297, %304 : vector<8x128xf32>
    %306 = arith.addf %303, %305 : vector<8x128xf32>
    %c0_62 = arith.constant 0 : index
    %c512 = arith.constant 512 : index
    %307 = vector.load %arg13[%c0_62, %c512] : memref<8x1024xf32, #tpu.memory_space<vmem>>, vector<8x128xf32>
    tpu.vector_store %arg13[%c0_62, %c512], %306 {strides = array<i32>} : memref<8x1024xf32, #tpu.memory_space<vmem>>, vector<8x128xf32>,
    %308 = vector.extract_strided_slice %192 {offsets = [40, 0], sizes = [8, 384], strides = [1, 1]} : vector<64x384xf32> to vector<8x384xf32>
    %cst_63 = arith.constant dense<0.000000e+00> : vector<8x384xf32>
    %309 = tpu.matmul %306, %193, %cst_63 {dimension_numbers = #tpu.dot_dimension_numbers<[1], [0], [0], [1], [0, 0, 1, 1], [], []>} : vector<8x128xf32>, vector<128x384xf32>, vector<8x384xf32> -> vector<8x384xf32>
    %310 = vector.extract_strided_slice %308 {offsets = [0, 0], sizes = [8, 256], strides = [1, 1]} : vector<8x384xf32> to vector<8x256xf32>
    %311 = vector.extract_strided_slice %309 {offsets = [0, 0], sizes = [8, 256], strides = [1, 1]} : vector<8x384xf32> to vector<8x256xf32>
    %312 = arith.addf %310, %311 : vector<8x256xf32>
    %313 = arith.negf %312 : vector<8x256xf32>
    %314 = math.exp %313 : vector<8x256xf32>
    %cst_64 = arith.constant 1.000000e+00 : f32
    %315 = vector.broadcast %cst_64 : f32 to vector<8x256xf32>
    %316 = arith.addf %315, %314 : vector<8x256xf32>
    %317 = arith.divf %315, %316 : vector<8x256xf32>
    %318 = vector.extract_strided_slice %317 {offsets = [0, 0], sizes = [8, 128], strides = [1, 1]} : vector<8x256xf32> to vector<8x128xf32>
    %319 = vector.extract_strided_slice %317 {offsets = [0, 128], sizes = [8, 128], strides = [1, 1]} : vector<8x256xf32> to vector<8x128xf32>
    %320 = vector.extract_strided_slice %308 {offsets = [0, 256], sizes = [8, 128], strides = [1, 1]} : vector<8x384xf32> to vector<8x128xf32>
    %321 = vector.extract_strided_slice %309 {offsets = [0, 256], sizes = [8, 128], strides = [1, 1]} : vector<8x384xf32> to vector<8x128xf32>
    %322 = arith.addf %321, %196 : vector<8x128xf32>
    %323 = arith.mulf %318, %322 : vector<8x128xf32>
    %324 = arith.addf %320, %323 : vector<8x128xf32>
    %325 = math.tanh %324 : vector<8x128xf32>
    %326 = arith.subf %306, %325 : vector<8x128xf32>
    %327 = arith.mulf %319, %326 : vector<8x128xf32>
    %328 = arith.addf %325, %327 : vector<8x128xf32>
    %c0_65 = arith.constant 0 : index
    %c640 = arith.constant 640 : index
    %329 = vector.load %arg13[%c0_65, %c640] : memref<8x1024xf32, #tpu.memory_space<vmem>>, vector<8x128xf32>
    tpu.vector_store %arg13[%c0_65, %c640], %328 {strides = array<i32>} : memref<8x1024xf32, #tpu.memory_space<vmem>>, vector<8x128xf32>,
    %330 = vector.extract_strided_slice %192 {offsets = [48, 0], sizes = [8, 384], strides = [1, 1]} : vector<64x384xf32> to vector<8x384xf32>
    %cst_66 = arith.constant dense<0.000000e+00> : vector<8x384xf32>
    %331 = tpu.matmul %328, %193, %cst_66 {dimension_numbers = #tpu.dot_dimension_numbers<[1], [0], [0], [1], [0, 0, 1, 1], [], []>} : vector<8x128xf32>, vector<128x384xf32>, vector<8x384xf32> -> vector<8x384xf32>
    %332 = vector.extract_strided_slice %330 {offsets = [0, 0], sizes = [8, 256], strides = [1, 1]} : vector<8x384xf32> to vector<8x256xf32>
    %333 = vector.extract_strided_slice %331 {offsets = [0, 0], sizes = [8, 256], strides = [1, 1]} : vector<8x384xf32> to vector<8x256xf32>
    %334 = arith.addf %332, %333 : vector<8x256xf32>
    %335 = arith.negf %334 : vector<8x256xf32>
    %336 = math.exp %335 : vector<8x256xf32>
    %cst_67 = arith.constant 1.000000e+00 : f32
    %337 = vector.broadcast %cst_67 : f32 to vector<8x256xf32>
    %338 = arith.addf %337, %336 : vector<8x256xf32>
    %339 = arith.divf %337, %338 : vector<8x256xf32>
    %340 = vector.extract_strided_slice %339 {offsets = [0, 0], sizes = [8, 128], strides = [1, 1]} : vector<8x256xf32> to vector<8x128xf32>
    %341 = vector.extract_strided_slice %339 {offsets = [0, 128], sizes = [8, 128], strides = [1, 1]} : vector<8x256xf32> to vector<8x128xf32>
    %342 = vector.extract_strided_slice %330 {offsets = [0, 256], sizes = [8, 128], strides = [1, 1]} : vector<8x384xf32> to vector<8x128xf32>
    %343 = vector.extract_strided_slice %331 {offsets = [0, 256], sizes = [8, 128], strides = [1, 1]} : vector<8x384xf32> to vector<8x128xf32>
    %344 = arith.addf %343, %196 : vector<8x128xf32>
    %345 = arith.mulf %340, %344 : vector<8x128xf32>
    %346 = arith.addf %342, %345 : vector<8x128xf32>
    %347 = math.tanh %346 : vector<8x128xf32>
    %348 = arith.subf %328, %347 : vector<8x128xf32>
    %349 = arith.mulf %341, %348 : vector<8x128xf32>
    %350 = arith.addf %347, %349 : vector<8x128xf32>
    %c0_68 = arith.constant 0 : index
    %c768 = arith.constant 768 : index
    %351 = vector.load %arg13[%c0_68, %c768] : memref<8x1024xf32, #tpu.memory_space<vmem>>, vector<8x128xf32>
    tpu.vector_store %arg13[%c0_68, %c768], %350 {strides = array<i32>} : memref<8x1024xf32, #tpu.memory_space<vmem>>, vector<8x128xf32>,
    %352 = vector.extract_strided_slice %192 {offsets = [56, 0], sizes = [8, 384], strides = [1, 1]} : vector<64x384xf32> to vector<8x384xf32>
    %cst_69 = arith.constant dense<0.000000e+00> : vector<8x384xf32>
    %353 = tpu.matmul %350, %193, %cst_69 {dimension_numbers = #tpu.dot_dimension_numbers<[1], [0], [0], [1], [0, 0, 1, 1], [], []>} : vector<8x128xf32>, vector<128x384xf32>, vector<8x384xf32> -> vector<8x384xf32>
    %354 = vector.extract_strided_slice %352 {offsets = [0, 0], sizes = [8, 256], strides = [1, 1]} : vector<8x384xf32> to vector<8x256xf32>
    %355 = vector.extract_strided_slice %353 {offsets = [0, 0], sizes = [8, 256], strides = [1, 1]} : vector<8x384xf32> to vector<8x256xf32>
    %356 = arith.addf %354, %355 : vector<8x256xf32>
    %357 = arith.negf %356 : vector<8x256xf32>
    %358 = math.exp %357 : vector<8x256xf32>
    %cst_70 = arith.constant 1.000000e+00 : f32
    %359 = vector.broadcast %cst_70 : f32 to vector<8x256xf32>
    %360 = arith.addf %359, %358 : vector<8x256xf32>
    %361 = arith.divf %359, %360 : vector<8x256xf32>
    %362 = vector.extract_strided_slice %361 {offsets = [0, 0], sizes = [8, 128], strides = [1, 1]} : vector<8x256xf32> to vector<8x128xf32>
    %363 = vector.extract_strided_slice %361 {offsets = [0, 128], sizes = [8, 128], strides = [1, 1]} : vector<8x256xf32> to vector<8x128xf32>
    %364 = vector.extract_strided_slice %352 {offsets = [0, 256], sizes = [8, 128], strides = [1, 1]} : vector<8x384xf32> to vector<8x128xf32>
    %365 = vector.extract_strided_slice %353 {offsets = [0, 256], sizes = [8, 128], strides = [1, 1]} : vector<8x384xf32> to vector<8x128xf32>
    %366 = arith.addf %365, %196 : vector<8x128xf32>
    %367 = arith.mulf %362, %366 : vector<8x128xf32>
    %368 = arith.addf %364, %367 : vector<8x128xf32>
    %369 = math.tanh %368 : vector<8x128xf32>
    %370 = arith.subf %350, %369 : vector<8x128xf32>
    %371 = arith.mulf %363, %370 : vector<8x128xf32>
    %372 = arith.addf %369, %371 : vector<8x128xf32>
    %c0_71 = arith.constant 0 : index
    %c896 = arith.constant 896 : index
    %373 = vector.load %arg13[%c0_71, %c896] : memref<8x1024xf32, #tpu.memory_space<vmem>>, vector<8x128xf32>
    tpu.vector_store %arg13[%c0_71, %c896], %372 {strides = array<i32>} : memref<8x1024xf32, #tpu.memory_space<vmem>>, vector<8x128xf32>,
    %c0_72 = arith.constant 0 : index
    %c0_73 = arith.constant 0 : index
    %374 = vector.load %arg13[%c0_72, %c0_73] : memref<8x1024xf32, #tpu.memory_space<vmem>>, vector<8x1024xf32>
    %375 = math.tanh %374 : vector<8x1024xf32>
    %c0_74 = arith.constant 0 : index
    %c0_75 = arith.constant 0 : index
    %376 = vector.load %arg9[%c0_74, %c0_75] : memref<1024x128xf32, #tpu.memory_space<vmem>>, vector<1024x128xf32>
    %cst_76 = arith.constant dense<0.000000e+00> : vector<8x128xf32>
    %377 = tpu.matmul %375, %376, %cst_76 {dimension_numbers = #tpu.dot_dimension_numbers<[1], [0], [0], [1], [0, 0, 1, 1], [], []>} : vector<8x1024xf32>, vector<1024x128xf32>, vector<8x128xf32> -> vector<8x128xf32>
    %c0_77 = arith.constant 0 : index
    %c0_78 = arith.constant 0 : index
    %378 = vector.load %arg10[%c0_77, %c0_78] : memref<1x128xf32, #tpu.memory_space<vmem>>, vector<1x128xf32>
    %379 = vector.broadcast %378 : vector<1x128xf32> to vector<8x128xf32>
    %380 = arith.addf %377, %379 : vector<8x128xf32>
    %c0_79 = arith.constant 0 : index
    %c0_80 = arith.constant 0 : index
    %381 = vector.load %arg11[%c0_79, %c0_80] : memref<8x128xf32, #tpu.memory_space<vmem>>, vector<8x128xf32>
    tpu.vector_store %arg11[%c0_79, %c0_80], %380 {strides = array<i32>} : memref<8x128xf32, #tpu.memory_space<vmem>>, vector<8x128xf32>,
    return
  }
}

</mosaic_0001>

<llo_original>
// kernel: gru_model_forward.1
$region0: #{gru_model_forward.1}
  #allocation0 [shape = 'u32[]', space=smem, size = 0x4, offset = 0x4, fixed_abs, tag = 'smem constant byte address 0x4 - core index']
  #allocation1 [shape = 'u32[144,128]{1,0:T(1,128)}', space=vmem, size = 0x12000, scoped, tag = 'internal scratch']
  #allocation2 [shape = 'f32[64,128]{1,0:T(8,128)}', space=vmem, size = 0x8000, scoped, tag = 'scratch operand']
  #allocation3 [shape = 'f32[8,1024]{1,0:T(8,128)}', space=vmem, size = 0x8000, scoped, tag = 'scratch operand']
  %s0 = inlined_call_operand.vmem [shape: f32[64,4], index: 0, kind: input, shape index: {}]
  %s1 = inlined_call_operand.vmem [shape: f32[4,384], index: 1, kind: input, shape index: {}]
  %s2 = inlined_call_operand.hbm [shape: f32[128,384], index: 2, kind: input, shape index: {}]
  %s3 = inlined_call_operand.vmem [shape: f32[1,384], index: 3, kind: input, shape index: {}]
  %s4 = inlined_call_operand.vmem [shape: f32[1,128], index: 4, kind: input, shape index: {}]
  %s5 = inlined_call_operand.hbm [shape: f32[128,384], index: 5, kind: input, shape index: {}]
  %s6 = inlined_call_operand.hbm [shape: f32[128,384], index: 6, kind: input, shape index: {}]
  %s7 = inlined_call_operand.vmem [shape: f32[1,384], index: 7, kind: input, shape index: {}]
  %s8 = inlined_call_operand.vmem [shape: f32[1,128], index: 8, kind: input, shape index: {}]
  %s9 = inlined_call_operand.hbm [shape: f32[1024,128], index: 9, kind: input, shape index: {}]
  %s10 = inlined_call_operand.vmem [shape: f32[1,128], index: 10, kind: input, shape index: {}]
  %s11 = inlined_call_operand.vmem [shape: f32[8,128], index: 11, kind: output, shape index: {}]
  %s12 = sld [smem:[#allocation0]]
  $region70: #{gru_model_forward.1} parent=0
    _
  %s14 = ssub.s32 1, %s12
  %s15 = scalar_select 0, %s14, %s12
  $region1: #{gru_model_forward.1} parent=0
    #allocation4 [shape = 'u8[196608]{0}', space=vmem, size = 0x30000, scoped, tag = 'input window, operand 2, single buffered']
    #allocation5 [shape = 's32[1]{0}', space=sflag, size = 0x4, scoped, tag = 'scoped memory for gru_model_forward.1']
    #allocation6 [shape = 'u8[196608]{0}', space=vmem, size = 0x30000, scoped, tag = 'input window, operand 5, single buffered']
    #allocation7 [shape = 's32[1]{0}', space=sflag, size = 0x4, scoped, tag = 'scoped memory for gru_model_forward.1']
    #allocation8 [shape = 'u8[196608]{0}', space=vmem, size = 0x30000, scoped, tag = 'input window, operand 6, single buffered']
    #allocation9 [shape = 'u8[524288]{0}', space=vmem, size = 0x80000, scoped, tag = 'input window, operand 9, single buffered']
    #allocation10 [shape = 's32[1]{0}', space=sflag, size = 0x4, scoped, tag = 'scoped memory for gru_model_forward.1']
    %16 = vsyncpa [#allocation5], 0
    %17 = vsyncpa [#allocation7], 0
    %18 = vsyncpa [#allocation10], 0
    // Predicated region
    $region2: #{gru_model_forward.1} parent=1 // pred_check
      _
    $region3: #{gru_model_forward.1} parent=1 // pred_check_branch
      %20 = sbr.rel (0) target = $region5
    $region4: #{gru_model_forward.1} parent=1 // pred_region
      _
    $region5: #{gru_model_forward.1} parent=1 // pred_fallthru
      _
    // Predicated region
    $region6: #{gru_model_forward.1} parent=1 // pred_check
      _
    $region7: #{gru_model_forward.1} parent=1 // pred_check_branch
      %22 = sbr.rel (0) target = $region9
    $region8: #{gru_model_forward.1} parent=1 // pred_region
      _
    $region9: #{gru_model_forward.1} parent=1 // pred_fallthru
      _
    // Predicated region
    $region10: #{gru_model_forward.1} parent=1 // pred_check
      _
    $region11: #{gru_model_forward.1} parent=1 // pred_check_branch
      %24 = sbr.rel (0) target = $region13
    $region12: #{gru_model_forward.1} parent=1 // pred_region
      %s26 = ssub.s32 6144, 6144
      %27 = vsyncadd [#allocation5], %s26
      %s28 = sshll.u32 [#allocation4], 4
      %s29 = int_to_ptr.vmem [resolvable:$true] %s28
      %34 = dma.hbm_to_vmem [thread:$0]  %s2, 6144, %s29, [#allocation5], 384, 384, 24
    $region13: #{gru_model_forward.1} parent=1 // pred_fallthru
      _
    // Predicated region
    $region14: #{gru_model_forward.1} parent=1 // pred_check
      _
    $region15: #{gru_model_forward.1} parent=1 // pred_check_branch
      %36 = sbr.rel (0) target = $region17
    $region16: #{gru_model_forward.1} parent=1 // pred_region
      _
    $region17: #{gru_model_forward.1} parent=1 // pred_fallthru
      _
    // Predicated region
    $region18: #{gru_model_forward.1} parent=1 // pred_check
      _
    $region19: #{gru_model_forward.1} parent=1 // pred_check_branch
      %38 = sbr.rel (0) target = $region21
    $region20: #{gru_model_forward.1} parent=1 // pred_region
      _
    $region21: #{gru_model_forward.1} parent=1 // pred_fallthru
      _
    // Predicated region
    $region22: #{gru_model_forward.1} parent=1 // pred_check
      _
    $region23: #{gru_model_forward.1} parent=1 // pred_check_branch
      %40 = sbr.rel (0) target = $region25
    $region24: #{gru_model_forward.1} parent=1 // pred_region
      %s42 = ssub.s32 6144, 6144
      %43 = vsyncadd [#allocation7], %s42
      %s44 = sshll.u32 [#allocation6], 4
      %s45 = int_to_ptr.vmem [resolvable:$true] %s44
      %50 = dma.hbm_to_vmem [thread:$0]  %s5, 6144, %s45, [#allocation7], 384, 384, 24
    $region25: #{gru_model_forward.1} parent=1 // pred_fallthru
      _
    // Predicated region
    $region26: #{gru_model_forward.1} parent=1 // pred_check
      _
    $region27: #{gru_model_forward.1} parent=1 // pred_check_branch
      %52 = sbr.rel (0) target = $region29
    $region28: #{gru_model_forward.1} parent=1 // pred_region
      %s54 = ssub.s32 6144, 6144
      %55 = vsyncadd [#allocation7], %s54
      %s56 = sshll.u32 [#allocation8], 4
      %s57 = int_to_ptr.vmem [resolvable:$true] %s56
      %62 = dma.hbm_to_vmem [thread:$0]  %s6, 6144, %s57, [#allocation7], 384, 384, 24
    $region29: #{gru_model_forward.1} parent=1 // pred_fallthru
      _
    // Predicated region
    $region30: #{gru_model_forward.1} parent=1 // pred_check
      _
    $region31: #{gru_model_forward.1} parent=1 // pred_check_branch
      %64 = sbr.rel (0) target = $region33
    $region32: #{gru_model_forward.1} parent=1 // pred_region
      _
    $region33: #{gru_model_forward.1} parent=1 // pred_fallthru
      _
    // Predicated region
    $region34: #{gru_model_forward.1} parent=1 // pred_check
      _
    $region35: #{gru_model_forward.1} parent=1 // pred_check_branch
      %66 = sbr.rel (0) target = $region37
    $region36: #{gru_model_forward.1} parent=1 // pred_region
      _
    $region37: #{gru_model_forward.1} parent=1 // pred_fallthru
      _
    // Predicated region
    $region38: #{gru_model_forward.1} parent=1 // pred_check
      _
    $region39: #{gru_model_forward.1} parent=1 // pred_check_branch
      %68 = sbr.rel (0) target = $region41
    $region40: #{gru_model_forward.1} parent=1 // pred_region
      %s70 = ssub.s32 16384, 16384
      %71 = vsyncadd [#allocation10], %s70
      %s72 = sshll.u32 [#allocation9], 4
      %s73 = int_to_ptr.vmem [resolvable:$true] %s72
      %78 = dma.hbm_to_vmem [thread:$0]  %s9, 16384, %s73, [#allocation10], 128, 128, 8
    $region41: #{gru_model_forward.1} parent=1 // pred_fallthru
      _
    // Predicated region
    $region42: #{gru_model_forward.1} parent=1 // pred_check
      _
    $region43: #{gru_model_forward.1} parent=1 // pred_check_branch
      %80 = sbr.rel (0) target = $region45
    $region44: #{gru_model_forward.1} parent=1 // pred_region
      _
    $region45: #{gru_model_forward.1} parent=1 // pred_fallthru
      _
    // Predicated region
    $region46: #{gru_model_forward.1} parent=1 // pred_check
      _
    $region47: #{gru_model_forward.1} parent=1 // pred_check_branch
      %82 = sbr.rel (0) target = $region49
    $region48: #{gru_model_forward.1} parent=1 // pred_region
      %83 = dma.done [#allocation5], 6144
    $region49: #{gru_model_forward.1} parent=1 // pred_fallthru
      _
    // Predicated region
    $region50: #{gru_model_forward.1} parent=1 // pred_check
      _
    $region51: #{gru_model_forward.1} parent=1 // pred_check_branch
      %85 = sbr.rel (0) target = $region53
    $region52: #{gru_model_forward.1} parent=1 // pred_region
      %86 = dma.done [#allocation7], 6144
    $region53: #{gru_model_forward.1} parent=1 // pred_fallthru
      _
    // Predicated region
    $region54: #{gru_model_forward.1} parent=1 // pred_check
      _
    $region55: #{gru_model_forward.1} parent=1 // pred_check_branch
      %88 = sbr.rel (0) target = $region57
    $region56: #{gru_model_forward.1} parent=1 // pred_region
      %89 = dma.done [#allocation7], 6144
    $region57: #{gru_model_forward.1} parent=1 // pred_fallthru
      _
    // Predicated region
    $region58: #{gru_model_forward.1} parent=1 // pred_check
      _
    $region59: #{gru_model_forward.1} parent=1 // pred_check_branch
      %91 = sbr.rel (0) target = $region61
    $region60: #{gru_model_forward.1} parent=1 // pred_region
      %92 = dma.done [#allocation10], 16384
    $region61: #{gru_model_forward.1} parent=1 // pred_fallthru
      _
    %v93 = vld [vmem:[%s0] sm:$0xff]
    %v94 = vld [vmem:[%s0 + $0x8] sm:$0xff]
    %v95 = vld [vmem:[%s0 + $0x10] sm:$0xff]
    %v96 = vld [vmem:[%s0 + $0x18] sm:$0xff]
    %v97 = vld [vmem:[%s0 + $0x20] sm:$0xff]
    %v98 = vld [vmem:[%s0 + $0x28] sm:$0xff]
    %v99 = vld [vmem:[%s0 + $0x30] sm:$0xff]
    %v100 = vld [vmem:[%s0 + $0x38] sm:$0xff]
    %v101 = vld [vmem:[%s1] sm:$0xff]
    %v102 = vld [vmem:[%s1 + $0x8] sm:$0xf]
    %v103 = vld [vmem:[%s3] sm:$0x7]
    %v105 = vlaneseq
    %v106 = vshrl.u32 %v105, 7
    %v107 = vsub.s32 0, %v106
    %v108 = vrot.slane %v103, %v107
    %v109 = vlaneseq
    %v110 = vshrl.u32 %v109, 7
    %v111 = vsub.s32 1, %v110
    %v112 = vrot.slane %v103, %v111
    %v113 = vlaneseq
    %v114 = vshrl.u32 %v113, 7
    %v115 = vsub.s32 2, %v114
    %v116 = vrot.slane %v103, %v115
    %v122 = vcombine.high %v101, %v101
    %vm123 = vcmask 31744
    %v125 = vsel %vm123, %v93, 0
    %v128 = vsel %vm123, %v94, 0
    %v131 = vsel %vm123, %v95, 0
    %v134 = vsel %vm123, %v96, 0
    %v137 = vsel %vm123, %v97, 0
    %v140 = vsel %vm123, %v98, 0
    %v143 = vsel %vm123, %v99, 0
    %v146 = vsel %vm123, %v100, 0
    %vm148 = vcmask 1043456
    %v149 = vsel %vm148, %v101, 0
    %v151 = vsel %vm148, %v122, 0
    %v153 = vsel %vm148, %v102, 0
    %155 = vmatprep.subr.mxu0 %v151
    %156 = vmatpush1.msra.mxu0 %v149
    %157 = vmatprep.subr.mxu0 0.0
    %158 = vmatpush1.msra.mxu0 0.0
    %159 = vmatprep.subr.mxu0 0.0
    %160 = vmatpush1.msra.mxu0 0.0
    %161 = vmatprep.subr.mxu0 0.0
    %162 = vmatpush1.msra.mxu0 0.0
    %163 = vmatprep.subr.mxu0 0.0
    %164 = vmatpush1.msra.mxu0 0.0
    %165 = vmatprep.subr.mxu0 0.0
    %166 = vmatpush1.msra.mxu0 0.0
    %167 = vmatprep.subr.mxu0 0.0
    %168 = vmatpush1.msra.mxu0 0.0
    %169 = vmatprep.subr.mxu0 0.0
    %170 = vmatpush1.msra.mxu0 0.0
    %171 = vmatprep.subr.mxu0 0.0
    %172 = vmatpush1.msra.mxu0 0.0
    %173 = vmatprep.subr.mxu0 0.0
    %174 = vmatpush1.msra.mxu0 0.0
    %175 = vmatprep.subr.mxu0 0.0
    %176 = vmatpush1.msra.mxu0 0.0
    %177 = vmatprep.subr.mxu0 0.0
    %178 = vmatpush1.msra.mxu0 0.0
    %179 = vmatprep.subr.mxu0 0.0
    %180 = vmatpush1.msra.mxu0 0.0
    %181 = vmatprep.subr.mxu0 0.0
    %182 = vmatpush1.msra.mxu0 0.0
    %183 = vmatprep.subr.mxu0 0.0
    %184 = vmatpush1.msra.mxu0 0.0
    %185 = vmatprep.subr.mxu0 0.0
    %186 = vmatpush1.msra.mxu0 0.0
    %187 = vmatprep.subr.mxu0 0.0
    %188 = vmatpush1.msra.mxu0 0.0
    %189 = vmatprep.subr.mxu0 0.0
    %190 = vmatpush1.msra.mxu0 0.0
    %191 = vmatprep.subr.mxu0 0.0
    %192 = vmatpush1.msra.mxu0 0.0
    %193 = vmatprep.subr.mxu0 0.0
    %194 = vmatpush1.msra.mxu0 0.0
    %195 = vmatprep.subr.mxu0 0.0
    %196 = vmatpush1.msra.mxu0 0.0
    %197 = vmatprep.subr.mxu0 0.0
    %198 = vmatpush1.msra.mxu0 0.0
    %199 = vmatprep.subr.mxu0 0.0
    %200 = vmatpush1.msra.mxu0 0.0
    %201 = vmatprep.subr.mxu0 0.0
    %202 = vmatpush1.msra.mxu0 0.0
    %203 = vmatprep.subr.mxu0 0.0
    %204 = vmatpush1.msra.mxu0 0.0
    %205 = vmatprep.subr.mxu0 0.0
    %206 = vmatpush1.msra.mxu0 0.0
    %207 = vmatprep.subr.mxu0 0.0
    %208 = vmatpush1.msra.mxu0 0.0
    %209 = vmatprep.subr.mxu0 0.0
    %210 = vmatpush1.msra.mxu0 0.0
    %211 = vmatprep.subr.mxu0 0.0
    %212 = vmatpush1.msra.mxu0 0.0
    %213 = vmatprep.subr.mxu0 0.0
    %214 = vmatpush1.msra.mxu0 0.0
    %215 = vmatprep.subr.mxu0 0.0
    %216 = vmatpush1.msra.mxu0 0.0
    %217 = vmatprep.subr.mxu0 0.0
    %218 = vmatpush1.msra.mxu0 0.0
    %219 = vmatprep.mubr.f32.mxu0 0.0
    %220 = vmatmul.mubr.f32.gmra.mrb[0].mxu0 %v125
    %v221 = vpop.f32.mrb[0].mxu0
    %v222 = vadd.f32 %v108, %v221
    %v223 = vpop.f32.mrb[0].mxu0
    %v224 = vadd.f32 %v112, %v223
    %225 = vmatprep.mubr.f32.mxu0 0.0
    %226 = vmatmul.mubr.f32.gmra.mrb[0].mxu0 %v128
    %v227 = vpop.f32.mrb[0].mxu0
    %v228 = vadd.f32 %v108, %v227
    %v229 = vpop.f32.mrb[0].mxu0
    %v230 = vadd.f32 %v112, %v229
    %231 = vmatprep.mubr.f32.mxu0 0.0
    %232 = vmatmul.mubr.f32.gmra.mrb[0].mxu0 %v131
    %v233 = vpop.f32.mrb[0].mxu0
    %v234 = vadd.f32 %v108, %v233
    %v235 = vpop.f32.mrb[0].mxu0
    %v236 = vadd.f32 %v112, %v235
    %237 = vmatprep.mubr.f32.mxu0 0.0
    %238 = vmatmul.mubr.f32.gmra.mrb[0].mxu0 %v134
    %v239 = vpop.f32.mrb[0].mxu0
    %v240 = vadd.f32 %v108, %v239
    %v241 = vpop.f32.mrb[0].mxu0
    %v242 = vadd.f32 %v112, %v241
    %243 = vmatprep.mubr.f32.mxu0 0.0
    %244 = vmatmul.mubr.f32.gmra.mrb[0].mxu0 %v137
    %v245 = vpop.f32.mrb[0].mxu0
    %v246 = vadd.f32 %v108, %v245
    %v247 = vpop.f32.mrb[0].mxu0
    %v248 = vadd.f32 %v112, %v247
    %249 = vmatprep.mubr.f32.mxu0 0.0
    %250 = vmatmul.mubr.f32.gmra.mrb[0].mxu0 %v140
    %v251 = vpop.f32.mrb[0].mxu0
    %v252 = vadd.f32 %v108, %v251
    %v253 = vpop.f32.mrb[0].mxu0
    %v254 = vadd.f32 %v112, %v253
    %255 = vmatprep.mubr.f32.mxu0 0.0
    %256 = vmatmul.mubr.f32.gmra.mrb[0].mxu0 %v143
    %v257 = vpop.f32.mrb[0].mxu0
    %v258 = vadd.f32 %v108, %v257
    %v259 = vpop.f32.mrb[0].mxu0
    %v260 = vadd.f32 %v112, %v259
    %261 = vmatprep.mubr.f32.mxu0 0.0
    %262 = vmatmul.mubr.f32.gmra.mrb[0].mxu0 %v146
    %v263 = vpop.f32.mrb[0].mxu0
    %v264 = vadd.f32 %v108, %v263
    %v265 = vpop.f32.mrb[0].mxu0
    %v266 = vadd.f32 %v112, %v265
    %267 = vdwg.mxu0
    %268 = vmatprep.subr.mxu0 0.0
    %269 = vmatpush1.msra.mxu0 %v153
    %270 = vmatprep.subr.mxu0 0.0
    %271 = vmatpush1.msra.mxu0 0.0
    %272 = vmatprep.subr.mxu0 0.0
    %273 = vmatpush1.msra.mxu0 0.0
    %274 = vmatprep.subr.mxu0 0.0
    %275 = vmatpush1.msra.mxu0 0.0
    %276 = vmatprep.subr.mxu0 0.0
    %277 = vmatpush1.msra.mxu0 0.0
    %278 = vmatprep.subr.mxu0 0.0
    %279 = vmatpush1.msra.mxu0 0.0
    %280 = vmatprep.subr.mxu0 0.0
    %281 = vmatpush1.msra.mxu0 0.0
    %282 = vmatprep.subr.mxu0 0.0
    %283 = vmatpush1.msra.mxu0 0.0
    %284 = vmatprep.subr.mxu0 0.0
    %285 = vmatpush1.msra.mxu0 0.0
    %286 = vmatprep.subr.mxu0 0.0
    %287 = vmatpush1.msra.mxu0 0.0
    %288 = vmatprep.subr.mxu0 0.0
    %289 = vmatpush1.msra.mxu0 0.0
    %290 = vmatprep.subr.mxu0 0.0
    %291 = vmatpush1.msra.mxu0 0.0
    %292 = vmatprep.subr.mxu0 0.0
    %293 = vmatpush1.msra.mxu0 0.0
    %294 = vmatprep.subr.mxu0 0.0
    %295 = vmatpush1.msra.mxu0 0.0
    %296 = vmatprep.subr.mxu0 0.0
    %297 = vmatpush1.msra.mxu0 0.0
    %298 = vmatprep.subr.mxu0 0.0
    %299 = vmatpush1.msra.mxu0 0.0
    %300 = vmatprep.subr.mxu0 0.0
    %301 = vmatpush1.msra.mxu0 0.0
    %302 = vmatprep.subr.mxu0 0.0
    %303 = vmatpush1.msra.mxu0 0.0
    %304 = vmatprep.subr.mxu0 0.0
    %305 = vmatpush1.msra.mxu0 0.0
    %306 = vmatprep.subr.mxu0 0.0
    %307 = vmatpush1.msra.mxu0 0.0
    %308 = vmatprep.subr.mxu0 0.0
    %309 = vmatpush1.msra.mxu0 0.0
    %310 = vmatprep.subr.mxu0 0.0
    %311 = vmatpush1.msra.mxu0 0.0
    %312 = vmatprep.subr.mxu0 0.0
    %313 = vmatpush1.msra.mxu0 0.0
    %314 = vmatprep.subr.mxu0 0.0
    %315 = vmatpush1.msra.mxu0 0.0
    %316 = vmatprep.subr.mxu0 0.0
    %317 = vmatpush1.msra.mxu0 0.0
    %318 = vmatprep.subr.mxu0 0.0
    %319 = vmatpush1.msra.mxu0 0.0
    %320 = vmatprep.subr.mxu0 0.0
    %321 = vmatpush1.msra.mxu0 0.0
    %322 = vmatprep.subr.mxu0 0.0
    %323 = vmatpush1.msra.mxu0 0.0
    %324 = vmatprep.subr.mxu0 0.0
    %325 = vmatpush1.msra.mxu0 0.0
    %326 = vmatprep.subr.mxu0 0.0
    %327 = vmatpush1.msra.mxu0 0.0
    %328 = vmatprep.subr.mxu0 0.0
    %329 = vmatpush1.msra.mxu0 0.0
    %330 = vmatprep.subr.mxu0 0.0
    %331 = vmatpush1.msra.mxu0 0.0
    %332 = vmatprep.mubr.f32.mxu0 0.0
    %333 = vmatmul.mubr.f32.gmra.mrb[0].mxu0 %v125
    %v334 = vpop.f32.mrb[0].mxu0
    %v335 = vadd.f32 %v116, %v334
    %v336 = vpop.f32.mrb[0].mxu0
    %337 = vmatprep.mubr.f32.mxu0 0.0
    %338 = vmatmul.mubr.f32.gmra.mrb[0].mxu0 %v128
    %v339 = vpop.f32.mrb[0].mxu0
    %v340 = vadd.f32 %v116, %v339
    %v341 = vpop.f32.mrb[0].mxu0
    %342 = vmatprep.mubr.f32.mxu0 0.0
    %343 = vmatmul.mubr.f32.gmra.mrb[0].mxu0 %v131
    %v344 = vpop.f32.mrb[0].mxu0
    %v345 = vadd.f32 %v116, %v344
    %v346 = vpop.f32.mrb[0].mxu0
    %347 = vmatprep.mubr.f32.mxu0 0.0
    %348 = vmatmul.mubr.f32.gmra.mrb[0].mxu0 %v134
    %v349 = vpop.f32.mrb[0].mxu0
    %v350 = vadd.f32 %v116, %v349
    %v351 = vpop.f32.mrb[0].mxu0
    %352 = vmatprep.mubr.f32.mxu0 0.0
    %353 = vmatmul.mubr.f32.gmra.mrb[0].mxu0 %v137
    %v354 = vpop.f32.mrb[0].mxu0
    %v355 = vadd.f32 %v116, %v354
    %v356 = vpop.f32.mrb[0].mxu0
    %357 = vmatprep.mubr.f32.mxu0 0.0
    %358 = vmatmul.mubr.f32.gmra.mrb[0].mxu0 %v140
    %v359 = vpop.f32.mrb[0].mxu0
    %v360 = vadd.f32 %v116, %v359
    %v361 = vpop.f32.mrb[0].mxu0
    %362 = vmatprep.mubr.f32.mxu0 0.0
    %363 = vmatmul.mubr.f32.gmra.mrb[0].mxu0 %v143
    %v364 = vpop.f32.mrb[0].mxu0
    %v365 = vadd.f32 %v116, %v364
    %v366 = vpop.f32.mrb[0].mxu0
    %367 = vmatprep.mubr.f32.mxu0 0.0
    %368 = vmatmul.mubr.f32.gmra.mrb[0].mxu0 %v146
    %v369 = vpop.f32.mrb[0].mxu0
    %v370 = vadd.f32 %v116, %v369
    %v371 = vpop.f32.mrb[0].mxu0
    %372 = vdwg.mxu0
    %v373 = vld [vmem:[#allocation4] sm:$0xff]
    %v374 = vld [vmem:[#allocation4 + $0x8] sm:$0xff]
    %v375 = vld [vmem:[#allocation4 + $0x10] sm:$0xff]
    %v376 = vld [vmem:[#allocation4 + $0x18] sm:$0xff]
    %v377 = vld [vmem:[#allocation4 + $0x20] sm:$0xff]
    %v378 = vld [vmem:[#allocation4 + $0x28] sm:$0xff]
    %v379 = vld [vmem:[#allocation4 + $0x30] sm:$0xff]
    %v380 = vld [vmem:[#allocation4 + $0x38] sm:$0xff]
    %v381 = vld [vmem:[#allocation4 + $0x40] sm:$0xff]
    %v382 = vld [vmem:[#allocation4 + $0x48] sm:$0xff]
    %v383 = vld [vmem:[#allocation4 + $0x50] sm:$0xff]
    %v384 = vld [vmem:[#allocation4 + $0x58] sm:$0xff]
    %v385 = vld [vmem:[#allocation4 + $0x60] sm:$0xff]
    %v386 = vld [vmem:[#allocation4 + $0x68] sm:$0xff]
    %v387 = vld [vmem:[#allocation4 + $0x70] sm:$0xff]
    %v388 = vld [vmem:[#allocation4 + $0x78] sm:$0xff]
    %v389 = vld [vmem:[#allocation4 + $0x80] sm:$0xff]
    %v390 = vld [vmem:[#allocation4 + $0x88] sm:$0xff]
    %v391 = vld [vmem:[#allocation4 + $0x90] sm:$0xff]
    %v392 = vld [vmem:[#allocation4 + $0x98] sm:$0xff]
    %v393 = vld [vmem:[#allocation4 + $0xa0] sm:$0xff]
    %v394 = vld [vmem:[#allocation4 + $0xa8] sm:$0xff]
    %v395 = vld [vmem:[#allocation4 + $0xb0] sm:$0xff]
    %v396 = vld [vmem:[#allocation4 + $0xb8] sm:$0xff]
    %v397 = vld [vmem:[#allocation4 + $0xc0] sm:$0xff]
    %v398 = vld [vmem:[#allocation4 + $0xc8] sm:$0xff]
    %v399 = vld [vmem:[#allocation4 + $0xd0] sm:$0xff]
    %v400 = vld [vmem:[#allocation4 + $0xd8] sm:$0xff]
    %v401 = vld [vmem:[#allocation4 + $0xe0] sm:$0xff]
    %v402 = vld [vmem:[#allocation4 + $0xe8] sm:$0xff]
    %v403 = vld [vmem:[#allocation4 + $0xf0] sm:$0xff]
    %v404 = vld [vmem:[#allocation4 + $0xf8] sm:$0xff]
    %v405 = vld [vmem:[#allocation4 + $0x100] sm:$0xff]
    %v406 = vld [vmem:[#allocation4 + $0x108] sm:$0xff]
    %v407 = vld [vmem:[#allocation4 + $0x110] sm:$0xff]
    %v408 = vld [vmem:[#allocation4 + $0x118] sm:$0xff]
    %v409 = vld [vmem:[#allocation4 + $0x120] sm:$0xff]
    %v410 = vld [vmem:[#allocation4 + $0x128] sm:$0xff]
    %v411 = vld [vmem:[#allocation4 + $0x130] sm:$0xff]
    %v412 = vld [vmem:[#allocation4 + $0x138] sm:$0xff]
    %v413 = vld [vmem:[#allocation4 + $0x140] sm:$0xff]
    %v414 = vld [vmem:[#allocation4 + $0x148] sm:$0xff]
    %v415 = vld [vmem:[#allocation4 + $0x150] sm:$0xff]
    %v416 = vld [vmem:[#allocation4 + $0x158] sm:$0xff]
    %v417 = vld [vmem:[#allocation4 + $0x160] sm:$0xff]
    %v418 = vld [vmem:[#allocation4 + $0x168] sm:$0xff]
    %v419 = vld [vmem:[#allocation4 + $0x170] sm:$0xff]
    %v420 = vld [vmem:[#allocation4 + $0x178] sm:$0xff]
    %v421 = vld [vmem:[%s4] sm:$0x1]
    %v423 = vlaneseq
    %v424 = vshrl.u32 %v423, 7
    %v425 = vsub.s32 0, %v424
    %v426 = vrot.slane %v421, %v425
    %428 = vmatprep.subr.mxu0 %v374
    %429 = vmatpush1.msra.mxu0 %v373
    %430 = vmatprep.subr.mxu0 %v377
    %431 = vmatpush1.msra.mxu0 %v376
    %432 = vmatprep.subr.mxu0 %v380
    %433 = vmatpush1.msra.mxu0 %v379
    %434 = vmatprep.subr.mxu0 %v383
    %435 = vmatpush1.msra.mxu0 %v382
    %436 = vmatprep.subr.mxu0 %v386
    %437 = vmatpush1.msra.mxu0 %v385
    %438 = vmatprep.subr.mxu0 %v389
    %439 = vmatpush1.msra.mxu0 %v388
    %440 = vmatprep.subr.mxu0 %v392
    %441 = vmatpush1.msra.mxu0 %v391
    %442 = vmatprep.subr.mxu0 %v395
    %443 = vmatpush1.msra.mxu0 %v394
    %444 = vmatprep.subr.mxu0 %v398
    %445 = vmatpush1.msra.mxu0 %v397
    %446 = vmatprep.subr.mxu0 %v401
    %447 = vmatpush1.msra.mxu0 %v400
    %448 = vmatprep.subr.mxu0 %v404
    %449 = vmatpush1.msra.mxu0 %v403
    %450 = vmatprep.subr.mxu0 %v407
    %451 = vmatpush1.msra.mxu0 %v406
    %452 = vmatprep.subr.mxu0 %v410
    %453 = vmatpush1.msra.mxu0 %v409
    %454 = vmatprep.subr.mxu0 %v413
    %455 = vmatpush1.msra.mxu0 %v412
    %456 = vmatprep.subr.mxu0 %v416
    %457 = vmatpush1.msra.mxu0 %v415
    %458 = vmatprep.subr.mxu0 %v419
    %459 = vmatpush1.msra.mxu0 %v418
    %460 = vmatprep.subr.mxu0 0.0
    %461 = vmatpush1.msra.mxu0 0.0
    %462 = vmatprep.subr.mxu0 0.0
    %463 = vmatpush1.msra.mxu0 0.0
    %464 = vmatprep.subr.mxu0 0.0
    %465 = vmatpush1.msra.mxu0 0.0
    %466 = vmatprep.subr.mxu0 0.0
    %467 = vmatpush1.msra.mxu0 0.0
    %468 = vmatprep.subr.mxu0 0.0
    %469 = vmatpush1.msra.mxu0 0.0
    %470 = vmatprep.subr.mxu0 0.0
    %471 = vmatpush1.msra.mxu0 0.0
    %472 = vmatprep.subr.mxu0 0.0
    %473 = vmatpush1.msra.mxu0 0.0
    %474 = vmatprep.subr.mxu0 0.0
    %475 = vmatpush1.msra.mxu0 0.0
    %476 = vmatprep.subr.mxu0 0.0
    %477 = vmatpush1.msra.mxu0 0.0
    %478 = vmatprep.subr.mxu0 0.0
    %479 = vmatpush1.msra.mxu0 0.0
    %480 = vmatprep.subr.mxu0 0.0
    %481 = vmatpush1.msra.mxu0 0.0
    %482 = vmatprep.subr.mxu0 0.0
    %483 = vmatpush1.msra.mxu0 0.0
    %484 = vmatprep.subr.mxu0 0.0
    %485 = vmatpush1.msra.mxu0 0.0
    %486 = vmatprep.subr.mxu0 0.0
    %487 = vmatpush1.msra.mxu0 0.0
    %488 = vmatprep.subr.mxu0 0.0
    %489 = vmatpush1.msra.mxu0 0.0
    %490 = vmatprep.subr.mxu0 0.0
    %491 = vmatpush1.msra.mxu0 0.0
    %492 = vmatprep.mubr.f32.mxu0 0.0
    %493 = vmatmul.mubr.f32.gmra.mrb[0].mxu0 0.0
    %v494 = vpop.f32.mrb[0].mxu0
    %v495 = vadd.f32 0.0, %v494
    %v496 = vpop.f32.mrb[0].mxu0
    %v497 = vadd.f32 0.0, %v496
    %498 = vdwg.mxu0
    %499 = vmatprep.subr.mxu0 0.0
    %500 = vmatpush1.msra.mxu0 %v375
    %501 = vmatprep.subr.mxu0 0.0
    %502 = vmatpush1.msra.mxu0 %v378
    %503 = vmatprep.subr.mxu0 0.0
    %504 = vmatpush1.msra.mxu0 %v381
    %505 = vmatprep.subr.mxu0 0.0
    %506 = vmatpush1.msra.mxu0 %v384
    %507 = vmatprep.subr.mxu0 0.0
    %508 = vmatpush1.msra.mxu0 %v387
    %509 = vmatprep.subr.mxu0 0.0
    %510 = vmatpush1.msra.mxu0 %v390
    %511 = vmatprep.subr.mxu0 0.0
    %512 = vmatpush1.msra.mxu0 %v393
    %513 = vmatprep.subr.mxu0 0.0
    %514 = vmatpush1.msra.mxu0 %v396
    %515 = vmatprep.subr.mxu0 0.0
    %516 = vmatpush1.msra.mxu0 %v399
    %517 = vmatprep.subr.mxu0 0.0
    %518 = vmatpush1.msra.mxu0 %v402
    %519 = vmatprep.subr.mxu0 0.0
    %520 = vmatpush1.msra.mxu0 %v405
    %521 = vmatprep.subr.mxu0 0.0
    %522 = vmatpush1.msra.mxu0 %v408
    %523 = vmatprep.subr.mxu0 0.0
    %524 = vmatpush1.msra.mxu0 %v411
    %525 = vmatprep.subr.mxu0 0.0
    %526 = vmatpush1.msra.mxu0 %v414
    %527 = vmatprep.subr.mxu0 0.0
    %528 = vmatpush1.msra.mxu0 %v417
    %529 = vmatprep.subr.mxu0 0.0
    %530 = vmatpush1.msra.mxu0 %v420
    %531 = vmatprep.subr.mxu0 0.0
    %532 = vmatpush1.msra.mxu0 0.0
    %533 = vmatprep.subr.mxu0 0.0
    %534 = vmatpush1.msra.mxu0 0.0
    %535 = vmatprep.subr.mxu0 0.0
    %536 = vmatpush1.msra.mxu0 0.0
    %537 = vmatprep.subr.mxu0 0.0
    %538 = vmatpush1.msra.mxu0 0.0
    %539 = vmatprep.subr.mxu0 0.0
    %540 = vmatpush1.msra.mxu0 0.0
    %541 = vmatprep.subr.mxu0 0.0
    %542 = vmatpush1.msra.mxu0 0.0
    %543 = vmatprep.subr.mxu0 0.0
    %544 = vmatpush1.msra.mxu0 0.0
    %545 = vmatprep.subr.mxu0 0.0
    %546 = vmatpush1.msra.mxu0 0.0
    %547 = vmatprep.subr.mxu0 0.0
    %548 = vmatpush1.msra.mxu0 0.0
    %549 = vmatprep.subr.mxu0 0.0
    %550 = vmatpush1.msra.mxu0 0.0
    %551 = vmatprep.subr.mxu0 0.0
    %552 = vmatpush1.msra.mxu0 0.0
    %553 = vmatprep.subr.mxu0 0.0
    %554 = vmatpush1.msra.mxu0 0.0
    %555 = vmatprep.subr.mxu0 0.0
    %556 = vmatpush1.msra.mxu0 0.0
    %557 = vmatprep.subr.mxu0 0.0
    %558 = vmatpush1.msra.mxu0 0.0
    %559 = vmatprep.subr.mxu0 0.0
    %560 = vmatpush1.msra.mxu0 0.0
    %561 = vmatprep.subr.mxu0 0.0
    %562 = vmatpush1.msra.mxu0 0.0
    %563 = vmatprep.mubr.f32.mxu0 0.0
    %564 = vmatmul.mubr.f32.gmra.mrb[0].mxu0 0.0
    %v565 = vpop.f32.mrb[0].mxu0
    %v566 = vadd.f32 0.0, %v565
    %v567 = vpop.f32.mrb[0].mxu0
    %568 = vdwg.mxu0
    %v569 = vadd.f32 %v222, %v495
    %v570 = vadd.f32 %v224, %v497
    %v571 = vxor.u32 %v569, 2147483648
    %v572 = vxor.u32 %v570, 2147483648
    %v573 = vmul.f32 %v571, 1.442695
    %v574 = vpow.pop %v573
    %v575 = vmul.f32 %v572, 1.442695
    %v576 = vpow.pop %v575
    %v577 = vadd.f32 %v574, 1.0
    %v578 = vadd.f32 %v576, 1.0
    %v579 = vrcp.pop %v577
    %v580 = vmul.f32 1.0, %v579
    %v581 = vrcp.pop %v578
    %v582 = vmul.f32 1.0, %v581
    %v583 = vadd.f32 %v566, %v426
    %v584 = vmul.f32 %v580, %v583
    %v585 = vadd.f32 %v335, %v584
    %v586 = vtanh.pop %v585
    %v587 = vsub.f32 0.0, %v586
    %v588 = vmul.f32 %v582, %v587
    %v589 = vadd.f32 %v586, %v588
    %590 = vst [vmem:[#allocation2] sm:$0xff] %v589
    %591 = vmatprep.subr.mxu0 %v374
    %592 = vmatpush1.msra.mxu0 %v373
    %593 = vmatprep.subr.mxu0 %v377
    %594 = vmatpush1.msra.mxu0 %v376
    %595 = vmatprep.subr.mxu0 %v380
    %596 = vmatpush1.msra.mxu0 %v379
    %597 = vmatprep.subr.mxu0 %v383
    %598 = vmatpush1.msra.mxu0 %v382
    %599 = vmatprep.subr.mxu0 %v386
    %600 = vmatpush1.msra.mxu0 %v385
    %601 = vmatprep.subr.mxu0 %v389
    %602 = vmatpush1.msra.mxu0 %v388
    %603 = vmatprep.subr.mxu0 %v392
    %604 = vmatpush1.msra.mxu0 %v391
    %605 = vmatprep.subr.mxu0 %v395
    %606 = vmatpush1.msra.mxu0 %v394
    %607 = vmatprep.subr.mxu0 %v398
    %608 = vmatpush1.msra.mxu0 %v397
    %609 = vmatprep.subr.mxu0 %v401
    %610 = vmatpush1.msra.mxu0 %v400
    %611 = vmatprep.subr.mxu0 %v404
    %612 = vmatpush1.msra.mxu0 %v403
    %613 = vmatprep.subr.mxu0 %v407
    %614 = vmatpush1.msra.mxu0 %v406
    %615 = vmatprep.subr.mxu0 %v410
    %616 = vmatpush1.msra.mxu0 %v409
    %617 = vmatprep.subr.mxu0 %v413
    %618 = vmatpush1.msra.mxu0 %v412
    %619 = vmatprep.subr.mxu0 %v416
    %620 = vmatpush1.msra.mxu0 %v415
    %621 = vmatprep.subr.mxu0 %v419
    %622 = vmatpush1.msra.mxu0 %v418
    %623 = vmatprep.subr.mxu0 0.0
    %624 = vmatpush1.msra.mxu0 0.0
    %625 = vmatprep.subr.mxu0 0.0
    %626 = vmatpush1.msra.mxu0 0.0
    %627 = vmatprep.subr.mxu0 0.0
    %628 = vmatpush1.msra.mxu0 0.0
    %629 = vmatprep.subr.mxu0 0.0
    %630 = vmatpush1.msra.mxu0 0.0
    %631 = vmatprep.subr.mxu0 0.0
    %632 = vmatpush1.msra.mxu0 0.0
    %633 = vmatprep.subr.mxu0 0.0
    %634 = vmatpush1.msra.mxu0 0.0
    %635 = vmatprep.subr.mxu0 0.0
    %636 = vmatpush1.msra.mxu0 0.0
    %637 = vmatprep.subr.mxu0 0.0
    %638 = vmatpush1.msra.mxu0 0.0
    %639 = vmatprep.subr.mxu0 0.0
    %640 = vmatpush1.msra.mxu0 0.0
    %641 = vmatprep.subr.mxu0 0.0
    %642 = vmatpush1.msra.mxu0 0.0
    %643 = vmatprep.subr.mxu0 0.0
    %644 = vmatpush1.msra.mxu0 0.0
    %645 = vmatprep.subr.mxu0 0.0
    %646 = vmatpush1.msra.mxu0 0.0
    %647 = vmatprep.subr.mxu0 0.0
    %648 = vmatpush1.msra.mxu0 0.0
    %649 = vmatprep.subr.mxu0 0.0
    %650 = vmatpush1.msra.mxu0 0.0
    %651 = vmatprep.subr.mxu0 0.0
    %652 = vmatpush1.msra.mxu0 0.0
    %653 = vmatprep.subr.mxu0 0.0
    %654 = vmatpush1.msra.mxu0 0.0
    %655 = vmatprep.mubr.f32.mxu0 0.0
    %656 = vmatmul.mubr.f32.gmra.mrb[0].mxu0 %v589
    %v657 = vpop.f32.mrb[0].mxu0
    %v658 = vadd.f32 0.0, %v657
    %v659 = vpop.f32.mrb[0].mxu0
    %v660 = vadd.f32 0.0, %v659
    %661 = vdwg.mxu0
    %662 = vmatprep.subr.mxu0 0.0
    %663 = vmatpush1.msra.mxu0 %v375
    %664 = vmatprep.subr.mxu0 0.0
    %665 = vmatpush1.msra.mxu0 %v378
    %666 = vmatprep.subr.mxu0 0.0
    %667 = vmatpush1.msra.mxu0 %v381
    %668 = vmatprep.subr.mxu0 0.0
    %669 = vmatpush1.msra.mxu0 %v384
    %670 = vmatprep.subr.mxu0 0.0
    %671 = vmatpush1.msra.mxu0 %v387
    %672 = vmatprep.subr.mxu0 0.0
    %673 = vmatpush1.msra.mxu0 %v390
    %674 = vmatprep.subr.mxu0 0.0
    %675 = vmatpush1.msra.mxu0 %v393
    %676 = vmatprep.subr.mxu0 0.0
    %677 = vmatpush1.msra.mxu0 %v396
    %678 = vmatprep.subr.mxu0 0.0
    %679 = vmatpush1.msra.mxu0 %v399
    %680 = vmatprep.subr.mxu0 0.0
    %681 = vmatpush1.msra.mxu0 %v402
    %682 = vmatprep.subr.mxu0 0.0
    %683 = vmatpush1.msra.mxu0 %v405
    %684 = vmatprep.subr.mxu0 0.0
    %685 = vmatpush1.msra.mxu0 %v408
    %686 = vmatprep.subr.mxu0 0.0
    %687 = vmatpush1.msra.mxu0 %v411
    %688 = vmatprep.subr.mxu0 0.0
    %689 = vmatpush1.msra.mxu0 %v414
    %690 = vmatprep.subr.mxu0 0.0
    %691 = vmatpush1.msra.mxu0 %v417
    %692 = vmatprep.subr.mxu0 0.0
    %693 = vmatpush1.msra.mxu0 %v420
    %694 = vmatprep.subr.mxu0 0.0
    %695 = vmatpush1.msra.mxu0 0.0
    %696 = vmatprep.subr.mxu0 0.0
    %697 = vmatpush1.msra.mxu0 0.0
    %698 = vmatprep.subr.mxu0 0.0
    %699 = vmatpush1.msra.mxu0 0.0
    %700 = vmatprep.subr.mxu0 0.0
    %701 = vmatpush1.msra.mxu0 0.0
    %702 = vmatprep.subr.mxu0 0.0
    %703 = vmatpush1.msra.mxu0 0.0
    %704 = vmatprep.subr.mxu0 0.0
    %705 = vmatpush1.msra.mxu0 0.0
    %706 = vmatprep.subr.mxu0 0.0
    %707 = vmatpush1.msra.mxu0 0.0
    %708 = vmatprep.subr.mxu0 0.0
    %709 = vmatpush1.msra.mxu0 0.0
    %710 = vmatprep.subr.mxu0 0.0
    %711 = vmatpush1.msra.mxu0 0.0
    %712 = vmatprep.subr.mxu0 0.0
    %713 = vmatpush1.msra.mxu0 0.0
    %714 = vmatprep.subr.mxu0 0.0
    %715 = vmatpush1.msra.mxu0 0.0
    %716 = vmatprep.subr.mxu0 0.0
    %717 = vmatpush1.msra.mxu0 0.0
    %718 = vmatprep.subr.mxu0 0.0
    %719 = vmatpush1.msra.mxu0 0.0
    %720 = vmatprep.subr.mxu0 0.0
    %721 = vmatpush1.msra.mxu0 0.0
    %722 = vmatprep.subr.mxu0 0.0
    %723 = vmatpush1.msra.mxu0 0.0
    %724 = vmatprep.subr.mxu0 0.0
    %725 = vmatpush1.msra.mxu0 0.0
    %726 = vmatprep.mubr.f32.mxu0 0.0
    %727 = vmatmul.mubr.f32.gmra.mrb[0].mxu0 %v589
    %v728 = vpop.f32.mrb[0].mxu0
    %v729 = vadd.f32 0.0, %v728
    %v730 = vpop.f32.mrb[0].mxu0
    %731 = vdwg.mxu0
    %v732 = vadd.f32 %v228, %v658
    %v733 = vadd.f32 %v230, %v660
    %v734 = vxor.u32 %v732, 2147483648
    %v735 = vxor.u32 %v733, 2147483648
    %v736 = vmul.f32 %v734, 1.442695
    %v737 = vpow.pop %v736
    %v738 = vmul.f32 %v735, 1.442695
    %v739 = vpow.pop %v738
    %v740 = vadd.f32 %v737, 1.0
    %v741 = vadd.f32 %v739, 1.0
    %v742 = vrcp.pop %v740
    %v743 = vmul.f32 1.0, %v742
    %v744 = vrcp.pop %v741
    %v745 = vmul.f32 1.0, %v744
    %v746 = vadd.f32 %v729, %v426
    %v747 = vmul.f32 %v743, %v746
    %v748 = vadd.f32 %v340, %v747
    %v749 = vtanh.pop %v748
    %v750 = vsub.f32 %v589, %v749
    %v751 = vmul.f32 %v745, %v750
    %v752 = vadd.f32 %v749, %v751
    %753 = vst [vmem:[#allocation2 + $0x8] sm:$0xff] %v752
    %754 = vmatprep.subr.mxu0 %v374
    %755 = vmatpush1.msra.mxu0 %v373
    %756 = vmatprep.subr.mxu0 %v377
    %757 = vmatpush1.msra.mxu0 %v376
    %758 = vmatprep.subr.mxu0 %v380
    %759 = vmatpush1.msra.mxu0 %v379
    %760 = vmatprep.subr.mxu0 %v383
    %761 = vmatpush1.msra.mxu0 %v382
    %762 = vmatprep.subr.mxu0 %v386
    %763 = vmatpush1.msra.mxu0 %v385
    %764 = vmatprep.subr.mxu0 %v389
    %765 = vmatpush1.msra.mxu0 %v388
    %766 = vmatprep.subr.mxu0 %v392
    %767 = vmatpush1.msra.mxu0 %v391
    %768 = vmatprep.subr.mxu0 %v395
    %769 = vmatpush1.msra.mxu0 %v394
    %770 = vmatprep.subr.mxu0 %v398
    %771 = vmatpush1.msra.mxu0 %v397
    %772 = vmatprep.subr.mxu0 %v401
    %773 = vmatpush1.msra.mxu0 %v400
    %774 = vmatprep.subr.mxu0 %v404
    %775 = vmatpush1.msra.mxu0 %v403
    %776 = vmatprep.subr.mxu0 %v407
    %777 = vmatpush1.msra.mxu0 %v406
    %778 = vmatprep.subr.mxu0 %v410
    %779 = vmatpush1.msra.mxu0 %v409
    %780 = vmatprep.subr.mxu0 %v413
    %781 = vmatpush1.msra.mxu0 %v412
    %782 = vmatprep.subr.mxu0 %v416
    %783 = vmatpush1.msra.mxu0 %v415
    %784 = vmatprep.subr.mxu0 %v419
    %785 = vmatpush1.msra.mxu0 %v418
    %786 = vmatprep.subr.mxu0 0.0
    %787 = vmatpush1.msra.mxu0 0.0
    %788 = vmatprep.subr.mxu0 0.0
    %789 = vmatpush1.msra.mxu0 0.0
    %790 = vmatprep.subr.mxu0 0.0
    %791 = vmatpush1.msra.mxu0 0.0
    %792 = vmatprep.subr.mxu0 0.0
    %793 = vmatpush1.msra.mxu0 0.0
    %794 = vmatprep.subr.mxu0 0.0
    %795 = vmatpush1.msra.mxu0 0.0
    %796 = vmatprep.subr.mxu0 0.0
    %797 = vmatpush1.msra.mxu0 0.0
    %798 = vmatprep.subr.mxu0 0.0
    %799 = vmatpush1.msra.mxu0 0.0
    %800 = vmatprep.subr.mxu0 0.0
    %801 = vmatpush1.msra.mxu0 0.0
    %802 = vmatprep.subr.mxu0 0.0
    %803 = vmatpush1.msra.mxu0 0.0
    %804 = vmatprep.subr.mxu0 0.0
    %805 = vmatpush1.msra.mxu0 0.0
    %806 = vmatprep.subr.mxu0 0.0
    %807 = vmatpush1.msra.mxu0 0.0
    %808 = vmatprep.subr.mxu0 0.0
    %809 = vmatpush1.msra.mxu0 0.0
    %810 = vmatprep.subr.mxu0 0.0
    %811 = vmatpush1.msra.mxu0 0.0
    %812 = vmatprep.subr.mxu0 0.0
    %813 = vmatpush1.msra.mxu0 0.0
    %814 = vmatprep.subr.mxu0 0.0
    %815 = vmatpush1.msra.mxu0 0.0
    %816 = vmatprep.subr.mxu0 0.0
    %817 = vmatpush1.msra.mxu0 0.0
    %818 = vmatprep.mubr.f32.mxu0 0.0
    %819 = vmatmul.mubr.f32.gmra.mrb[0].mxu0 %v752
    %v820 = vpop.f32.mrb[0].mxu0
    %v821 = vadd.f32 0.0, %v820
    %v822 = vpop.f32.mrb[0].mxu0
    %v823 = vadd.f32 0.0, %v822
    %824 = vdwg.mxu0
    %825 = vmatprep.subr.mxu0 0.0
    %826 = vmatpush1.msra.mxu0 %v375
    %827 = vmatprep.subr.mxu0 0.0
    %828 = vmatpush1.msra.mxu0 %v378
    %829 = vmatprep.subr.mxu0 0.0
    %830 = vmatpush1.msra.mxu0 %v381
    %831 = vmatprep.subr.mxu0 0.0
    %832 = vmatpush1.msra.mxu0 %v384
    %833 = vmatprep.subr.mxu0 0.0
    %834 = vmatpush1.msra.mxu0 %v387
    %835 = vmatprep.subr.mxu0 0.0
    %836 = vmatpush1.msra.mxu0 %v390
    %837 = vmatprep.subr.mxu0 0.0
    %838 = vmatpush1.msra.mxu0 %v393
    %839 = vmatprep.subr.mxu0 0.0
    %840 = vmatpush1.msra.mxu0 %v396
    %841 = vmatprep.subr.mxu0 0.0
    %842 = vmatpush1.msra.mxu0 %v399
    %843 = vmatprep.subr.mxu0 0.0
    %844 = vmatpush1.msra.mxu0 %v402
    %845 = vmatprep.subr.mxu0 0.0
    %846 = vmatpush1.msra.mxu0 %v405
    %847 = vmatprep.subr.mxu0 0.0
    %848 = vmatpush1.msra.mxu0 %v408
    %849 = vmatprep.subr.mxu0 0.0
    %850 = vmatpush1.msra.mxu0 %v411
    %851 = vmatprep.subr.mxu0 0.0
    %852 = vmatpush1.msra.mxu0 %v414
    %853 = vmatprep.subr.mxu0 0.0
    %854 = vmatpush1.msra.mxu0 %v417
    %855 = vmatprep.subr.mxu0 0.0
    %856 = vmatpush1.msra.mxu0 %v420
    %857 = vmatprep.subr.mxu0 0.0
    %858 = vmatpush1.msra.mxu0 0.0
    %859 = vmatprep.subr.mxu0 0.0
    %860 = vmatpush1.msra.mxu0 0.0
    %861 = vmatprep.subr.mxu0 0.0
    %862 = vmatpush1.msra.mxu0 0.0
    %863 = vmatprep.subr.mxu0 0.0
    %864 = vmatpush1.msra.mxu0 0.0
    %865 = vmatprep.subr.mxu0 0.0
    %866 = vmatpush1.msra.mxu0 0.0
    %867 = vmatprep.subr.mxu0 0.0
    %868 = vmatpush1.msra.mxu0 0.0
    %869 = vmatprep.subr.mxu0 0.0
    %870 = vmatpush1.msra.mxu0 0.0
    %871 = vmatprep.subr.mxu0 0.0
    %872 = vmatpush1.msra.mxu0 0.0
    %873 = vmatprep.subr.mxu0 0.0
    %874 = vmatpush1.msra.mxu0 0.0
    %875 = vmatprep.subr.mxu0 0.0
    %876 = vmatpush1.msra.mxu0 0.0
    %877 = vmatprep.subr.mxu0 0.0
    %878 = vmatpush1.msra.mxu0 0.0
    %879 = vmatprep.subr.mxu0 0.0
    %880 = vmatpush1.msra.mxu0 0.0
    %881 = vmatprep.subr.mxu0 0.0
    %882 = vmatpush1.msra.mxu0 0.0
    %883 = vmatprep.subr.mxu0 0.0
    %884 = vmatpush1.msra.mxu0 0.0
    %885 = vmatprep.subr.mxu0 0.0
    %886 = vmatpush1.msra.mxu0 0.0
    %887 = vmatprep.subr.mxu0 0.0
    %888 = vmatpush1.msra.mxu0 0.0
    %889 = vmatprep.mubr.f32.mxu0 0.0
    %890 = vmatmul.mubr.f32.gmra.mrb[0].mxu0 %v752
    %v891 = vpop.f32.mrb[0].mxu0
    %v892 = vadd.f32 0.0, %v891
    %v893 = vpop.f32.mrb[0].mxu0
    %894 = vdwg.mxu0
    %v895 = vadd.f32 %v234, %v821
    %v896 = vadd.f32 %v236, %v823
    %v897 = vxor.u32 %v895, 2147483648
    %v898 = vxor.u32 %v896, 2147483648
    %v899 = vmul.f32 %v897, 1.442695
    %v900 = vpow.pop %v899
    %v901 = vmul.f32 %v898, 1.442695
    %v902 = vpow.pop %v901
    %v903 = vadd.f32 %v900, 1.0
    %v904 = vadd.f32 %v902, 1.0
    %v905 = vrcp.pop %v903
    %v906 = vmul.f32 1.0, %v905
    %v907 = vrcp.pop %v904
    %v908 = vmul.f32 1.0, %v907
    %v909 = vadd.f32 %v892, %v426
    %v910 = vmul.f32 %v906, %v909
    %v911 = vadd.f32 %v345, %v910
    %v912 = vtanh.pop %v911
    %v913 = vsub.f32 %v752, %v912
    %v914 = vmul.f32 %v908, %v913
    %v915 = vadd.f32 %v912, %v914
    %916 = vst [vmem:[#allocation2 + $0x10] sm:$0xff] %v915
    %917 = vmatprep.subr.mxu0 %v374
    %918 = vmatpush1.msra.mxu0 %v373
    %919 = vmatprep.subr.mxu0 %v377
    %920 = vmatpush1.msra.mxu0 %v376
    %921 = vmatprep.subr.mxu0 %v380
    %922 = vmatpush1.msra.mxu0 %v379
    %923 = vmatprep.subr.mxu0 %v383
    %924 = vmatpush1.msra.mxu0 %v382
    %925 = vmatprep.subr.mxu0 %v386
    %926 = vmatpush1.msra.mxu0 %v385
    %927 = vmatprep.subr.mxu0 %v389
    %928 = vmatpush1.msra.mxu0 %v388
    %929 = vmatprep.subr.mxu0 %v392
    %930 = vmatpush1.msra.mxu0 %v391
    %931 = vmatprep.subr.mxu0 %v395
    %932 = vmatpush1.msra.mxu0 %v394
    %933 = vmatprep.subr.mxu0 %v398
    %934 = vmatpush1.msra.mxu0 %v397
    %935 = vmatprep.subr.mxu0 %v401
    %936 = vmatpush1.msra.mxu0 %v400
    %937 = vmatprep.subr.mxu0 %v404
    %938 = vmatpush1.msra.mxu0 %v403
    %939 = vmatprep.subr.mxu0 %v407
    %940 = vmatpush1.msra.mxu0 %v406
    %941 = vmatprep.subr.mxu0 %v410
    %942 = vmatpush1.msra.mxu0 %v409
    %943 = vmatprep.subr.mxu0 %v413
    %944 = vmatpush1.msra.mxu0 %v412
    %945 = vmatprep.subr.mxu0 %v416
    %946 = vmatpush1.msra.mxu0 %v415
    %947 = vmatprep.subr.mxu0 %v419
    %948 = vmatpush1.msra.mxu0 %v418
    %949 = vmatprep.subr.mxu0 0.0
    %950 = vmatpush1.msra.mxu0 0.0
    %951 = vmatprep.subr.mxu0 0.0
    %952 = vmatpush1.msra.mxu0 0.0
    %953 = vmatprep.subr.mxu0 0.0
    %954 = vmatpush1.msra.mxu0 0.0
    %955 = vmatprep.subr.mxu0 0.0
    %956 = vmatpush1.msra.mxu0 0.0
    %957 = vmatprep.subr.mxu0 0.0
    %958 = vmatpush1.msra.mxu0 0.0
    %959 = vmatprep.subr.mxu0 0.0
    %960 = vmatpush1.msra.mxu0 0.0
    %961 = vmatprep.subr.mxu0 0.0
    %962 = vmatpush1.msra.mxu0 0.0
    %963 = vmatprep.subr.mxu0 0.0
    %964 = vmatpush1.msra.mxu0 0.0
    %965 = vmatprep.subr.mxu0 0.0
    %966 = vmatpush1.msra.mxu0 0.0
    %967 = vmatprep.subr.mxu0 0.0
    %968 = vmatpush1.msra.mxu0 0.0
    %969 = vmatprep.subr.mxu0 0.0
    %970 = vmatpush1.msra.mxu0 0.0
    %971 = vmatprep.subr.mxu0 0.0
    %972 = vmatpush1.msra.mxu0 0.0
    %973 = vmatprep.subr.mxu0 0.0
    %974 = vmatpush1.msra.mxu0 0.0
    %975 = vmatprep.subr.mxu0 0.0
    %976 = vmatpush1.msra.mxu0 0.0
    %977 = vmatprep.subr.mxu0 0.0
    %978 = vmatpush1.msra.mxu0 0.0
    %979 = vmatprep.subr.mxu0 0.0
    %980 = vmatpush1.msra.mxu0 0.0
    %981 = vmatprep.mubr.f32.mxu0 0.0
    %982 = vmatmul.mubr.f32.gmra.mrb[0].mxu0 %v915
    %v983 = vpop.f32.mrb[0].mxu0
    %v984 = vadd.f32 0.0, %v983
    %v985 = vpop.f32.mrb[0].mxu0
    %v986 = vadd.f32 0.0, %v985
    %987 = vdwg.mxu0
    %988 = vmatprep.subr.mxu0 0.0
    %989 = vmatpush1.msra.mxu0 %v375
    %990 = vmatprep.subr.mxu0 0.0
    %991 = vmatpush1.msra.mxu0 %v378
    %992 = vmatprep.subr.mxu0 0.0
    %993 = vmatpush1.msra.mxu0 %v381
    %994 = vmatprep.subr.mxu0 0.0
    %995 = vmatpush1.msra.mxu0 %v384
    %996 = vmatprep.subr.mxu0 0.0
    %997 = vmatpush1.msra.mxu0 %v387
    %998 = vmatprep.subr.mxu0 0.0
    %999 = vmatpush1.msra.mxu0 %v390
    %1000 = vmatprep.subr.mxu0 0.0
    %1001 = vmatpush1.msra.mxu0 %v393
    %1002 = vmatprep.subr.mxu0 0.0
    %1003 = vmatpush1.msra.mxu0 %v396
    %1004 = vmatprep.subr.mxu0 0.0
    %1005 = vmatpush1.msra.mxu0 %v399
    %1006 = vmatprep.subr.mxu0 0.0
    %1007 = vmatpush1.msra.mxu0 %v402
    %1008 = vmatprep.subr.mxu0 0.0
    %1009 = vmatpush1.msra.mxu0 %v405
    %1010 = vmatprep.subr.mxu0 0.0
    %1011 = vmatpush1.msra.mxu0 %v408
    %1012 = vmatprep.subr.mxu0 0.0
    %1013 = vmatpush1.msra.mxu0 %v411
    %1014 = vmatprep.subr.mxu0 0.0
    %1015 = vmatpush1.msra.mxu0 %v414
    %1016 = vmatprep.subr.mxu0 0.0
    %1017 = vmatpush1.msra.mxu0 %v417
    %1018 = vmatprep.subr.mxu0 0.0
    %1019 = vmatpush1.msra.mxu0 %v420
    %1020 = vmatprep.subr.mxu0 0.0
    %1021 = vmatpush1.msra.mxu0 0.0
    %1022 = vmatprep.subr.mxu0 0.0
    %1023 = vmatpush1.msra.mxu0 0.0
    %1024 = vmatprep.subr.mxu0 0.0
    %1025 = vmatpush1.msra.mxu0 0.0
    %1026 = vmatprep.subr.mxu0 0.0
    %1027 = vmatpush1.msra.mxu0 0.0
    %1028 = vmatprep.subr.mxu0 0.0
    %1029 = vmatpush1.msra.mxu0 0.0
    %1030 = vmatprep.subr.mxu0 0.0
    %1031 = vmatpush1.msra.mxu0 0.0
    %1032 = vmatprep.subr.mxu0 0.0
    %1033 = vmatpush1.msra.mxu0 0.0
    %1034 = vmatprep.subr.mxu0 0.0
    %1035 = vmatpush1.msra.mxu0 0.0
    %1036 = vmatprep.subr.mxu0 0.0
    %1037 = vmatpush1.msra.mxu0 0.0
    %1038 = vmatprep.subr.mxu0 0.0
    %1039 = vmatpush1.msra.mxu0 0.0
    %1040 = vmatprep.subr.mxu0 0.0
    %1041 = vmatpush1.msra.mxu0 0.0
    %1042 = vmatprep.subr.mxu0 0.0
    %1043 = vmatpush1.msra.mxu0 0.0
    %1044 = vmatprep.subr.mxu0 0.0
    %1045 = vmatpush1.msra.mxu0 0.0
    %1046 = vmatprep.subr.mxu0 0.0
    %1047 = vmatpush1.msra.mxu0 0.0
    %1048 = vmatprep.subr.mxu0 0.0
    %1049 = vmatpush1.msra.mxu0 0.0
    %1050 = vmatprep.subr.mxu0 0.0
    %1051 = vmatpush1.msra.mxu0 0.0
    %1052 = vmatprep.mubr.f32.mxu0 0.0
    %1053 = vmatmul.mubr.f32.gmra.mrb[0].mxu0 %v915
    %v1054 = vpop.f32.mrb[0].mxu0
    %v1055 = vadd.f32 0.0, %v1054
    %v1056 = vpop.f32.mrb[0].mxu0
    %1057 = vdwg.mxu0
    %v1058 = vadd.f32 %v240, %v984
    %v1059 = vadd.f32 %v242, %v986
    %v1060 = vxor.u32 %v1058, 2147483648
    %v1061 = vxor.u32 %v1059, 2147483648
    %v1062 = vmul.f32 %v1060, 1.442695
    %v1063 = vpow.pop %v1062
    %v1064 = vmul.f32 %v1061, 1.442695
    %v1065 = vpow.pop %v1064
    %v1066 = vadd.f32 %v1063, 1.0
    %v1067 = vadd.f32 %v1065, 1.0
    %v1068 = vrcp.pop %v1066
    %v1069 = vmul.f32 1.0, %v1068
    %v1070 = vrcp.pop %v1067
    %v1071 = vmul.f32 1.0, %v1070
    %v1072 = vadd.f32 %v1055, %v426
    %v1073 = vmul.f32 %v1069, %v1072
    %v1074 = vadd.f32 %v350, %v1073
    %v1075 = vtanh.pop %v1074
    %v1076 = vsub.f32 %v915, %v1075
    %v1077 = vmul.f32 %v1071, %v1076
    %v1078 = vadd.f32 %v1075, %v1077
    %1079 = vst [vmem:[#allocation2 + $0x18] sm:$0xff] %v1078
    %1080 = vmatprep.subr.mxu0 %v374
    %1081 = vmatpush1.msra.mxu0 %v373
    %1082 = vmatprep.subr.mxu0 %v377
    %1083 = vmatpush1.msra.mxu0 %v376
    %1084 = vmatprep.subr.mxu0 %v380
    %1085 = vmatpush1.msra.mxu0 %v379
    %1086 = vmatprep.subr.mxu0 %v383
    %1087 = vmatpush1.msra.mxu0 %v382
    %1088 = vmatprep.subr.mxu0 %v386
    %1089 = vmatpush1.msra.mxu0 %v385
    %1090 = vmatprep.subr.mxu0 %v389
    %1091 = vmatpush1.msra.mxu0 %v388
    %1092 = vmatprep.subr.mxu0 %v392
    %1093 = vmatpush1.msra.mxu0 %v391
    %1094 = vmatprep.subr.mxu0 %v395
    %1095 = vmatpush1.msra.mxu0 %v394
    %1096 = vmatprep.subr.mxu0 %v398
    %1097 = vmatpush1.msra.mxu0 %v397
    %1098 = vmatprep.subr.mxu0 %v401
    %1099 = vmatpush1.msra.mxu0 %v400
    %1100 = vmatprep.subr.mxu0 %v404
    %1101 = vmatpush1.msra.mxu0 %v403
    %1102 = vmatprep.subr.mxu0 %v407
    %1103 = vmatpush1.msra.mxu0 %v406
    %1104 = vmatprep.subr.mxu0 %v410
    %1105 = vmatpush1.msra.mxu0 %v409
    %1106 = vmatprep.subr.mxu0 %v413
    %1107 = vmatpush1.msra.mxu0 %v412
    %1108 = vmatprep.subr.mxu0 %v416
    %1109 = vmatpush1.msra.mxu0 %v415
    %1110 = vmatprep.subr.mxu0 %v419
    %1111 = vmatpush1.msra.mxu0 %v418
    %1112 = vmatprep.subr.mxu0 0.0
    %1113 = vmatpush1.msra.mxu0 0.0
    %1114 = vmatprep.subr.mxu0 0.0
    %1115 = vmatpush1.msra.mxu0 0.0
    %1116 = vmatprep.subr.mxu0 0.0
    %1117 = vmatpush1.msra.mxu0 0.0
    %1118 = vmatprep.subr.mxu0 0.0
    %1119 = vmatpush1.msra.mxu0 0.0
    %1120 = vmatprep.subr.mxu0 0.0
    %1121 = vmatpush1.msra.mxu0 0.0
    %1122 = vmatprep.subr.mxu0 0.0
    %1123 = vmatpush1.msra.mxu0 0.0
    %1124 = vmatprep.subr.mxu0 0.0
    %1125 = vmatpush1.msra.mxu0 0.0
    %1126 = vmatprep.subr.mxu0 0.0
    %1127 = vmatpush1.msra.mxu0 0.0
    %1128 = vmatprep.subr.mxu0 0.0
    %1129 = vmatpush1.msra.mxu0 0.0
    %1130 = vmatprep.subr.mxu0 0.0
    %1131 = vmatpush1.msra.mxu0 0.0
    %1132 = vmatprep.subr.mxu0 0.0
    %1133 = vmatpush1.msra.mxu0 0.0
    %1134 = vmatprep.subr.mxu0 0.0
    %1135 = vmatpush1.msra.mxu0 0.0
    %1136 = vmatprep.subr.mxu0 0.0
    %1137 = vmatpush1.msra.mxu0 0.0
    %1138 = vmatprep.subr.mxu0 0.0
    %1139 = vmatpush1.msra.mxu0 0.0
    %1140 = vmatprep.subr.mxu0 0.0
    %1141 = vmatpush1.msra.mxu0 0.0
    %1142 = vmatprep.subr.mxu0 0.0
    %1143 = vmatpush1.msra.mxu0 0.0
    %1144 = vmatprep.mubr.f32.mxu0 0.0
    %1145 = vmatmul.mubr.f32.gmra.mrb[0].mxu0 %v1078
    %v1146 = vpop.f32.mrb[0].mxu0
    %v1147 = vadd.f32 0.0, %v1146
    %v1148 = vpop.f32.mrb[0].mxu0
    %v1149 = vadd.f32 0.0, %v1148
    %1150 = vdwg.mxu0
    %1151 = vmatprep.subr.mxu0 0.0
    %1152 = vmatpush1.msra.mxu0 %v375
    %1153 = vmatprep.subr.mxu0 0.0
    %1154 = vmatpush1.msra.mxu0 %v378
    %1155 = vmatprep.subr.mxu0 0.0
    %1156 = vmatpush1.msra.mxu0 %v381
    %1157 = vmatprep.subr.mxu0 0.0
    %1158 = vmatpush1.msra.mxu0 %v384
    %1159 = vmatprep.subr.mxu0 0.0
    %1160 = vmatpush1.msra.mxu0 %v387
    %1161 = vmatprep.subr.mxu0 0.0
    %1162 = vmatpush1.msra.mxu0 %v390
    %1163 = vmatprep.subr.mxu0 0.0
    %1164 = vmatpush1.msra.mxu0 %v393
    %1165 = vmatprep.subr.mxu0 0.0
    %1166 = vmatpush1.msra.mxu0 %v396
    %1167 = vmatprep.subr.mxu0 0.0
    %1168 = vmatpush1.msra.mxu0 %v399
    %1169 = vmatprep.subr.mxu0 0.0
    %1170 = vmatpush1.msra.mxu0 %v402
    %1171 = vmatprep.subr.mxu0 0.0
    %1172 = vmatpush1.msra.mxu0 %v405
    %1173 = vmatprep.subr.mxu0 0.0
    %1174 = vmatpush1.msra.mxu0 %v408
    %1175 = vmatprep.subr.mxu0 0.0
    %1176 = vmatpush1.msra.mxu0 %v411
    %1177 = vmatprep.subr.mxu0 0.0
    %1178 = vmatpush1.msra.mxu0 %v414
    %1179 = vmatprep.subr.mxu0 0.0
    %1180 = vmatpush1.msra.mxu0 %v417
    %1181 = vmatprep.subr.mxu0 0.0
    %1182 = vmatpush1.msra.mxu0 %v420
    %1183 = vmatprep.subr.mxu0 0.0
    %1184 = vmatpush1.msra.mxu0 0.0
    %1185 = vmatprep.subr.mxu0 0.0
    %1186 = vmatpush1.msra.mxu0 0.0
    %1187 = vmatprep.subr.mxu0 0.0
    %1188 = vmatpush1.msra.mxu0 0.0
    %1189 = vmatprep.subr.mxu0 0.0
    %1190 = vmatpush1.msra.mxu0 0.0
    %1191 = vmatprep.subr.mxu0 0.0
    %1192 = vmatpush1.msra.mxu0 0.0
    %1193 = vmatprep.subr.mxu0 0.0
    %1194 = vmatpush1.msra.mxu0 0.0
    %1195 = vmatprep.subr.mxu0 0.0
    %1196 = vmatpush1.msra.mxu0 0.0
    %1197 = vmatprep.subr.mxu0 0.0
    %1198 = vmatpush1.msra.mxu0 0.0
    %1199 = vmatprep.subr.mxu0 0.0
    %1200 = vmatpush1.msra.mxu0 0.0
    %1201 = vmatprep.subr.mxu0 0.0
    %1202 = vmatpush1.msra.mxu0 0.0
    %1203 = vmatprep.subr.mxu0 0.0
    %1204 = vmatpush1.msra.mxu0 0.0
    %1205 = vmatprep.subr.mxu0 0.0
    %1206 = vmatpush1.msra.mxu0 0.0
    %1207 = vmatprep.subr.mxu0 0.0
    %1208 = vmatpush1.msra.mxu0 0.0
    %1209 = vmatprep.subr.mxu0 0.0
    %1210 = vmatpush1.msra.mxu0 0.0
    %1211 = vmatprep.subr.mxu0 0.0
    %1212 = vmatpush1.msra.mxu0 0.0
    %1213 = vmatprep.subr.mxu0 0.0
    %1214 = vmatpush1.msra.mxu0 0.0
    %1215 = vmatprep.mubr.f32.mxu0 0.0
    %1216 = vmatmul.mubr.f32.gmra.mrb[0].mxu0 %v1078
    %v1217 = vpop.f32.mrb[0].mxu0
    %v1218 = vadd.f32 0.0, %v1217
    %v1219 = vpop.f32.mrb[0].mxu0
    %1220 = vdwg.mxu0
    %v1221 = vadd.f32 %v246, %v1147
    %v1222 = vadd.f32 %v248, %v1149
    %v1223 = vxor.u32 %v1221, 2147483648
    %v1224 = vxor.u32 %v1222, 2147483648
    %v1225 = vmul.f32 %v1223, 1.442695
    %v1226 = vpow.pop %v1225
    %v1227 = vmul.f32 %v1224, 1.442695
    %v1228 = vpow.pop %v1227
    %v1229 = vadd.f32 %v1226, 1.0
    %v1230 = vadd.f32 %v1228, 1.0
    %v1231 = vrcp.pop %v1229
    %v1232 = vmul.f32 1.0, %v1231
    %v1233 = vrcp.pop %v1230
    %v1234 = vmul.f32 1.0, %v1233
    %v1235 = vadd.f32 %v1218, %v426
    %v1236 = vmul.f32 %v1232, %v1235
    %v1237 = vadd.f32 %v355, %v1236
    %v1238 = vtanh.pop %v1237
    %v1239 = vsub.f32 %v1078, %v1238
    %v1240 = vmul.f32 %v1234, %v1239
    %v1241 = vadd.f32 %v1238, %v1240
    %1242 = vst [vmem:[#allocation2 + $0x20] sm:$0xff] %v1241
    %1243 = vmatprep.subr.mxu0 %v374
    %1244 = vmatpush1.msra.mxu0 %v373
    %1245 = vmatprep.subr.mxu0 %v377
    %1246 = vmatpush1.msra.mxu0 %v376
    %1247 = vmatprep.subr.mxu0 %v380
    %1248 = vmatpush1.msra.mxu0 %v379
    %1249 = vmatprep.subr.mxu0 %v383
    %1250 = vmatpush1.msra.mxu0 %v382
    %1251 = vmatprep.subr.mxu0 %v386
    %1252 = vmatpush1.msra.mxu0 %v385
    %1253 = vmatprep.subr.mxu0 %v389
    %1254 = vmatpush1.msra.mxu0 %v388
    %1255 = vmatprep.subr.mxu0 %v392
    %1256 = vmatpush1.msra.mxu0 %v391
    %1257 = vmatprep.subr.mxu0 %v395
    %1258 = vmatpush1.msra.mxu0 %v394
    %1259 = vmatprep.subr.mxu0 %v398
    %1260 = vmatpush1.msra.mxu0 %v397
    %1261 = vmatprep.subr.mxu0 %v401
    %1262 = vmatpush1.msra.mxu0 %v400
    %1263 = vmatprep.subr.mxu0 %v404
    %1264 = vmatpush1.msra.mxu0 %v403
    %1265 = vmatprep.subr.mxu0 %v407
    %1266 = vmatpush1.msra.mxu0 %v406
    %1267 = vmatprep.subr.mxu0 %v410
    %1268 = vmatpush1.msra.mxu0 %v409
    %1269 = vmatprep.subr.mxu0 %v413
    %1270 = vmatpush1.msra.mxu0 %v412
    %1271 = vmatprep.subr.mxu0 %v416
    %1272 = vmatpush1.msra.mxu0 %v415
    %1273 = vmatprep.subr.mxu0 %v419
    %1274 = vmatpush1.msra.mxu0 %v418
    %1275 = vmatprep.subr.mxu0 0.0
    %1276 = vmatpush1.msra.mxu0 0.0
    %1277 = vmatprep.subr.mxu0 0.0
    %1278 = vmatpush1.msra.mxu0 0.0
    %1279 = vmatprep.subr.mxu0 0.0
    %1280 = vmatpush1.msra.mxu0 0.0
    %1281 = vmatprep.subr.mxu0 0.0
    %1282 = vmatpush1.msra.mxu0 0.0
    %1283 = vmatprep.subr.mxu0 0.0
    %1284 = vmatpush1.msra.mxu0 0.0
    %1285 = vmatprep.subr.mxu0 0.0
    %1286 = vmatpush1.msra.mxu0 0.0
    %1287 = vmatprep.subr.mxu0 0.0
    %1288 = vmatpush1.msra.mxu0 0.0
    %1289 = vmatprep.subr.mxu0 0.0
    %1290 = vmatpush1.msra.mxu0 0.0
    %1291 = vmatprep.subr.mxu0 0.0
    %1292 = vmatpush1.msra.mxu0 0.0
    %1293 = vmatprep.subr.mxu0 0.0
    %1294 = vmatpush1.msra.mxu0 0.0
    %1295 = vmatprep.subr.mxu0 0.0
    %1296 = vmatpush1.msra.mxu0 0.0
    %1297 = vmatprep.subr.mxu0 0.0
    %1298 = vmatpush1.msra.mxu0 0.0
    %1299 = vmatprep.subr.mxu0 0.0
    %1300 = vmatpush1.msra.mxu0 0.0
    %1301 = vmatprep.subr.mxu0 0.0
    %1302 = vmatpush1.msra.mxu0 0.0
    %1303 = vmatprep.subr.mxu0 0.0
    %1304 = vmatpush1.msra.mxu0 0.0
    %1305 = vmatprep.subr.mxu0 0.0
    %1306 = vmatpush1.msra.mxu0 0.0
    %1307 = vmatprep.mubr.f32.mxu0 0.0
    %1308 = vmatmul.mubr.f32.gmra.mrb[0].mxu0 %v1241
    %v1309 = vpop.f32.mrb[0].mxu0
    %v1310 = vadd.f32 0.0, %v1309
    %v1311 = vpop.f32.mrb[0].mxu0
    %v1312 = vadd.f32 0.0, %v1311
    %1313 = vdwg.mxu0
    %1314 = vmatprep.subr.mxu0 0.0
    %1315 = vmatpush1.msra.mxu0 %v375
    %1316 = vmatprep.subr.mxu0 0.0
    %1317 = vmatpush1.msra.mxu0 %v378
    %1318 = vmatprep.subr.mxu0 0.0
    %1319 = vmatpush1.msra.mxu0 %v381
    %1320 = vmatprep.subr.mxu0 0.0
    %1321 = vmatpush1.msra.mxu0 %v384
    %1322 = vmatprep.subr.mxu0 0.0
    %1323 = vmatpush1.msra.mxu0 %v387
    %1324 = vmatprep.subr.mxu0 0.0
    %1325 = vmatpush1.msra.mxu0 %v390
    %1326 = vmatprep.subr.mxu0 0.0
    %1327 = vmatpush1.msra.mxu0 %v393
    %1328 = vmatprep.subr.mxu0 0.0
    %1329 = vmatpush1.msra.mxu0 %v396
    %1330 = vmatprep.subr.mxu0 0.0
    %1331 = vmatpush1.msra.mxu0 %v399
    %1332 = vmatprep.subr.mxu0 0.0
    %1333 = vmatpush1.msra.mxu0 %v402
    %1334 = vmatprep.subr.mxu0 0.0
    %1335 = vmatpush1.msra.mxu0 %v405
    %1336 = vmatprep.subr.mxu0 0.0
    %1337 = vmatpush1.msra.mxu0 %v408
    %1338 = vmatprep.subr.mxu0 0.0
    %1339 = vmatpush1.msra.mxu0 %v411
    %1340 = vmatprep.subr.mxu0 0.0
    %1341 = vmatpush1.msra.mxu0 %v414
    %1342 = vmatprep.subr.mxu0 0.0
    %1343 = vmatpush1.msra.mxu0 %v417
    %1344 = vmatprep.subr.mxu0 0.0
    %1345 = vmatpush1.msra.mxu0 %v420
    %1346 = vmatprep.subr.mxu0 0.0
    %1347 = vmatpush1.msra.mxu0 0.0
    %1348 = vmatprep.subr.mxu0 0.0
    %1349 = vmatpush1.msra.mxu0 0.0
    %1350 = vmatprep.subr.mxu0 0.0
    %1351 = vmatpush1.msra.mxu0 0.0
    %1352 = vmatprep.subr.mxu0 0.0
    %1353 = vmatpush1.msra.mxu0 0.0
    %1354 = vmatprep.subr.mxu0 0.0
    %1355 = vmatpush1.msra.mxu0 0.0
    %1356 = vmatprep.subr.mxu0 0.0
    %1357 = vmatpush1.msra.mxu0 0.0
    %1358 = vmatprep.subr.mxu0 0.0
    %1359 = vmatpush1.msra.mxu0 0.0
    %1360 = vmatprep.subr.mxu0 0.0
    %1361 = vmatpush1.msra.mxu0 0.0
    %1362 = vmatprep.subr.mxu0 0.0
    %1363 = vmatpush1.msra.mxu0 0.0
    %1364 = vmatprep.subr.mxu0 0.0
    %1365 = vmatpush1.msra.mxu0 0.0
    %1366 = vmatprep.subr.mxu0 0.0
    %1367 = vmatpush1.msra.mxu0 0.0
    %1368 = vmatprep.subr.mxu0 0.0
    %1369 = vmatpush1.msra.mxu0 0.0
    %1370 = vmatprep.subr.mxu0 0.0
    %1371 = vmatpush1.msra.mxu0 0.0
    %1372 = vmatprep.subr.mxu0 0.0
    %1373 = vmatpush1.msra.mxu0 0.0
    %1374 = vmatprep.subr.mxu0 0.0
    %1375 = vmatpush1.msra.mxu0 0.0
    %1376 = vmatprep.subr.mxu0 0.0
    %1377 = vmatpush1.msra.mxu0 0.0
    %1378 = vmatprep.mubr.f32.mxu0 0.0
    %1379 = vmatmul.mubr.f32.gmra.mrb[0].mxu0 %v1241
    %v1380 = vpop.f32.mrb[0].mxu0
    %v1381 = vadd.f32 0.0, %v1380
    %v1382 = vpop.f32.mrb[0].mxu0
    %1383 = vdwg.mxu0
    %v1384 = vadd.f32 %v252, %v1310
    %v1385 = vadd.f32 %v254, %v1312
    %v1386 = vxor.u32 %v1384, 2147483648
    %v1387 = vxor.u32 %v1385, 2147483648
    %v1388 = vmul.f32 %v1386, 1.442695
    %v1389 = vpow.pop %v1388
    %v1390 = vmul.f32 %v1387, 1.442695
    %v1391 = vpow.pop %v1390
    %v1392 = vadd.f32 %v1389, 1.0
    %v1393 = vadd.f32 %v1391, 1.0
    %v1394 = vrcp.pop %v1392
    %v1395 = vmul.f32 1.0, %v1394
    %v1396 = vrcp.pop %v1393
    %v1397 = vmul.f32 1.0, %v1396
    %v1398 = vadd.f32 %v1381, %v426
    %v1399 = vmul.f32 %v1395, %v1398
    %v1400 = vadd.f32 %v360, %v1399
    %v1401 = vtanh.pop %v1400
    %v1402 = vsub.f32 %v1241, %v1401
    %v1403 = vmul.f32 %v1397, %v1402
    %v1404 = vadd.f32 %v1401, %v1403
    %1405 = vst [vmem:[#allocation2 + $0x28] sm:$0xff] %v1404
    %1406 = vmatprep.subr.mxu0 %v374
    %1407 = vmatpush1.msra.mxu0 %v373
    %1408 = vmatprep.subr.mxu0 %v377
    %1409 = vmatpush1.msra.mxu0 %v376
    %1410 = vmatprep.subr.mxu0 %v380
    %1411 = vmatpush1.msra.mxu0 %v379
    %1412 = vmatprep.subr.mxu0 %v383
    %1413 = vmatpush1.msra.mxu0 %v382
    %1414 = vmatprep.subr.mxu0 %v386
    %1415 = vmatpush1.msra.mxu0 %v385
    %1416 = vmatprep.subr.mxu0 %v389
    %1417 = vmatpush1.msra.mxu0 %v388
    %1418 = vmatprep.subr.mxu0 %v392
    %1419 = vmatpush1.msra.mxu0 %v391
    %1420 = vmatprep.subr.mxu0 %v395
    %1421 = vmatpush1.msra.mxu0 %v394
    %1422 = vmatprep.subr.mxu0 %v398
    %1423 = vmatpush1.msra.mxu0 %v397
    %1424 = vmatprep.subr.mxu0 %v401
    %1425 = vmatpush1.msra.mxu0 %v400
    %1426 = vmatprep.subr.mxu0 %v404
    %1427 = vmatpush1.msra.mxu0 %v403
    %1428 = vmatprep.subr.mxu0 %v407
    %1429 = vmatpush1.msra.mxu0 %v406
    %1430 = vmatprep.subr.mxu0 %v410
    %1431 = vmatpush1.msra.mxu0 %v409
    %1432 = vmatprep.subr.mxu0 %v413
    %1433 = vmatpush1.msra.mxu0 %v412
    %1434 = vmatprep.subr.mxu0 %v416
    %1435 = vmatpush1.msra.mxu0 %v415
    %1436 = vmatprep.subr.mxu0 %v419
    %1437 = vmatpush1.msra.mxu0 %v418
    %1438 = vmatprep.subr.mxu0 0.0
    %1439 = vmatpush1.msra.mxu0 0.0
    %1440 = vmatprep.subr.mxu0 0.0
    %1441 = vmatpush1.msra.mxu0 0.0
    %1442 = vmatprep.subr.mxu0 0.0
    %1443 = vmatpush1.msra.mxu0 0.0
    %1444 = vmatprep.subr.mxu0 0.0
    %1445 = vmatpush1.msra.mxu0 0.0
    %1446 = vmatprep.subr.mxu0 0.0
    %1447 = vmatpush1.msra.mxu0 0.0
    %1448 = vmatprep.subr.mxu0 0.0
    %1449 = vmatpush1.msra.mxu0 0.0
    %1450 = vmatprep.subr.mxu0 0.0
    %1451 = vmatpush1.msra.mxu0 0.0
    %1452 = vmatprep.subr.mxu0 0.0
    %1453 = vmatpush1.msra.mxu0 0.0
    %1454 = vmatprep.subr.mxu0 0.0
    %1455 = vmatpush1.msra.mxu0 0.0
    %1456 = vmatprep.subr.mxu0 0.0
    %1457 = vmatpush1.msra.mxu0 0.0
    %1458 = vmatprep.subr.mxu0 0.0
    %1459 = vmatpush1.msra.mxu0 0.0
    %1460 = vmatprep.subr.mxu0 0.0
    %1461 = vmatpush1.msra.mxu0 0.0
    %1462 = vmatprep.subr.mxu0 0.0
    %1463 = vmatpush1.msra.mxu0 0.0
    %1464 = vmatprep.subr.mxu0 0.0
    %1465 = vmatpush1.msra.mxu0 0.0
    %1466 = vmatprep.subr.mxu0 0.0
    %1467 = vmatpush1.msra.mxu0 0.0
    %1468 = vmatprep.subr.mxu0 0.0
    %1469 = vmatpush1.msra.mxu0 0.0
    %1470 = vmatprep.mubr.f32.mxu0 0.0
    %1471 = vmatmul.mubr.f32.gmra.mrb[0].mxu0 %v1404
    %v1472 = vpop.f32.mrb[0].mxu0
    %v1473 = vadd.f32 0.0, %v1472
    %v1474 = vpop.f32.mrb[0].mxu0
    %v1475 = vadd.f32 0.0, %v1474
    %1476 = vdwg.mxu0
    %1477 = vmatprep.subr.mxu0 0.0
    %1478 = vmatpush1.msra.mxu0 %v375
    %1479 = vmatprep.subr.mxu0 0.0
    %1480 = vmatpush1.msra.mxu0 %v378
    %1481 = vmatprep.subr.mxu0 0.0
    %1482 = vmatpush1.msra.mxu0 %v381
    %1483 = vmatprep.subr.mxu0 0.0
    %1484 = vmatpush1.msra.mxu0 %v384
    %1485 = vmatprep.subr.mxu0 0.0
    %1486 = vmatpush1.msra.mxu0 %v387
    %1487 = vmatprep.subr.mxu0 0.0
    %1488 = vmatpush1.msra.mxu0 %v390
    %1489 = vmatprep.subr.mxu0 0.0
    %1490 = vmatpush1.msra.mxu0 %v393
    %1491 = vmatprep.subr.mxu0 0.0
    %1492 = vmatpush1.msra.mxu0 %v396
    %1493 = vmatprep.subr.mxu0 0.0
    %1494 = vmatpush1.msra.mxu0 %v399
    %1495 = vmatprep.subr.mxu0 0.0
    %1496 = vmatpush1.msra.mxu0 %v402
    %1497 = vmatprep.subr.mxu0 0.0
    %1498 = vmatpush1.msra.mxu0 %v405
    %1499 = vmatprep.subr.mxu0 0.0
    %1500 = vmatpush1.msra.mxu0 %v408
    %1501 = vmatprep.subr.mxu0 0.0
    %1502 = vmatpush1.msra.mxu0 %v411
    %1503 = vmatprep.subr.mxu0 0.0
    %1504 = vmatpush1.msra.mxu0 %v414
    %1505 = vmatprep.subr.mxu0 0.0
    %1506 = vmatpush1.msra.mxu0 %v417
    %1507 = vmatprep.subr.mxu0 0.0
    %1508 = vmatpush1.msra.mxu0 %v420
    %1509 = vmatprep.subr.mxu0 0.0
    %1510 = vmatpush1.msra.mxu0 0.0
    %1511 = vmatprep.subr.mxu0 0.0
    %1512 = vmatpush1.msra.mxu0 0.0
    %1513 = vmatprep.subr.mxu0 0.0
    %1514 = vmatpush1.msra.mxu0 0.0
    %1515 = vmatprep.subr.mxu0 0.0
    %1516 = vmatpush1.msra.mxu0 0.0
    %1517 = vmatprep.subr.mxu0 0.0
    %1518 = vmatpush1.msra.mxu0 0.0
    %1519 = vmatprep.subr.mxu0 0.0
    %1520 = vmatpush1.msra.mxu0 0.0
    %1521 = vmatprep.subr.mxu0 0.0
    %1522 = vmatpush1.msra.mxu0 0.0
    %1523 = vmatprep.subr.mxu0 0.0
    %1524 = vmatpush1.msra.mxu0 0.0
    %1525 = vmatprep.subr.mxu0 0.0
    %1526 = vmatpush1.msra.mxu0 0.0
    %1527 = vmatprep.subr.mxu0 0.0
    %1528 = vmatpush1.msra.mxu0 0.0
    %1529 = vmatprep.subr.mxu0 0.0
    %1530 = vmatpush1.msra.mxu0 0.0
    %1531 = vmatprep.subr.mxu0 0.0
    %1532 = vmatpush1.msra.mxu0 0.0
    %1533 = vmatprep.subr.mxu0 0.0
    %1534 = vmatpush1.msra.mxu0 0.0
    %1535 = vmatprep.subr.mxu0 0.0
    %1536 = vmatpush1.msra.mxu0 0.0
    %1537 = vmatprep.subr.mxu0 0.0
    %1538 = vmatpush1.msra.mxu0 0.0
    %1539 = vmatprep.subr.mxu0 0.0
    %1540 = vmatpush1.msra.mxu0 0.0
    %1541 = vmatprep.mubr.f32.mxu0 0.0
    %1542 = vmatmul.mubr.f32.gmra.mrb[0].mxu0 %v1404
    %v1543 = vpop.f32.mrb[0].mxu0
    %v1544 = vadd.f32 0.0, %v1543
    %v1545 = vpop.f32.mrb[0].mxu0
    %1546 = vdwg.mxu0
    %v1547 = vadd.f32 %v258, %v1473
    %v1548 = vadd.f32 %v260, %v1475
    %v1549 = vxor.u32 %v1547, 2147483648
    %v1550 = vxor.u32 %v1548, 2147483648
    %v1551 = vmul.f32 %v1549, 1.442695
    %v1552 = vpow.pop %v1551
    %v1553 = vmul.f32 %v1550, 1.442695
    %v1554 = vpow.pop %v1553
    %v1555 = vadd.f32 %v1552, 1.0
    %v1556 = vadd.f32 %v1554, 1.0
    %v1557 = vrcp.pop %v1555
    %v1558 = vmul.f32 1.0, %v1557
    %v1559 = vrcp.pop %v1556
    %v1560 = vmul.f32 1.0, %v1559
    %v1561 = vadd.f32 %v1544, %v426
    %v1562 = vmul.f32 %v1558, %v1561
    %v1563 = vadd.f32 %v365, %v1562
    %v1564 = vtanh.pop %v1563
    %v1565 = vsub.f32 %v1404, %v1564
    %v1566 = vmul.f32 %v1560, %v1565
    %v1567 = vadd.f32 %v1564, %v1566
    %1568 = vst [vmem:[#allocation2 + $0x30] sm:$0xff] %v1567
    %1569 = vmatprep.subr.mxu0 %v374
    %1570 = vmatpush1.msra.mxu0 %v373
    %1571 = vmatprep.subr.mxu0 %v377
    %1572 = vmatpush1.msra.mxu0 %v376
    %1573 = vmatprep.subr.mxu0 %v380
    %1574 = vmatpush1.msra.mxu0 %v379
    %1575 = vmatprep.subr.mxu0 %v383
    %1576 = vmatpush1.msra.mxu0 %v382
    %1577 = vmatprep.subr.mxu0 %v386
    %1578 = vmatpush1.msra.mxu0 %v385
    %1579 = vmatprep.subr.mxu0 %v389
    %1580 = vmatpush1.msra.mxu0 %v388
    %1581 = vmatprep.subr.mxu0 %v392
    %1582 = vmatpush1.msra.mxu0 %v391
    %1583 = vmatprep.subr.mxu0 %v395
    %1584 = vmatpush1.msra.mxu0 %v394
    %1585 = vmatprep.subr.mxu0 %v398
    %1586 = vmatpush1.msra.mxu0 %v397
    %1587 = vmatprep.subr.mxu0 %v401
    %1588 = vmatpush1.msra.mxu0 %v400
    %1589 = vmatprep.subr.mxu0 %v404
    %1590 = vmatpush1.msra.mxu0 %v403
    %1591 = vmatprep.subr.mxu0 %v407
    %1592 = vmatpush1.msra.mxu0 %v406
    %1593 = vmatprep.subr.mxu0 %v410
    %1594 = vmatpush1.msra.mxu0 %v409
    %1595 = vmatprep.subr.mxu0 %v413
    %1596 = vmatpush1.msra.mxu0 %v412
    %1597 = vmatprep.subr.mxu0 %v416
    %1598 = vmatpush1.msra.mxu0 %v415
    %1599 = vmatprep.subr.mxu0 %v419
    %1600 = vmatpush1.msra.mxu0 %v418
    %1601 = vmatprep.subr.mxu0 0.0
    %1602 = vmatpush1.msra.mxu0 0.0
    %1603 = vmatprep.subr.mxu0 0.0
    %1604 = vmatpush1.msra.mxu0 0.0
    %1605 = vmatprep.subr.mxu0 0.0
    %1606 = vmatpush1.msra.mxu0 0.0
    %1607 = vmatprep.subr.mxu0 0.0
    %1608 = vmatpush1.msra.mxu0 0.0
    %1609 = vmatprep.subr.mxu0 0.0
    %1610 = vmatpush1.msra.mxu0 0.0
    %1611 = vmatprep.subr.mxu0 0.0
    %1612 = vmatpush1.msra.mxu0 0.0
    %1613 = vmatprep.subr.mxu0 0.0
    %1614 = vmatpush1.msra.mxu0 0.0
    %1615 = vmatprep.subr.mxu0 0.0
    %1616 = vmatpush1.msra.mxu0 0.0
    %1617 = vmatprep.subr.mxu0 0.0
    %1618 = vmatpush1.msra.mxu0 0.0
    %1619 = vmatprep.subr.mxu0 0.0
    %1620 = vmatpush1.msra.mxu0 0.0
    %1621 = vmatprep.subr.mxu0 0.0
    %1622 = vmatpush1.msra.mxu0 0.0
    %1623 = vmatprep.subr.mxu0 0.0
    %1624 = vmatpush1.msra.mxu0 0.0
    %1625 = vmatprep.subr.mxu0 0.0
    %1626 = vmatpush1.msra.mxu0 0.0
    %1627 = vmatprep.subr.mxu0 0.0
    %1628 = vmatpush1.msra.mxu0 0.0
    %1629 = vmatprep.subr.mxu0 0.0
    %1630 = vmatpush1.msra.mxu0 0.0
    %1631 = vmatprep.subr.mxu0 0.0
    %1632 = vmatpush1.msra.mxu0 0.0
    %1633 = vmatprep.mubr.f32.mxu0 0.0
    %1634 = vmatmul.mubr.f32.gmra.mrb[0].mxu0 %v1567
    %v1635 = vpop.f32.mrb[0].mxu0
    %v1636 = vadd.f32 0.0, %v1635
    %v1637 = vpop.f32.mrb[0].mxu0
    %v1638 = vadd.f32 0.0, %v1637
    %1639 = vdwg.mxu0
    %1640 = vmatprep.subr.mxu0 0.0
    %1641 = vmatpush1.msra.mxu0 %v375
    %1642 = vmatprep.subr.mxu0 0.0
    %1643 = vmatpush1.msra.mxu0 %v378
    %1644 = vmatprep.subr.mxu0 0.0
    %1645 = vmatpush1.msra.mxu0 %v381
    %1646 = vmatprep.subr.mxu0 0.0
    %1647 = vmatpush1.msra.mxu0 %v384
    %1648 = vmatprep.subr.mxu0 0.0
    %1649 = vmatpush1.msra.mxu0 %v387
    %1650 = vmatprep.subr.mxu0 0.0
    %1651 = vmatpush1.msra.mxu0 %v390
    %1652 = vmatprep.subr.mxu0 0.0
    %1653 = vmatpush1.msra.mxu0 %v393
    %1654 = vmatprep.subr.mxu0 0.0
    %1655 = vmatpush1.msra.mxu0 %v396
    %1656 = vmatprep.subr.mxu0 0.0
    %1657 = vmatpush1.msra.mxu0 %v399
    %1658 = vmatprep.subr.mxu0 0.0
    %1659 = vmatpush1.msra.mxu0 %v402
    %1660 = vmatprep.subr.mxu0 0.0
    %1661 = vmatpush1.msra.mxu0 %v405
    %1662 = vmatprep.subr.mxu0 0.0
    %1663 = vmatpush1.msra.mxu0 %v408
    %1664 = vmatprep.subr.mxu0 0.0
    %1665 = vmatpush1.msra.mxu0 %v411
    %1666 = vmatprep.subr.mxu0 0.0
    %1667 = vmatpush1.msra.mxu0 %v414
    %1668 = vmatprep.subr.mxu0 0.0
    %1669 = vmatpush1.msra.mxu0 %v417
    %1670 = vmatprep.subr.mxu0 0.0
    %1671 = vmatpush1.msra.mxu0 %v420
    %1672 = vmatprep.subr.mxu0 0.0
    %1673 = vmatpush1.msra.mxu0 0.0
    %1674 = vmatprep.subr.mxu0 0.0
    %1675 = vmatpush1.msra.mxu0 0.0
    %1676 = vmatprep.subr.mxu0 0.0
    %1677 = vmatpush1.msra.mxu0 0.0
    %1678 = vmatprep.subr.mxu0 0.0
    %1679 = vmatpush1.msra.mxu0 0.0
    %1680 = vmatprep.subr.mxu0 0.0
    %1681 = vmatpush1.msra.mxu0 0.0
    %1682 = vmatprep.subr.mxu0 0.0
    %1683 = vmatpush1.msra.mxu0 0.0
    %1684 = vmatprep.subr.mxu0 0.0
    %1685 = vmatpush1.msra.mxu0 0.0
    %1686 = vmatprep.subr.mxu0 0.0
    %1687 = vmatpush1.msra.mxu0 0.0
    %1688 = vmatprep.subr.mxu0 0.0
    %1689 = vmatpush1.msra.mxu0 0.0
    %1690 = vmatprep.subr.mxu0 0.0
    %1691 = vmatpush1.msra.mxu0 0.0
    %1692 = vmatprep.subr.mxu0 0.0
    %1693 = vmatpush1.msra.mxu0 0.0
    %1694 = vmatprep.subr.mxu0 0.0
    %1695 = vmatpush1.msra.mxu0 0.0
    %1696 = vmatprep.subr.mxu0 0.0
    %1697 = vmatpush1.msra.mxu0 0.0
    %1698 = vmatprep.subr.mxu0 0.0
    %1699 = vmatpush1.msra.mxu0 0.0
    %1700 = vmatprep.subr.mxu0 0.0
    %1701 = vmatpush1.msra.mxu0 0.0
    %1702 = vmatprep.subr.mxu0 0.0
    %1703 = vmatpush1.msra.mxu0 0.0
    %1704 = vmatprep.mubr.f32.mxu0 0.0
    %1705 = vmatmul.mubr.f32.gmra.mrb[0].mxu0 %v1567
    %v1706 = vpop.f32.mrb[0].mxu0
    %v1707 = vadd.f32 0.0, %v1706
    %v1708 = vpop.f32.mrb[0].mxu0
    %1709 = vdwg.mxu0
    %v1710 = vadd.f32 %v264, %v1636
    %v1711 = vadd.f32 %v266, %v1638
    %v1712 = vxor.u32 %v1710, 2147483648
    %v1713 = vxor.u32 %v1711, 2147483648
    %v1714 = vmul.f32 %v1712, 1.442695
    %v1715 = vpow.pop %v1714
    %v1716 = vmul.f32 %v1713, 1.442695
    %v1717 = vpow.pop %v1716
    %v1718 = vadd.f32 %v1715, 1.0
    %v1719 = vadd.f32 %v1717, 1.0
    %v1720 = vrcp.pop %v1718
    %v1721 = vmul.f32 1.0, %v1720
    %v1722 = vrcp.pop %v1719
    %v1723 = vmul.f32 1.0, %v1722
    %v1724 = vadd.f32 %v1707, %v426
    %v1725 = vmul.f32 %v1721, %v1724
    %v1726 = vadd.f32 %v370, %v1725
    %v1727 = vtanh.pop %v1726
    %v1728 = vsub.f32 %v1567, %v1727
    %v1729 = vmul.f32 %v1723, %v1728
    %v1730 = vadd.f32 %v1727, %v1729
    %1731 = vst [vmem:[#allocation2 + $0x38] sm:$0xff] %v1730
    %v1732 = vld [vmem:[#allocation2] sm:$0xff]
    %v1733 = vld [vmem:[#allocation2 + $0x8] sm:$0xff]
    %v1734 = vld [vmem:[#allocation2 + $0x10] sm:$0xff]
    %v1735 = vld [vmem:[#allocation2 + $0x18] sm:$0xff]
    %v1736 = vld [vmem:[#allocation2 + $0x20] sm:$0xff]
    %v1737 = vld [vmem:[#allocation2 + $0x28] sm:$0xff]
    %v1738 = vld [vmem:[#allocation2 + $0x30] sm:$0xff]
    %v1739 = vld [vmem:[#allocation2 + $0x38] sm:$0xff]
    %v1740 = vld [vmem:[#allocation6] sm:$0xff]
    %v1741 = vld [vmem:[#allocation6 + $0x8] sm:$0xff]
    %v1742 = vld [vmem:[#allocation6 + $0x10] sm:$0xff]
    %v1743 = vld [vmem:[#allocation6 + $0x18] sm:$0xff]
    %v1744 = vld [vmem:[#allocation6 + $0x20] sm:$0xff]
    %v1745 = vld [vmem:[#allocation6 + $0x28] sm:$0xff]
    %v1746 = vld [vmem:[#allocation6 + $0x30] sm:$0xff]
    %v1747 = vld [vmem:[#allocation6 + $0x38] sm:$0xff]
    %v1748 = vld [vmem:[#allocation6 + $0x40] sm:$0xff]
    %v1749 = vld [vmem:[#allocation6 + $0x48] sm:$0xff]
    %v1750 = vld [vmem:[#allocation6 + $0x50] sm:$0xff]
    %v1751 = vld [vmem:[#allocation6 + $0x58] sm:$0xff]
    %v1752 = vld [vmem:[#allocation6 + $0x60] sm:$0xff]
    %v1753 = vld [vmem:[#allocation6 + $0x68] sm:$0xff]
    %v1754 = vld [vmem:[#allocation6 + $0x70] sm:$0xff]
    %v1755 = vld [vmem:[#allocation6 + $0x78] sm:$0xff]
    %v1756 = vld [vmem:[#allocation6 + $0x80] sm:$0xff]
    %v1757 = vld [vmem:[#allocation6 + $0x88] sm:$0xff]
    %v1758 = vld [vmem:[#allocation6 + $0x90] sm:$0xff]
    %v1759 = vld [vmem:[#allocation6 + $0x98] sm:$0xff]
    %v1760 = vld [vmem:[#allocation6 + $0xa0] sm:$0xff]
    %v1761 = vld [vmem:[#allocation6 + $0xa8] sm:$0xff]
    %v1762 = vld [vmem:[#allocation6 + $0xb0] sm:$0xff]
    %v1763 = vld [vmem:[#allocation6 + $0xb8] sm:$0xff]
    %v1764 = vld [vmem:[#allocation6 + $0xc0] sm:$0xff]
    %v1765 = vld [vmem:[#allocation6 + $0xc8] sm:$0xff]
    %v1766 = vld [vmem:[#allocation6 + $0xd0] sm:$0xff]
    %v1767 = vld [vmem:[#allocation6 + $0xd8] sm:$0xff]
    %v1768 = vld [vmem:[#allocation6 + $0xe0] sm:$0xff]
    %v1769 = vld [vmem:[#allocation6 + $0xe8] sm:$0xff]
    %v1770 = vld [vmem:[#allocation6 + $0xf0] sm:$0xff]
    %v1771 = vld [vmem:[#allocation6 + $0xf8] sm:$0xff]
    %v1772 = vld [vmem:[#allocation6 + $0x100] sm:$0xff]
    %v1773 = vld [vmem:[#allocation6 + $0x108] sm:$0xff]
    %v1774 = vld [vmem:[#allocation6 + $0x110] sm:$0xff]
    %v1775 = vld [vmem:[#allocation6 + $0x118] sm:$0xff]
    %v1776 = vld [vmem:[#allocation6 + $0x120] sm:$0xff]
    %v1777 = vld [vmem:[#allocation6 + $0x128] sm:$0xff]
    %v1778 = vld [vmem:[#allocation6 + $0x130] sm:$0xff]
    %v1779 = vld [vmem:[#allocation6 + $0x138] sm:$0xff]
    %v1780 = vld [vmem:[#allocation6 + $0x140] sm:$0xff]
    %v1781 = vld [vmem:[#allocation6 + $0x148] sm:$0xff]
    %v1782 = vld [vmem:[#allocation6 + $0x150] sm:$0xff]
    %v1783 = vld [vmem:[#allocation6 + $0x158] sm:$0xff]
    %v1784 = vld [vmem:[#allocation6 + $0x160] sm:$0xff]
    %v1785 = vld [vmem:[#allocation6 + $0x168] sm:$0xff]
    %v1786 = vld [vmem:[#allocation6 + $0x170] sm:$0xff]
    %v1787 = vld [vmem:[#allocation6 + $0x178] sm:$0xff]
    %v1788 = vld [vmem:[%s7] sm:$0x7]
    %v1790 = vlaneseq
    %v1791 = vshrl.u32 %v1790, 7
    %v1792 = vsub.s32 0, %v1791
    %v1793 = vrot.slane %v1788, %v1792
    %v1794 = vlaneseq
    %v1795 = vshrl.u32 %v1794, 7
    %v1796 = vsub.s32 1, %v1795
    %v1797 = vrot.slane %v1788, %v1796
    %v1798 = vlaneseq
    %v1799 = vshrl.u32 %v1798, 7
    %v1800 = vsub.s32 2, %v1799
    %v1801 = vrot.slane %v1788, %v1800
    %1805 = vmatprep.subr.mxu0 %v1741
    %1806 = vmatpush1.msra.mxu0 %v1740
    %1807 = vmatprep.subr.mxu0 %v1744
    %1808 = vmatpush1.msra.mxu0 %v1743
    %1809 = vmatprep.subr.mxu0 %v1747
    %1810 = vmatpush1.msra.mxu0 %v1746
    %1811 = vmatprep.subr.mxu0 %v1750
    %1812 = vmatpush1.msra.mxu0 %v1749
    %1813 = vmatprep.subr.mxu0 %v1753
    %1814 = vmatpush1.msra.mxu0 %v1752
    %1815 = vmatprep.subr.mxu0 %v1756
    %1816 = vmatpush1.msra.mxu0 %v1755
    %1817 = vmatprep.subr.mxu0 %v1759
    %1818 = vmatpush1.msra.mxu0 %v1758
    %1819 = vmatprep.subr.mxu0 %v1762
    %1820 = vmatpush1.msra.mxu0 %v1761
    %1821 = vmatprep.subr.mxu0 %v1765
    %1822 = vmatpush1.msra.mxu0 %v1764
    %1823 = vmatprep.subr.mxu0 %v1768
    %1824 = vmatpush1.msra.mxu0 %v1767
    %1825 = vmatprep.subr.mxu0 %v1771
    %1826 = vmatpush1.msra.mxu0 %v1770
    %1827 = vmatprep.subr.mxu0 %v1774
    %1828 = vmatpush1.msra.mxu0 %v1773
    %1829 = vmatprep.subr.mxu0 %v1777
    %1830 = vmatpush1.msra.mxu0 %v1776
    %1831 = vmatprep.subr.mxu0 %v1780
    %1832 = vmatpush1.msra.mxu0 %v1779
    %1833 = vmatprep.subr.mxu0 %v1783
    %1834 = vmatpush1.msra.mxu0 %v1782
    %1835 = vmatprep.subr.mxu0 %v1786
    %1836 = vmatpush1.msra.mxu0 %v1785
    %1837 = vmatprep.subr.mxu0 0.0
    %1838 = vmatpush1.msra.mxu0 0.0
    %1839 = vmatprep.subr.mxu0 0.0
    %1840 = vmatpush1.msra.mxu0 0.0
    %1841 = vmatprep.subr.mxu0 0.0
    %1842 = vmatpush1.msra.mxu0 0.0
    %1843 = vmatprep.subr.mxu0 0.0
    %1844 = vmatpush1.msra.mxu0 0.0
    %1845 = vmatprep.subr.mxu0 0.0
    %1846 = vmatpush1.msra.mxu0 0.0
    %1847 = vmatprep.subr.mxu0 0.0
    %1848 = vmatpush1.msra.mxu0 0.0
    %1849 = vmatprep.subr.mxu0 0.0
    %1850 = vmatpush1.msra.mxu0 0.0
    %1851 = vmatprep.subr.mxu0 0.0
    %1852 = vmatpush1.msra.mxu0 0.0
    %1853 = vmatprep.subr.mxu0 0.0
    %1854 = vmatpush1.msra.mxu0 0.0
    %1855 = vmatprep.subr.mxu0 0.0
    %1856 = vmatpush1.msra.mxu0 0.0
    %1857 = vmatprep.subr.mxu0 0.0
    %1858 = vmatpush1.msra.mxu0 0.0
    %1859 = vmatprep.subr.mxu0 0.0
    %1860 = vmatpush1.msra.mxu0 0.0
    %1861 = vmatprep.subr.mxu0 0.0
    %1862 = vmatpush1.msra.mxu0 0.0
    %1863 = vmatprep.subr.mxu0 0.0
    %1864 = vmatpush1.msra.mxu0 0.0
    %1865 = vmatprep.subr.mxu0 0.0
    %1866 = vmatpush1.msra.mxu0 0.0
    %1867 = vmatprep.subr.mxu0 0.0
    %1868 = vmatpush1.msra.mxu0 0.0
    %1869 = vmatprep.mubr.f32.mxu0 0.0
    %1870 = vmatmul.mubr.f32.gmra.mrb[0].mxu0 %v1732
    %v1871 = vpop.f32.mrb[0].mxu0
    %v1872 = vadd.f32 %v1793, %v1871
    %v1873 = vpop.f32.mrb[0].mxu0
    %v1874 = vadd.f32 %v1797, %v1873
    %1875 = vmatprep.mubr.f32.mxu0 0.0
    %1876 = vmatmul.mubr.f32.gmra.mrb[0].mxu0 %v1733
    %v1877 = vpop.f32.mrb[0].mxu0
    %v1878 = vadd.f32 %v1793, %v1877
    %v1879 = vpop.f32.mrb[0].mxu0
    %v1880 = vadd.f32 %v1797, %v1879
    %1881 = vmatprep.mubr.f32.mxu0 0.0
    %1882 = vmatmul.mubr.f32.gmra.mrb[0].mxu0 %v1734
    %v1883 = vpop.f32.mrb[0].mxu0
    %v1884 = vadd.f32 %v1793, %v1883
    %v1885 = vpop.f32.mrb[0].mxu0
    %v1886 = vadd.f32 %v1797, %v1885
    %1887 = vmatprep.mubr.f32.mxu0 0.0
    %1888 = vmatmul.mubr.f32.gmra.mrb[0].mxu0 %v1735
    %v1889 = vpop.f32.mrb[0].mxu0
    %v1890 = vadd.f32 %v1793, %v1889
    %v1891 = vpop.f32.mrb[0].mxu0
    %v1892 = vadd.f32 %v1797, %v1891
    %1893 = vmatprep.mubr.f32.mxu0 0.0
    %1894 = vmatmul.mubr.f32.gmra.mrb[0].mxu0 %v1736
    %v1895 = vpop.f32.mrb[0].mxu0
    %v1896 = vadd.f32 %v1793, %v1895
    %v1897 = vpop.f32.mrb[0].mxu0
    %v1898 = vadd.f32 %v1797, %v1897
    %1899 = vmatprep.mubr.f32.mxu0 0.0
    %1900 = vmatmul.mubr.f32.gmra.mrb[0].mxu0 %v1737
    %v1901 = vpop.f32.mrb[0].mxu0
    %v1902 = vadd.f32 %v1793, %v1901
    %v1903 = vpop.f32.mrb[0].mxu0
    %v1904 = vadd.f32 %v1797, %v1903
    %1905 = vmatprep.mubr.f32.mxu0 0.0
    %1906 = vmatmul.mubr.f32.gmra.mrb[0].mxu0 %v1738
    %v1907 = vpop.f32.mrb[0].mxu0
    %v1908 = vadd.f32 %v1793, %v1907
    %v1909 = vpop.f32.mrb[0].mxu0
    %v1910 = vadd.f32 %v1797, %v1909
    %1911 = vmatprep.mubr.f32.mxu0 0.0
    %1912 = vmatmul.mubr.f32.gmra.mrb[0].mxu0 %v1739
    %v1913 = vpop.f32.mrb[0].mxu0
    %v1914 = vadd.f32 %v1793, %v1913
    %v1915 = vpop.f32.mrb[0].mxu0
    %v1916 = vadd.f32 %v1797, %v1915
    %1917 = vdwg.mxu0
    %1918 = vmatprep.subr.mxu0 0.0
    %1919 = vmatpush1.msra.mxu0 %v1742
    %1920 = vmatprep.subr.mxu0 0.0
    %1921 = vmatpush1.msra.mxu0 %v1745
    %1922 = vmatprep.subr.mxu0 0.0
    %1923 = vmatpush1.msra.mxu0 %v1748
    %1924 = vmatprep.subr.mxu0 0.0
    %1925 = vmatpush1.msra.mxu0 %v1751
    %1926 = vmatprep.subr.mxu0 0.0
    %1927 = vmatpush1.msra.mxu0 %v1754
    %1928 = vmatprep.subr.mxu0 0.0
    %1929 = vmatpush1.msra.mxu0 %v1757
    %1930 = vmatprep.subr.mxu0 0.0
    %1931 = vmatpush1.msra.mxu0 %v1760
    %1932 = vmatprep.subr.mxu0 0.0
    %1933 = vmatpush1.msra.mxu0 %v1763
    %1934 = vmatprep.subr.mxu0 0.0
    %1935 = vmatpush1.msra.mxu0 %v1766
    %1936 = vmatprep.subr.mxu0 0.0
    %1937 = vmatpush1.msra.mxu0 %v1769
    %1938 = vmatprep.subr.mxu0 0.0
    %1939 = vmatpush1.msra.mxu0 %v1772
    %1940 = vmatprep.subr.mxu0 0.0
    %1941 = vmatpush1.msra.mxu0 %v1775
    %1942 = vmatprep.subr.mxu0 0.0
    %1943 = vmatpush1.msra.mxu0 %v1778
    %1944 = vmatprep.subr.mxu0 0.0
    %1945 = vmatpush1.msra.mxu0 %v1781
    %1946 = vmatprep.subr.mxu0 0.0
    %1947 = vmatpush1.msra.mxu0 %v1784
    %1948 = vmatprep.subr.mxu0 0.0
    %1949 = vmatpush1.msra.mxu0 %v1787
    %1950 = vmatprep.subr.mxu0 0.0
    %1951 = vmatpush1.msra.mxu0 0.0
    %1952 = vmatprep.subr.mxu0 0.0
    %1953 = vmatpush1.msra.mxu0 0.0
    %1954 = vmatprep.subr.mxu0 0.0
    %1955 = vmatpush1.msra.mxu0 0.0
    %1956 = vmatprep.subr.mxu0 0.0
    %1957 = vmatpush1.msra.mxu0 0.0
    %1958 = vmatprep.subr.mxu0 0.0
    %1959 = vmatpush1.msra.mxu0 0.0
    %1960 = vmatprep.subr.mxu0 0.0
    %1961 = vmatpush1.msra.mxu0 0.0
    %1962 = vmatprep.subr.mxu0 0.0
    %1963 = vmatpush1.msra.mxu0 0.0
    %1964 = vmatprep.subr.mxu0 0.0
    %1965 = vmatpush1.msra.mxu0 0.0
    %1966 = vmatprep.subr.mxu0 0.0
    %1967 = vmatpush1.msra.mxu0 0.0
    %1968 = vmatprep.subr.mxu0 0.0
    %1969 = vmatpush1.msra.mxu0 0.0
    %1970 = vmatprep.subr.mxu0 0.0
    %1971 = vmatpush1.msra.mxu0 0.0
    %1972 = vmatprep.subr.mxu0 0.0
    %1973 = vmatpush1.msra.mxu0 0.0
    %1974 = vmatprep.subr.mxu0 0.0
    %1975 = vmatpush1.msra.mxu0 0.0
    %1976 = vmatprep.subr.mxu0 0.0
    %1977 = vmatpush1.msra.mxu0 0.0
    %1978 = vmatprep.subr.mxu0 0.0
    %1979 = vmatpush1.msra.mxu0 0.0
    %1980 = vmatprep.subr.mxu0 0.0
    %1981 = vmatpush1.msra.mxu0 0.0
    %1982 = vmatprep.mubr.f32.mxu0 0.0
    %1983 = vmatmul.mubr.f32.gmra.mrb[0].mxu0 %v1732
    %v1984 = vpop.f32.mrb[0].mxu0
    %v1985 = vadd.f32 %v1801, %v1984
    %v1986 = vpop.f32.mrb[0].mxu0
    %1987 = vmatprep.mubr.f32.mxu0 0.0
    %1988 = vmatmul.mubr.f32.gmra.mrb[0].mxu0 %v1733
    %v1989 = vpop.f32.mrb[0].mxu0
    %v1990 = vadd.f32 %v1801, %v1989
    %v1991 = vpop.f32.mrb[0].mxu0
    %1992 = vmatprep.mubr.f32.mxu0 0.0
    %1993 = vmatmul.mubr.f32.gmra.mrb[0].mxu0 %v1734
    %v1994 = vpop.f32.mrb[0].mxu0
    %v1995 = vadd.f32 %v1801, %v1994
    %v1996 = vpop.f32.mrb[0].mxu0
    %1997 = vmatprep.mubr.f32.mxu0 0.0
    %1998 = vmatmul.mubr.f32.gmra.mrb[0].mxu0 %v1735
    %v1999 = vpop.f32.mrb[0].mxu0
    %v2000 = vadd.f32 %v1801, %v1999
    %v2001 = vpop.f32.mrb[0].mxu0
    %2002 = vmatprep.mubr.f32.mxu0 0.0
    %2003 = vmatmul.mubr.f32.gmra.mrb[0].mxu0 %v1736
    %v2004 = vpop.f32.mrb[0].mxu0
    %v2005 = vadd.f32 %v1801, %v2004
    %v2006 = vpop.f32.mrb[0].mxu0
    %2007 = vmatprep.mubr.f32.mxu0 0.0
    %2008 = vmatmul.mubr.f32.gmra.mrb[0].mxu0 %v1737
    %v2009 = vpop.f32.mrb[0].mxu0
    %v2010 = vadd.f32 %v1801, %v2009
    %v2011 = vpop.f32.mrb[0].mxu0
    %2012 = vmatprep.mubr.f32.mxu0 0.0
    %2013 = vmatmul.mubr.f32.gmra.mrb[0].mxu0 %v1738
    %v2014 = vpop.f32.mrb[0].mxu0
    %v2015 = vadd.f32 %v1801, %v2014
    %v2016 = vpop.f32.mrb[0].mxu0
    %2017 = vmatprep.mubr.f32.mxu0 0.0
    %2018 = vmatmul.mubr.f32.gmra.mrb[0].mxu0 %v1739
    %v2019 = vpop.f32.mrb[0].mxu0
    %v2020 = vadd.f32 %v1801, %v2019
    %v2021 = vpop.f32.mrb[0].mxu0
    %2022 = vdwg.mxu0
    %v2023 = vld [vmem:[#allocation8] sm:$0xff]
    %v2024 = vld [vmem:[#allocation8 + $0x8] sm:$0xff]
    %v2025 = vld [vmem:[#allocation8 + $0x10] sm:$0xff]
    %v2026 = vld [vmem:[#allocation8 + $0x18] sm:$0xff]
    %v2027 = vld [vmem:[#allocation8 + $0x20] sm:$0xff]
    %v2028 = vld [vmem:[#allocation8 + $0x28] sm:$0xff]
    %v2029 = vld [vmem:[#allocation8 + $0x30] sm:$0xff]
    %v2030 = vld [vmem:[#allocation8 + $0x38] sm:$0xff]
    %v2031 = vld [vmem:[#allocation8 + $0x40] sm:$0xff]
    %v2032 = vld [vmem:[#allocation8 + $0x48] sm:$0xff]
    %v2033 = vld [vmem:[#allocation8 + $0x50] sm:$0xff]
    %v2034 = vld [vmem:[#allocation8 + $0x58] sm:$0xff]
    %v2035 = vld [vmem:[#allocation8 + $0x60] sm:$0xff]
    %v2036 = vld [vmem:[#allocation8 + $0x68] sm:$0xff]
    %v2037 = vld [vmem:[#allocation8 + $0x70] sm:$0xff]
    %v2038 = vld [vmem:[#allocation8 + $0x78] sm:$0xff]
    %v2039 = vld [vmem:[#allocation8 + $0x80] sm:$0xff]
    %v2040 = vld [vmem:[#allocation8 + $0x88] sm:$0xff]
    %v2041 = vld [vmem:[#allocation8 + $0x90] sm:$0xff]
    %v2042 = vld [vmem:[#allocation8 + $0x98] sm:$0xff]
    %v2043 = vld [vmem:[#allocation8 + $0xa0] sm:$0xff]
    %v2044 = vld [vmem:[#allocation8 + $0xa8] sm:$0xff]
    %v2045 = vld [vmem:[#allocation8 + $0xb0] sm:$0xff]
    %v2046 = vld [vmem:[#allocation8 + $0xb8] sm:$0xff]
    %v2047 = vld [vmem:[#allocation8 + $0xc0] sm:$0xff]
    %v2048 = vld [vmem:[#allocation8 + $0xc8] sm:$0xff]
    %v2049 = vld [vmem:[#allocation8 + $0xd0] sm:$0xff]
    %v2050 = vld [vmem:[#allocation8 + $0xd8] sm:$0xff]
    %v2051 = vld [vmem:[#allocation8 + $0xe0] sm:$0xff]
    %v2052 = vld [vmem:[#allocation8 + $0xe8] sm:$0xff]
    %v2053 = vld [vmem:[#allocation8 + $0xf0] sm:$0xff]
    %v2054 = vld [vmem:[#allocation8 + $0xf8] sm:$0xff]
    %v2055 = vld [vmem:[#allocation8 + $0x100] sm:$0xff]
    %v2056 = vld [vmem:[#allocation8 + $0x108] sm:$0xff]
    %v2057 = vld [vmem:[#allocation8 + $0x110] sm:$0xff]
    %v2058 = vld [vmem:[#allocation8 + $0x118] sm:$0xff]
    %v2059 = vld [vmem:[#allocation8 + $0x120] sm:$0xff]
    %v2060 = vld [vmem:[#allocation8 + $0x128] sm:$0xff]
    %v2061 = vld [vmem:[#allocation8 + $0x130] sm:$0xff]
    %v2062 = vld [vmem:[#allocation8 + $0x138] sm:$0xff]
    %v2063 = vld [vmem:[#allocation8 + $0x140] sm:$0xff]
    %v2064 = vld [vmem:[#allocation8 + $0x148] sm:$0xff]
    %v2065 = vld [vmem:[#allocation8 + $0x150] sm:$0xff]
    %v2066 = vld [vmem:[#allocation8 + $0x158] sm:$0xff]
    %v2067 = vld [vmem:[#allocation8 + $0x160] sm:$0xff]
    %v2068 = vld [vmem:[#allocation8 + $0x168] sm:$0xff]
    %v2069 = vld [vmem:[#allocation8 + $0x170] sm:$0xff]
    %v2070 = vld [vmem:[#allocation8 + $0x178] sm:$0xff]
    %v2071 = vld [vmem:[%s8] sm:$0x1]
    %v2073 = vlaneseq
    %v2074 = vshrl.u32 %v2073, 7
    %v2075 = vsub.s32 0, %v2074
    %v2076 = vrot.slane %v2071, %v2075
    %2078 = vmatprep.subr.mxu0 %v2024
    %2079 = vmatpush1.msra.mxu0 %v2023
    %2080 = vmatprep.subr.mxu0 %v2027
    %2081 = vmatpush1.msra.mxu0 %v2026
    %2082 = vmatprep.subr.mxu0 %v2030
    %2083 = vmatpush1.msra.mxu0 %v2029
    %2084 = vmatprep.subr.mxu0 %v2033
    %2085 = vmatpush1.msra.mxu0 %v2032
    %2086 = vmatprep.subr.mxu0 %v2036
    %2087 = vmatpush1.msra.mxu0 %v2035
    %2088 = vmatprep.subr.mxu0 %v2039
    %2089 = vmatpush1.msra.mxu0 %v2038
    %2090 = vmatprep.subr.mxu0 %v2042
    %2091 = vmatpush1.msra.mxu0 %v2041
    %2092 = vmatprep.subr.mxu0 %v2045
    %2093 = vmatpush1.msra.mxu0 %v2044
    %2094 = vmatprep.subr.mxu0 %v2048
    %2095 = vmatpush1.msra.mxu0 %v2047
    %2096 = vmatprep.subr.mxu0 %v2051
    %2097 = vmatpush1.msra.mxu0 %v2050
    %2098 = vmatprep.subr.mxu0 %v2054
    %2099 = vmatpush1.msra.mxu0 %v2053
    %2100 = vmatprep.subr.mxu0 %v2057
    %2101 = vmatpush1.msra.mxu0 %v2056
    %2102 = vmatprep.subr.mxu0 %v2060
    %2103 = vmatpush1.msra.mxu0 %v2059
    %2104 = vmatprep.subr.mxu0 %v2063
    %2105 = vmatpush1.msra.mxu0 %v2062
    %2106 = vmatprep.subr.mxu0 %v2066
    %2107 = vmatpush1.msra.mxu0 %v2065
    %2108 = vmatprep.subr.mxu0 %v2069
    %2109 = vmatpush1.msra.mxu0 %v2068
    %2110 = vmatprep.subr.mxu0 0.0
    %2111 = vmatpush1.msra.mxu0 0.0
    %2112 = vmatprep.subr.mxu0 0.0
    %2113 = vmatpush1.msra.mxu0 0.0
    %2114 = vmatprep.subr.mxu0 0.0
    %2115 = vmatpush1.msra.mxu0 0.0
    %2116 = vmatprep.subr.mxu0 0.0
    %2117 = vmatpush1.msra.mxu0 0.0
    %2118 = vmatprep.subr.mxu0 0.0
    %2119 = vmatpush1.msra.mxu0 0.0
    %2120 = vmatprep.subr.mxu0 0.0
    %2121 = vmatpush1.msra.mxu0 0.0
    %2122 = vmatprep.subr.mxu0 0.0
    %2123 = vmatpush1.msra.mxu0 0.0
    %2124 = vmatprep.subr.mxu0 0.0
    %2125 = vmatpush1.msra.mxu0 0.0
    %2126 = vmatprep.subr.mxu0 0.0
    %2127 = vmatpush1.msra.mxu0 0.0
    %2128 = vmatprep.subr.mxu0 0.0
    %2129 = vmatpush1.msra.mxu0 0.0
    %2130 = vmatprep.subr.mxu0 0.0
    %2131 = vmatpush1.msra.mxu0 0.0
    %2132 = vmatprep.subr.mxu0 0.0
    %2133 = vmatpush1.msra.mxu0 0.0
    %2134 = vmatprep.subr.mxu0 0.0
    %2135 = vmatpush1.msra.mxu0 0.0
    %2136 = vmatprep.subr.mxu0 0.0
    %2137 = vmatpush1.msra.mxu0 0.0
    %2138 = vmatprep.subr.mxu0 0.0
    %2139 = vmatpush1.msra.mxu0 0.0
    %2140 = vmatprep.subr.mxu0 0.0
    %2141 = vmatpush1.msra.mxu0 0.0
    %2142 = vmatprep.mubr.f32.mxu0 0.0
    %2143 = vmatmul.mubr.f32.gmra.mrb[0].mxu0 0.0
    %v2144 = vpop.f32.mrb[0].mxu0
    %v2145 = vadd.f32 0.0, %v2144
    %v2146 = vpop.f32.mrb[0].mxu0
    %v2147 = vadd.f32 0.0, %v2146
    %2148 = vdwg.mxu0
    %2149 = vmatprep.subr.mxu0 0.0
    %2150 = vmatpush1.msra.mxu0 %v2025
    %2151 = vmatprep.subr.mxu0 0.0
    %2152 = vmatpush1.msra.mxu0 %v2028
    %2153 = vmatprep.subr.mxu0 0.0
    %2154 = vmatpush1.msra.mxu0 %v2031
    %2155 = vmatprep.subr.mxu0 0.0
    %2156 = vmatpush1.msra.mxu0 %v2034
    %2157 = vmatprep.subr.mxu0 0.0
    %2158 = vmatpush1.msra.mxu0 %v2037
    %2159 = vmatprep.subr.mxu0 0.0
    %2160 = vmatpush1.msra.mxu0 %v2040
    %2161 = vmatprep.subr.mxu0 0.0
    %2162 = vmatpush1.msra.mxu0 %v2043
    %2163 = vmatprep.subr.mxu0 0.0
    %2164 = vmatpush1.msra.mxu0 %v2046
    %2165 = vmatprep.subr.mxu0 0.0
    %2166 = vmatpush1.msra.mxu0 %v2049
    %2167 = vmatprep.subr.mxu0 0.0
    %2168 = vmatpush1.msra.mxu0 %v2052
    %2169 = vmatprep.subr.mxu0 0.0
    %2170 = vmatpush1.msra.mxu0 %v2055
    %2171 = vmatprep.subr.mxu0 0.0
    %2172 = vmatpush1.msra.mxu0 %v2058
    %2173 = vmatprep.subr.mxu0 0.0
    %2174 = vmatpush1.msra.mxu0 %v2061
    %2175 = vmatprep.subr.mxu0 0.0
    %2176 = vmatpush1.msra.mxu0 %v2064
    %2177 = vmatprep.subr.mxu0 0.0
    %2178 = vmatpush1.msra.mxu0 %v2067
    %2179 = vmatprep.subr.mxu0 0.0
    %2180 = vmatpush1.msra.mxu0 %v2070
    %2181 = vmatprep.subr.mxu0 0.0
    %2182 = vmatpush1.msra.mxu0 0.0
    %2183 = vmatprep.subr.mxu0 0.0
    %2184 = vmatpush1.msra.mxu0 0.0
    %2185 = vmatprep.subr.mxu0 0.0
    %2186 = vmatpush1.msra.mxu0 0.0
    %2187 = vmatprep.subr.mxu0 0.0
    %2188 = vmatpush1.msra.mxu0 0.0
    %2189 = vmatprep.subr.mxu0 0.0
    %2190 = vmatpush1.msra.mxu0 0.0
    %2191 = vmatprep.subr.mxu0 0.0
    %2192 = vmatpush1.msra.mxu0 0.0
    %2193 = vmatprep.subr.mxu0 0.0
    %2194 = vmatpush1.msra.mxu0 0.0
    %2195 = vmatprep.subr.mxu0 0.0
    %2196 = vmatpush1.msra.mxu0 0.0
    %2197 = vmatprep.subr.mxu0 0.0
    %2198 = vmatpush1.msra.mxu0 0.0
    %2199 = vmatprep.subr.mxu0 0.0
    %2200 = vmatpush1.msra.mxu0 0.0
    %2201 = vmatprep.subr.mxu0 0.0
    %2202 = vmatpush1.msra.mxu0 0.0
    %2203 = vmatprep.subr.mxu0 0.0
    %2204 = vmatpush1.msra.mxu0 0.0
    %2205 = vmatprep.subr.mxu0 0.0
    %2206 = vmatpush1.msra.mxu0 0.0
    %2207 = vmatprep.subr.mxu0 0.0
    %2208 = vmatpush1.msra.mxu0 0.0
    %2209 = vmatprep.subr.mxu0 0.0
    %2210 = vmatpush1.msra.mxu0 0.0
    %2211 = vmatprep.subr.mxu0 0.0
    %2212 = vmatpush1.msra.mxu0 0.0
    %2213 = vmatprep.mubr.f32.mxu0 0.0
    %2214 = vmatmul.mubr.f32.gmra.mrb[0].mxu0 0.0
    %v2215 = vpop.f32.mrb[0].mxu0
    %v2216 = vadd.f32 0.0, %v2215
    %v2217 = vpop.f32.mrb[0].mxu0
    %2218 = vdwg.mxu0
    %v2219 = vadd.f32 %v1872, %v2145
    %v2220 = vadd.f32 %v1874, %v2147
    %v2221 = vxor.u32 %v2219, 2147483648
    %v2222 = vxor.u32 %v2220, 2147483648
    %v2223 = vmul.f32 %v2221, 1.442695
    %v2224 = vpow.pop %v2223
    %v2225 = vmul.f32 %v2222, 1.442695
    %v2226 = vpow.pop %v2225
    %v2227 = vadd.f32 %v2224, 1.0
    %v2228 = vadd.f32 %v2226, 1.0
    %v2229 = vrcp.pop %v2227
    %v2230 = vmul.f32 1.0, %v2229
    %v2231 = vrcp.pop %v2228
    %v2232 = vmul.f32 1.0, %v2231
    %v2233 = vadd.f32 %v2216, %v2076
    %v2234 = vmul.f32 %v2230, %v2233
    %v2235 = vadd.f32 %v1985, %v2234
    %v2236 = vtanh.pop %v2235
    %v2237 = vsub.f32 0.0, %v2236
    %v2238 = vmul.f32 %v2232, %v2237
    %v2239 = vadd.f32 %v2236, %v2238
    %2240 = vst [vmem:[#allocation3] sm:$0xff] %v2239
    %2241 = vmatprep.subr.mxu0 %v2024
    %2242 = vmatpush1.msra.mxu0 %v2023
    %2243 = vmatprep.subr.mxu0 %v2027
    %2244 = vmatpush1.msra.mxu0 %v2026
    %2245 = vmatprep.subr.mxu0 %v2030
    %2246 = vmatpush1.msra.mxu0 %v2029
    %2247 = vmatprep.subr.mxu0 %v2033
    %2248 = vmatpush1.msra.mxu0 %v2032
    %2249 = vmatprep.subr.mxu0 %v2036
    %2250 = vmatpush1.msra.mxu0 %v2035
    %2251 = vmatprep.subr.mxu0 %v2039
    %2252 = vmatpush1.msra.mxu0 %v2038
    %2253 = vmatprep.subr.mxu0 %v2042
    %2254 = vmatpush1.msra.mxu0 %v2041
    %2255 = vmatprep.subr.mxu0 %v2045
    %2256 = vmatpush1.msra.mxu0 %v2044
    %2257 = vmatprep.subr.mxu0 %v2048
    %2258 = vmatpush1.msra.mxu0 %v2047
    %2259 = vmatprep.subr.mxu0 %v2051
    %2260 = vmatpush1.msra.mxu0 %v2050
    %2261 = vmatprep.subr.mxu0 %v2054
    %2262 = vmatpush1.msra.mxu0 %v2053
    %2263 = vmatprep.subr.mxu0 %v2057
    %2264 = vmatpush1.msra.mxu0 %v2056
    %2265 = vmatprep.subr.mxu0 %v2060
    %2266 = vmatpush1.msra.mxu0 %v2059
    %2267 = vmatprep.subr.mxu0 %v2063
    %2268 = vmatpush1.msra.mxu0 %v2062
    %2269 = vmatprep.subr.mxu0 %v2066
    %2270 = vmatpush1.msra.mxu0 %v2065
    %2271 = vmatprep.subr.mxu0 %v2069
    %2272 = vmatpush1.msra.mxu0 %v2068
    %2273 = vmatprep.subr.mxu0 0.0
    %2274 = vmatpush1.msra.mxu0 0.0
    %2275 = vmatprep.subr.mxu0 0.0
    %2276 = vmatpush1.msra.mxu0 0.0
    %2277 = vmatprep.subr.mxu0 0.0
    %2278 = vmatpush1.msra.mxu0 0.0
    %2279 = vmatprep.subr.mxu0 0.0
    %2280 = vmatpush1.msra.mxu0 0.0
    %2281 = vmatprep.subr.mxu0 0.0
    %2282 = vmatpush1.msra.mxu0 0.0
    %2283 = vmatprep.subr.mxu0 0.0
    %2284 = vmatpush1.msra.mxu0 0.0
    %2285 = vmatprep.subr.mxu0 0.0
    %2286 = vmatpush1.msra.mxu0 0.0
    %2287 = vmatprep.subr.mxu0 0.0
    %2288 = vmatpush1.msra.mxu0 0.0
    %2289 = vmatprep.subr.mxu0 0.0
    %2290 = vmatpush1.msra.mxu0 0.0
    %2291 = vmatprep.subr.mxu0 0.0
    %2292 = vmatpush1.msra.mxu0 0.0
    %2293 = vmatprep.subr.mxu0 0.0
    %2294 = vmatpush1.msra.mxu0 0.0
    %2295 = vmatprep.subr.mxu0 0.0
    %2296 = vmatpush1.msra.mxu0 0.0
    %2297 = vmatprep.subr.mxu0 0.0
    %2298 = vmatpush1.msra.mxu0 0.0
    %2299 = vmatprep.subr.mxu0 0.0
    %2300 = vmatpush1.msra.mxu0 0.0
    %2301 = vmatprep.subr.mxu0 0.0
    %2302 = vmatpush1.msra.mxu0 0.0
    %2303 = vmatprep.subr.mxu0 0.0
    %2304 = vmatpush1.msra.mxu0 0.0
    %2305 = vmatprep.mubr.f32.mxu0 0.0
    %2306 = vmatmul.mubr.f32.gmra.mrb[0].mxu0 %v2239
    %v2307 = vpop.f32.mrb[0].mxu0
    %v2308 = vadd.f32 0.0, %v2307
    %v2309 = vpop.f32.mrb[0].mxu0
    %v2310 = vadd.f32 0.0, %v2309
    %2311 = vdwg.mxu0
    %2312 = vmatprep.subr.mxu0 0.0
    %2313 = vmatpush1.msra.mxu0 %v2025
    %2314 = vmatprep.subr.mxu0 0.0
    %2315 = vmatpush1.msra.mxu0 %v2028
    %2316 = vmatprep.subr.mxu0 0.0
    %2317 = vmatpush1.msra.mxu0 %v2031
    %2318 = vmatprep.subr.mxu0 0.0
    %2319 = vmatpush1.msra.mxu0 %v2034
    %2320 = vmatprep.subr.mxu0 0.0
    %2321 = vmatpush1.msra.mxu0 %v2037
    %2322 = vmatprep.subr.mxu0 0.0
    %2323 = vmatpush1.msra.mxu0 %v2040
    %2324 = vmatprep.subr.mxu0 0.0
    %2325 = vmatpush1.msra.mxu0 %v2043
    %2326 = vmatprep.subr.mxu0 0.0
    %2327 = vmatpush1.msra.mxu0 %v2046
    %2328 = vmatprep.subr.mxu0 0.0
    %2329 = vmatpush1.msra.mxu0 %v2049
    %2330 = vmatprep.subr.mxu0 0.0
    %2331 = vmatpush1.msra.mxu0 %v2052
    %2332 = vmatprep.subr.mxu0 0.0
    %2333 = vmatpush1.msra.mxu0 %v2055
    %2334 = vmatprep.subr.mxu0 0.0
    %2335 = vmatpush1.msra.mxu0 %v2058
    %2336 = vmatprep.subr.mxu0 0.0
    %2337 = vmatpush1.msra.mxu0 %v2061
    %2338 = vmatprep.subr.mxu0 0.0
    %2339 = vmatpush1.msra.mxu0 %v2064
    %2340 = vmatprep.subr.mxu0 0.0
    %2341 = vmatpush1.msra.mxu0 %v2067
    %2342 = vmatprep.subr.mxu0 0.0
    %2343 = vmatpush1.msra.mxu0 %v2070
    %2344 = vmatprep.subr.mxu0 0.0
    %2345 = vmatpush1.msra.mxu0 0.0
    %2346 = vmatprep.subr.mxu0 0.0
    %2347 = vmatpush1.msra.mxu0 0.0
    %2348 = vmatprep.subr.mxu0 0.0
    %2349 = vmatpush1.msra.mxu0 0.0
    %2350 = vmatprep.subr.mxu0 0.0
    %2351 = vmatpush1.msra.mxu0 0.0
    %2352 = vmatprep.subr.mxu0 0.0
    %2353 = vmatpush1.msra.mxu0 0.0
    %2354 = vmatprep.subr.mxu0 0.0
    %2355 = vmatpush1.msra.mxu0 0.0
    %2356 = vmatprep.subr.mxu0 0.0
    %2357 = vmatpush1.msra.mxu0 0.0
    %2358 = vmatprep.subr.mxu0 0.0
    %2359 = vmatpush1.msra.mxu0 0.0
    %2360 = vmatprep.subr.mxu0 0.0
    %2361 = vmatpush1.msra.mxu0 0.0
    %2362 = vmatprep.subr.mxu0 0.0
    %2363 = vmatpush1.msra.mxu0 0.0
    %2364 = vmatprep.subr.mxu0 0.0
    %2365 = vmatpush1.msra.mxu0 0.0
    %2366 = vmatprep.subr.mxu0 0.0
    %2367 = vmatpush1.msra.mxu0 0.0
    %2368 = vmatprep.subr.mxu0 0.0
    %2369 = vmatpush1.msra.mxu0 0.0
    %2370 = vmatprep.subr.mxu0 0.0
    %2371 = vmatpush1.msra.mxu0 0.0
    %2372 = vmatprep.subr.mxu0 0.0
    %2373 = vmatpush1.msra.mxu0 0.0
    %2374 = vmatprep.subr.mxu0 0.0
    %2375 = vmatpush1.msra.mxu0 0.0
    %2376 = vmatprep.mubr.f32.mxu0 0.0
    %2377 = vmatmul.mubr.f32.gmra.mrb[0].mxu0 %v2239
    %v2378 = vpop.f32.mrb[0].mxu0
    %v2379 = vadd.f32 0.0, %v2378
    %v2380 = vpop.f32.mrb[0].mxu0
    %2381 = vdwg.mxu0
    %v2382 = vadd.f32 %v1878, %v2308
    %v2383 = vadd.f32 %v1880, %v2310
    %v2384 = vxor.u32 %v2382, 2147483648
    %v2385 = vxor.u32 %v2383, 2147483648
    %v2386 = vmul.f32 %v2384, 1.442695
    %v2387 = vpow.pop %v2386
    %v2388 = vmul.f32 %v2385, 1.442695
    %v2389 = vpow.pop %v2388
    %v2390 = vadd.f32 %v2387, 1.0
    %v2391 = vadd.f32 %v2389, 1.0
    %v2392 = vrcp.pop %v2390
    %v2393 = vmul.f32 1.0, %v2392
    %v2394 = vrcp.pop %v2391
    %v2395 = vmul.f32 1.0, %v2394
    %v2396 = vadd.f32 %v2379, %v2076
    %v2397 = vmul.f32 %v2393, %v2396
    %v2398 = vadd.f32 %v1990, %v2397
    %v2399 = vtanh.pop %v2398
    %v2400 = vsub.f32 %v2239, %v2399
    %v2401 = vmul.f32 %v2395, %v2400
    %v2402 = vadd.f32 %v2399, %v2401
    %2403 = vst [vmem:[#allocation3 + $0x8] sm:$0xff] %v2402
    %2404 = vmatprep.subr.mxu0 %v2024
    %2405 = vmatpush1.msra.mxu0 %v2023
    %2406 = vmatprep.subr.mxu0 %v2027
    %2407 = vmatpush1.msra.mxu0 %v2026
    %2408 = vmatprep.subr.mxu0 %v2030
    %2409 = vmatpush1.msra.mxu0 %v2029
    %2410 = vmatprep.subr.mxu0 %v2033
    %2411 = vmatpush1.msra.mxu0 %v2032
    %2412 = vmatprep.subr.mxu0 %v2036
    %2413 = vmatpush1.msra.mxu0 %v2035
    %2414 = vmatprep.subr.mxu0 %v2039
    %2415 = vmatpush1.msra.mxu0 %v2038
    %2416 = vmatprep.subr.mxu0 %v2042
    %2417 = vmatpush1.msra.mxu0 %v2041
    %2418 = vmatprep.subr.mxu0 %v2045
    %2419 = vmatpush1.msra.mxu0 %v2044
    %2420 = vmatprep.subr.mxu0 %v2048
    %2421 = vmatpush1.msra.mxu0 %v2047
    %2422 = vmatprep.subr.mxu0 %v2051
    %2423 = vmatpush1.msra.mxu0 %v2050
    %2424 = vmatprep.subr.mxu0 %v2054
    %2425 = vmatpush1.msra.mxu0 %v2053
    %2426 = vmatprep.subr.mxu0 %v2057
    %2427 = vmatpush1.msra.mxu0 %v2056
    %2428 = vmatprep.subr.mxu0 %v2060
    %2429 = vmatpush1.msra.mxu0 %v2059
    %2430 = vmatprep.subr.mxu0 %v2063
    %2431 = vmatpush1.msra.mxu0 %v2062
    %2432 = vmatprep.subr.mxu0 %v2066
    %2433 = vmatpush1.msra.mxu0 %v2065
    %2434 = vmatprep.subr.mxu0 %v2069
    %2435 = vmatpush1.msra.mxu0 %v2068
    %2436 = vmatprep.subr.mxu0 0.0
    %2437 = vmatpush1.msra.mxu0 0.0
    %2438 = vmatprep.subr.mxu0 0.0
    %2439 = vmatpush1.msra.mxu0 0.0
    %2440 = vmatprep.subr.mxu0 0.0
    %2441 = vmatpush1.msra.mxu0 0.0
    %2442 = vmatprep.subr.mxu0 0.0
    %2443 = vmatpush1.msra.mxu0 0.0
    %2444 = vmatprep.subr.mxu0 0.0
    %2445 = vmatpush1.msra.mxu0 0.0
    %2446 = vmatprep.subr.mxu0 0.0
    %2447 = vmatpush1.msra.mxu0 0.0
    %2448 = vmatprep.subr.mxu0 0.0
    %2449 = vmatpush1.msra.mxu0 0.0
    %2450 = vmatprep.subr.mxu0 0.0
    %2451 = vmatpush1.msra.mxu0 0.0
    %2452 = vmatprep.subr.mxu0 0.0
    %2453 = vmatpush1.msra.mxu0 0.0
    %2454 = vmatprep.subr.mxu0 0.0
    %2455 = vmatpush1.msra.mxu0 0.0
    %2456 = vmatprep.subr.mxu0 0.0
    %2457 = vmatpush1.msra.mxu0 0.0
    %2458 = vmatprep.subr.mxu0 0.0
    %2459 = vmatpush1.msra.mxu0 0.0
    %2460 = vmatprep.subr.mxu0 0.0
    %2461 = vmatpush1.msra.mxu0 0.0
    %2462 = vmatprep.subr.mxu0 0.0
    %2463 = vmatpush1.msra.mxu0 0.0
    %2464 = vmatprep.subr.mxu0 0.0
    %2465 = vmatpush1.msra.mxu0 0.0
    %2466 = vmatprep.subr.mxu0 0.0
    %2467 = vmatpush1.msra.mxu0 0.0
    %2468 = vmatprep.mubr.f32.mxu0 0.0
    %2469 = vmatmul.mubr.f32.gmra.mrb[0].mxu0 %v2402
    %v2470 = vpop.f32.mrb[0].mxu0
    %v2471 = vadd.f32 0.0, %v2470
    %v2472 = vpop.f32.mrb[0].mxu0
    %v2473 = vadd.f32 0.0, %v2472
    %2474 = vdwg.mxu0
    %2475 = vmatprep.subr.mxu0 0.0
    %2476 = vmatpush1.msra.mxu0 %v2025
    %2477 = vmatprep.subr.mxu0 0.0
    %2478 = vmatpush1.msra.mxu0 %v2028
    %2479 = vmatprep.subr.mxu0 0.0
    %2480 = vmatpush1.msra.mxu0 %v2031
    %2481 = vmatprep.subr.mxu0 0.0
    %2482 = vmatpush1.msra.mxu0 %v2034
    %2483 = vmatprep.subr.mxu0 0.0
    %2484 = vmatpush1.msra.mxu0 %v2037
    %2485 = vmatprep.subr.mxu0 0.0
    %2486 = vmatpush1.msra.mxu0 %v2040
    %2487 = vmatprep.subr.mxu0 0.0
    %2488 = vmatpush1.msra.mxu0 %v2043
    %2489 = vmatprep.subr.mxu0 0.0
    %2490 = vmatpush1.msra.mxu0 %v2046
    %2491 = vmatprep.subr.mxu0 0.0
    %2492 = vmatpush1.msra.mxu0 %v2049
    %2493 = vmatprep.subr.mxu0 0.0
    %2494 = vmatpush1.msra.mxu0 %v2052
    %2495 = vmatprep.subr.mxu0 0.0
    %2496 = vmatpush1.msra.mxu0 %v2055
    %2497 = vmatprep.subr.mxu0 0.0
    %2498 = vmatpush1.msra.mxu0 %v2058
    %2499 = vmatprep.subr.mxu0 0.0
    %2500 = vmatpush1.msra.mxu0 %v2061
    %2501 = vmatprep.subr.mxu0 0.0
    %2502 = vmatpush1.msra.mxu0 %v2064
    %2503 = vmatprep.subr.mxu0 0.0
    %2504 = vmatpush1.msra.mxu0 %v2067
    %2505 = vmatprep.subr.mxu0 0.0
    %2506 = vmatpush1.msra.mxu0 %v2070
    %2507 = vmatprep.subr.mxu0 0.0
    %2508 = vmatpush1.msra.mxu0 0.0
    %2509 = vmatprep.subr.mxu0 0.0
    %2510 = vmatpush1.msra.mxu0 0.0
    %2511 = vmatprep.subr.mxu0 0.0
    %2512 = vmatpush1.msra.mxu0 0.0
    %2513 = vmatprep.subr.mxu0 0.0
    %2514 = vmatpush1.msra.mxu0 0.0
    %2515 = vmatprep.subr.mxu0 0.0
    %2516 = vmatpush1.msra.mxu0 0.0
    %2517 = vmatprep.subr.mxu0 0.0
    %2518 = vmatpush1.msra.mxu0 0.0
    %2519 = vmatprep.subr.mxu0 0.0
    %2520 = vmatpush1.msra.mxu0 0.0
    %2521 = vmatprep.subr.mxu0 0.0
    %2522 = vmatpush1.msra.mxu0 0.0
    %2523 = vmatprep.subr.mxu0 0.0
    %2524 = vmatpush1.msra.mxu0 0.0
    %2525 = vmatprep.subr.mxu0 0.0
    %2526 = vmatpush1.msra.mxu0 0.0
    %2527 = vmatprep.subr.mxu0 0.0
    %2528 = vmatpush1.msra.mxu0 0.0
    %2529 = vmatprep.subr.mxu0 0.0
    %2530 = vmatpush1.msra.mxu0 0.0
    %2531 = vmatprep.subr.mxu0 0.0
    %2532 = vmatpush1.msra.mxu0 0.0
    %2533 = vmatprep.subr.mxu0 0.0
    %2534 = vmatpush1.msra.mxu0 0.0
    %2535 = vmatprep.subr.mxu0 0.0
    %2536 = vmatpush1.msra.mxu0 0.0
    %2537 = vmatprep.subr.mxu0 0.0
    %2538 = vmatpush1.msra.mxu0 0.0
    %2539 = vmatprep.mubr.f32.mxu0 0.0
    %2540 = vmatmul.mubr.f32.gmra.mrb[0].mxu0 %v2402
    %v2541 = vpop.f32.mrb[0].mxu0
    %v2542 = vadd.f32 0.0, %v2541
    %v2543 = vpop.f32.mrb[0].mxu0
    %2544 = vdwg.mxu0
    %v2545 = vadd.f32 %v1884, %v2471
    %v2546 = vadd.f32 %v1886, %v2473
    %v2547 = vxor.u32 %v2545, 2147483648
    %v2548 = vxor.u32 %v2546, 2147483648
    %v2549 = vmul.f32 %v2547, 1.442695
    %v2550 = vpow.pop %v2549
    %v2551 = vmul.f32 %v2548, 1.442695
    %v2552 = vpow.pop %v2551
    %v2553 = vadd.f32 %v2550, 1.0
    %v2554 = vadd.f32 %v2552, 1.0
    %v2555 = vrcp.pop %v2553
    %v2556 = vmul.f32 1.0, %v2555
    %v2557 = vrcp.pop %v2554
    %v2558 = vmul.f32 1.0, %v2557
    %v2559 = vadd.f32 %v2542, %v2076
    %v2560 = vmul.f32 %v2556, %v2559
    %v2561 = vadd.f32 %v1995, %v2560
    %v2562 = vtanh.pop %v2561
    %v2563 = vsub.f32 %v2402, %v2562
    %v2564 = vmul.f32 %v2558, %v2563
    %v2565 = vadd.f32 %v2562, %v2564
    %2566 = vst [vmem:[#allocation3 + $0x10] sm:$0xff] %v2565
    %2567 = vmatprep.subr.mxu0 %v2024
    %2568 = vmatpush1.msra.mxu0 %v2023
    %2569 = vmatprep.subr.mxu0 %v2027
    %2570 = vmatpush1.msra.mxu0 %v2026
    %2571 = vmatprep.subr.mxu0 %v2030
    %2572 = vmatpush1.msra.mxu0 %v2029
    %2573 = vmatprep.subr.mxu0 %v2033
    %2574 = vmatpush1.msra.mxu0 %v2032
    %2575 = vmatprep.subr.mxu0 %v2036
    %2576 = vmatpush1.msra.mxu0 %v2035
    %2577 = vmatprep.subr.mxu0 %v2039
    %2578 = vmatpush1.msra.mxu0 %v2038
    %2579 = vmatprep.subr.mxu0 %v2042
    %2580 = vmatpush1.msra.mxu0 %v2041
    %2581 = vmatprep.subr.mxu0 %v2045
    %2582 = vmatpush1.msra.mxu0 %v2044
    %2583 = vmatprep.subr.mxu0 %v2048
    %2584 = vmatpush1.msra.mxu0 %v2047
    %2585 = vmatprep.subr.mxu0 %v2051
    %2586 = vmatpush1.msra.mxu0 %v2050
    %2587 = vmatprep.subr.mxu0 %v2054
    %2588 = vmatpush1.msra.mxu0 %v2053
    %2589 = vmatprep.subr.mxu0 %v2057
    %2590 = vmatpush1.msra.mxu0 %v2056
    %2591 = vmatprep.subr.mxu0 %v2060
    %2592 = vmatpush1.msra.mxu0 %v2059
    %2593 = vmatprep.subr.mxu0 %v2063
    %2594 = vmatpush1.msra.mxu0 %v2062
    %2595 = vmatprep.subr.mxu0 %v2066
    %2596 = vmatpush1.msra.mxu0 %v2065
    %2597 = vmatprep.subr.mxu0 %v2069
    %2598 = vmatpush1.msra.mxu0 %v2068
    %2599 = vmatprep.subr.mxu0 0.0
    %2600 = vmatpush1.msra.mxu0 0.0
    %2601 = vmatprep.subr.mxu0 0.0
    %2602 = vmatpush1.msra.mxu0 0.0
    %2603 = vmatprep.subr.mxu0 0.0
    %2604 = vmatpush1.msra.mxu0 0.0
    %2605 = vmatprep.subr.mxu0 0.0
    %2606 = vmatpush1.msra.mxu0 0.0
    %2607 = vmatprep.subr.mxu0 0.0
    %2608 = vmatpush1.msra.mxu0 0.0
    %2609 = vmatprep.subr.mxu0 0.0
    %2610 = vmatpush1.msra.mxu0 0.0
    %2611 = vmatprep.subr.mxu0 0.0
    %2612 = vmatpush1.msra.mxu0 0.0
    %2613 = vmatprep.subr.mxu0 0.0
    %2614 = vmatpush1.msra.mxu0 0.0
    %2615 = vmatprep.subr.mxu0 0.0
    %2616 = vmatpush1.msra.mxu0 0.0
    %2617 = vmatprep.subr.mxu0 0.0
    %2618 = vmatpush1.msra.mxu0 0.0
    %2619 = vmatprep.subr.mxu0 0.0
    %2620 = vmatpush1.msra.mxu0 0.0
    %2621 = vmatprep.subr.mxu0 0.0
    %2622 = vmatpush1.msra.mxu0 0.0
    %2623 = vmatprep.subr.mxu0 0.0
    %2624 = vmatpush1.msra.mxu0 0.0
    %2625 = vmatprep.subr.mxu0 0.0
    %2626 = vmatpush1.msra.mxu0 0.0
    %2627 = vmatprep.subr.mxu0 0.0
    %2628 = vmatpush1.msra.mxu0 0.0
    %2629 = vmatprep.subr.mxu0 0.0
    %2630 = vmatpush1.msra.mxu0 0.0
    %2631 = vmatprep.mubr.f32.mxu0 0.0
    %2632 = vmatmul.mubr.f32.gmra.mrb[0].mxu0 %v2565
    %v2633 = vpop.f32.mrb[0].mxu0
    %v2634 = vadd.f32 0.0, %v2633
    %v2635 = vpop.f32.mrb[0].mxu0
    %v2636 = vadd.f32 0.0, %v2635
    %2637 = vdwg.mxu0
    %2638 = vmatprep.subr.mxu0 0.0
    %2639 = vmatpush1.msra.mxu0 %v2025
    %2640 = vmatprep.subr.mxu0 0.0
    %2641 = vmatpush1.msra.mxu0 %v2028
    %2642 = vmatprep.subr.mxu0 0.0
    %2643 = vmatpush1.msra.mxu0 %v2031
    %2644 = vmatprep.subr.mxu0 0.0
    %2645 = vmatpush1.msra.mxu0 %v2034
    %2646 = vmatprep.subr.mxu0 0.0
    %2647 = vmatpush1.msra.mxu0 %v2037
    %2648 = vmatprep.subr.mxu0 0.0
    %2649 = vmatpush1.msra.mxu0 %v2040
    %2650 = vmatprep.subr.mxu0 0.0
    %2651 = vmatpush1.msra.mxu0 %v2043
    %2652 = vmatprep.subr.mxu0 0.0
    %2653 = vmatpush1.msra.mxu0 %v2046
    %2654 = vmatprep.subr.mxu0 0.0
    %2655 = vmatpush1.msra.mxu0 %v2049
    %2656 = vmatprep.subr.mxu0 0.0
    %2657 = vmatpush1.msra.mxu0 %v2052
    %2658 = vmatprep.subr.mxu0 0.0
    %2659 = vmatpush1.msra.mxu0 %v2055
    %2660 = vmatprep.subr.mxu0 0.0
    %2661 = vmatpush1.msra.mxu0 %v2058
    %2662 = vmatprep.subr.mxu0 0.0
    %2663 = vmatpush1.msra.mxu0 %v2061
    %2664 = vmatprep.subr.mxu0 0.0
    %2665 = vmatpush1.msra.mxu0 %v2064
    %2666 = vmatprep.subr.mxu0 0.0
    %2667 = vmatpush1.msra.mxu0 %v2067
    %2668 = vmatprep.subr.mxu0 0.0
    %2669 = vmatpush1.msra.mxu0 %v2070
    %2670 = vmatprep.subr.mxu0 0.0
    %2671 = vmatpush1.msra.mxu0 0.0
    %2672 = vmatprep.subr.mxu0 0.0
    %2673 = vmatpush1.msra.mxu0 0.0
    %2674 = vmatprep.subr.mxu0 0.0
    %2675 = vmatpush1.msra.mxu0 0.0
    %2676 = vmatprep.subr.mxu0 0.0
    %2677 = vmatpush1.msra.mxu0 0.0
    %2678 = vmatprep.subr.mxu0 0.0
    %2679 = vmatpush1.msra.mxu0 0.0
    %2680 = vmatprep.subr.mxu0 0.0
    %2681 = vmatpush1.msra.mxu0 0.0
    %2682 = vmatprep.subr.mxu0 0.0
    %2683 = vmatpush1.msra.mxu0 0.0
    %2684 = vmatprep.subr.mxu0 0.0
    %2685 = vmatpush1.msra.mxu0 0.0
    %2686 = vmatprep.subr.mxu0 0.0
    %2687 = vmatpush1.msra.mxu0 0.0
    %2688 = vmatprep.subr.mxu0 0.0
    %2689 = vmatpush1.msra.mxu0 0.0
    %2690 = vmatprep.subr.mxu0 0.0
    %2691 = vmatpush1.msra.mxu0 0.0
    %2692 = vmatprep.subr.mxu0 0.0
    %2693 = vmatpush1.msra.mxu0 0.0
    %2694 = vmatprep.subr.mxu0 0.0
    %2695 = vmatpush1.msra.mxu0 0.0
    %2696 = vmatprep.subr.mxu0 0.0
    %2697 = vmatpush1.msra.mxu0 0.0
    %2698 = vmatprep.subr.mxu0 0.0
    %2699 = vmatpush1.msra.mxu0 0.0
    %2700 = vmatprep.subr.mxu0 0.0
    %2701 = vmatpush1.msra.mxu0 0.0
    %2702 = vmatprep.mubr.f32.mxu0 0.0
    %2703 = vmatmul.mubr.f32.gmra.mrb[0].mxu0 %v2565
    %v2704 = vpop.f32.mrb[0].mxu0
    %v2705 = vadd.f32 0.0, %v2704
    %v2706 = vpop.f32.mrb[0].mxu0
    %2707 = vdwg.mxu0
    %v2708 = vadd.f32 %v1890, %v2634
    %v2709 = vadd.f32 %v1892, %v2636
    %v2710 = vxor.u32 %v2708, 2147483648
    %v2711 = vxor.u32 %v2709, 2147483648
    %v2712 = vmul.f32 %v2710, 1.442695
    %v2713 = vpow.pop %v2712
    %v2714 = vmul.f32 %v2711, 1.442695
    %v2715 = vpow.pop %v2714
    %v2716 = vadd.f32 %v2713, 1.0
    %v2717 = vadd.f32 %v2715, 1.0
    %v2718 = vrcp.pop %v2716
    %v2719 = vmul.f32 1.0, %v2718
    %v2720 = vrcp.pop %v2717
    %v2721 = vmul.f32 1.0, %v2720
    %v2722 = vadd.f32 %v2705, %v2076
    %v2723 = vmul.f32 %v2719, %v2722
    %v2724 = vadd.f32 %v2000, %v2723
    %v2725 = vtanh.pop %v2724
    %v2726 = vsub.f32 %v2565, %v2725
    %v2727 = vmul.f32 %v2721, %v2726
    %v2728 = vadd.f32 %v2725, %v2727
    %2729 = vst [vmem:[#allocation3 + $0x18] sm:$0xff] %v2728
    %2730 = vmatprep.subr.mxu0 %v2024
    %2731 = vmatpush1.msra.mxu0 %v2023
    %2732 = vmatprep.subr.mxu0 %v2027
    %2733 = vmatpush1.msra.mxu0 %v2026
    %2734 = vmatprep.subr.mxu0 %v2030
    %2735 = vmatpush1.msra.mxu0 %v2029
    %2736 = vmatprep.subr.mxu0 %v2033
    %2737 = vmatpush1.msra.mxu0 %v2032
    %2738 = vmatprep.subr.mxu0 %v2036
    %2739 = vmatpush1.msra.mxu0 %v2035
    %2740 = vmatprep.subr.mxu0 %v2039
    %2741 = vmatpush1.msra.mxu0 %v2038
    %2742 = vmatprep.subr.mxu0 %v2042
    %2743 = vmatpush1.msra.mxu0 %v2041
    %2744 = vmatprep.subr.mxu0 %v2045
    %2745 = vmatpush1.msra.mxu0 %v2044
    %2746 = vmatprep.subr.mxu0 %v2048
    %2747 = vmatpush1.msra.mxu0 %v2047
    %2748 = vmatprep.subr.mxu0 %v2051
    %2749 = vmatpush1.msra.mxu0 %v2050
    %2750 = vmatprep.subr.mxu0 %v2054
    %2751 = vmatpush1.msra.mxu0 %v2053
    %2752 = vmatprep.subr.mxu0 %v2057
    %2753 = vmatpush1.msra.mxu0 %v2056
    %2754 = vmatprep.subr.mxu0 %v2060
    %2755 = vmatpush1.msra.mxu0 %v2059
    %2756 = vmatprep.subr.mxu0 %v2063
    %2757 = vmatpush1.msra.mxu0 %v2062
    %2758 = vmatprep.subr.mxu0 %v2066
    %2759 = vmatpush1.msra.mxu0 %v2065
    %2760 = vmatprep.subr.mxu0 %v2069
    %2761 = vmatpush1.msra.mxu0 %v2068
    %2762 = vmatprep.subr.mxu0 0.0
    %2763 = vmatpush1.msra.mxu0 0.0
    %2764 = vmatprep.subr.mxu0 0.0
    %2765 = vmatpush1.msra.mxu0 0.0
    %2766 = vmatprep.subr.mxu0 0.0
    %2767 = vmatpush1.msra.mxu0 0.0
    %2768 = vmatprep.subr.mxu0 0.0
    %2769 = vmatpush1.msra.mxu0 0.0
    %2770 = vmatprep.subr.mxu0 0.0
    %2771 = vmatpush1.msra.mxu0 0.0
    %2772 = vmatprep.subr.mxu0 0.0
    %2773 = vmatpush1.msra.mxu0 0.0
    %2774 = vmatprep.subr.mxu0 0.0
    %2775 = vmatpush1.msra.mxu0 0.0
    %2776 = vmatprep.subr.mxu0 0.0
    %2777 = vmatpush1.msra.mxu0 0.0
    %2778 = vmatprep.subr.mxu0 0.0
    %2779 = vmatpush1.msra.mxu0 0.0
    %2780 = vmatprep.subr.mxu0 0.0
    %2781 = vmatpush1.msra.mxu0 0.0
    %2782 = vmatprep.subr.mxu0 0.0
    %2783 = vmatpush1.msra.mxu0 0.0
    %2784 = vmatprep.subr.mxu0 0.0
    %2785 = vmatpush1.msra.mxu0 0.0
    %2786 = vmatprep.subr.mxu0 0.0
    %2787 = vmatpush1.msra.mxu0 0.0
    %2788 = vmatprep.subr.mxu0 0.0
    %2789 = vmatpush1.msra.mxu0 0.0
    %2790 = vmatprep.subr.mxu0 0.0
    %2791 = vmatpush1.msra.mxu0 0.0
    %2792 = vmatprep.subr.mxu0 0.0
    %2793 = vmatpush1.msra.mxu0 0.0
    %2794 = vmatprep.mubr.f32.mxu0 0.0
    %2795 = vmatmul.mubr.f32.gmra.mrb[0].mxu0 %v2728
    %v2796 = vpop.f32.mrb[0].mxu0
    %v2797 = vadd.f32 0.0, %v2796
    %v2798 = vpop.f32.mrb[0].mxu0
    %v2799 = vadd.f32 0.0, %v2798
    %2800 = vdwg.mxu0
    %2801 = vmatprep.subr.mxu0 0.0
    %2802 = vmatpush1.msra.mxu0 %v2025
    %2803 = vmatprep.subr.mxu0 0.0
    %2804 = vmatpush1.msra.mxu0 %v2028
    %2805 = vmatprep.subr.mxu0 0.0
    %2806 = vmatpush1.msra.mxu0 %v2031
    %2807 = vmatprep.subr.mxu0 0.0
    %2808 = vmatpush1.msra.mxu0 %v2034
    %2809 = vmatprep.subr.mxu0 0.0
    %2810 = vmatpush1.msra.mxu0 %v2037
    %2811 = vmatprep.subr.mxu0 0.0
    %2812 = vmatpush1.msra.mxu0 %v2040
    %2813 = vmatprep.subr.mxu0 0.0
    %2814 = vmatpush1.msra.mxu0 %v2043
    %2815 = vmatprep.subr.mxu0 0.0
    %2816 = vmatpush1.msra.mxu0 %v2046
    %2817 = vmatprep.subr.mxu0 0.0
    %2818 = vmatpush1.msra.mxu0 %v2049
    %2819 = vmatprep.subr.mxu0 0.0
    %2820 = vmatpush1.msra.mxu0 %v2052
    %2821 = vmatprep.subr.mxu0 0.0
    %2822 = vmatpush1.msra.mxu0 %v2055
    %2823 = vmatprep.subr.mxu0 0.0
    %2824 = vmatpush1.msra.mxu0 %v2058
    %2825 = vmatprep.subr.mxu0 0.0
    %2826 = vmatpush1.msra.mxu0 %v2061
    %2827 = vmatprep.subr.mxu0 0.0
    %2828 = vmatpush1.msra.mxu0 %v2064
    %2829 = vmatprep.subr.mxu0 0.0
    %2830 = vmatpush1.msra.mxu0 %v2067
    %2831 = vmatprep.subr.mxu0 0.0
    %2832 = vmatpush1.msra.mxu0 %v2070
    %2833 = vmatprep.subr.mxu0 0.0
    %2834 = vmatpush1.msra.mxu0 0.0
    %2835 = vmatprep.subr.mxu0 0.0
    %2836 = vmatpush1.msra.mxu0 0.0
    %2837 = vmatprep.subr.mxu0 0.0
    %2838 = vmatpush1.msra.mxu0 0.0
    %2839 = vmatprep.subr.mxu0 0.0
    %2840 = vmatpush1.msra.mxu0 0.0
    %2841 = vmatprep.subr.mxu0 0.0
    %2842 = vmatpush1.msra.mxu0 0.0
    %2843 = vmatprep.subr.mxu0 0.0
    %2844 = vmatpush1.msra.mxu0 0.0
    %2845 = vmatprep.subr.mxu0 0.0
    %2846 = vmatpush1.msra.mxu0 0.0
    %2847 = vmatprep.subr.mxu0 0.0
    %2848 = vmatpush1.msra.mxu0 0.0
    %2849 = vmatprep.subr.mxu0 0.0
    %2850 = vmatpush1.msra.mxu0 0.0
    %2851 = vmatprep.subr.mxu0 0.0
    %2852 = vmatpush1.msra.mxu0 0.0
    %2853 = vmatprep.subr.mxu0 0.0
    %2854 = vmatpush1.msra.mxu0 0.0
    %2855 = vmatprep.subr.mxu0 0.0
    %2856 = vmatpush1.msra.mxu0 0.0
    %2857 = vmatprep.subr.mxu0 0.0
    %2858 = vmatpush1.msra.mxu0 0.0
    %2859 = vmatprep.subr.mxu0 0.0
    %2860 = vmatpush1.msra.mxu0 0.0
    %2861 = vmatprep.subr.mxu0 0.0
    %2862 = vmatpush1.msra.mxu0 0.0
    %2863 = vmatprep.subr.mxu0 0.0
    %2864 = vmatpush1.msra.mxu0 0.0
    %2865 = vmatprep.mubr.f32.mxu0 0.0
    %2866 = vmatmul.mubr.f32.gmra.mrb[0].mxu0 %v2728
    %v2867 = vpop.f32.mrb[0].mxu0
    %v2868 = vadd.f32 0.0, %v2867
    %v2869 = vpop.f32.mrb[0].mxu0
    %2870 = vdwg.mxu0
    %v2871 = vadd.f32 %v1896, %v2797
    %v2872 = vadd.f32 %v1898, %v2799
    %v2873 = vxor.u32 %v2871, 2147483648
    %v2874 = vxor.u32 %v2872, 2147483648
    %v2875 = vmul.f32 %v2873, 1.442695
    %v2876 = vpow.pop %v2875
    %v2877 = vmul.f32 %v2874, 1.442695
    %v2878 = vpow.pop %v2877
    %v2879 = vadd.f32 %v2876, 1.0
    %v2880 = vadd.f32 %v2878, 1.0
    %v2881 = vrcp.pop %v2879
    %v2882 = vmul.f32 1.0, %v2881
    %v2883 = vrcp.pop %v2880
    %v2884 = vmul.f32 1.0, %v2883
    %v2885 = vadd.f32 %v2868, %v2076
    %v2886 = vmul.f32 %v2882, %v2885
    %v2887 = vadd.f32 %v2005, %v2886
    %v2888 = vtanh.pop %v2887
    %v2889 = vsub.f32 %v2728, %v2888
    %v2890 = vmul.f32 %v2884, %v2889
    %v2891 = vadd.f32 %v2888, %v2890
    %2892 = vst [vmem:[#allocation3 + $0x20] sm:$0xff] %v2891
    %2893 = vmatprep.subr.mxu0 %v2024
    %2894 = vmatpush1.msra.mxu0 %v2023
    %2895 = vmatprep.subr.mxu0 %v2027
    %2896 = vmatpush1.msra.mxu0 %v2026
    %2897 = vmatprep.subr.mxu0 %v2030
    %2898 = vmatpush1.msra.mxu0 %v2029
    %2899 = vmatprep.subr.mxu0 %v2033
    %2900 = vmatpush1.msra.mxu0 %v2032
    %2901 = vmatprep.subr.mxu0 %v2036
    %2902 = vmatpush1.msra.mxu0 %v2035
    %2903 = vmatprep.subr.mxu0 %v2039
    %2904 = vmatpush1.msra.mxu0 %v2038
    %2905 = vmatprep.subr.mxu0 %v2042
    %2906 = vmatpush1.msra.mxu0 %v2041
    %2907 = vmatprep.subr.mxu0 %v2045
    %2908 = vmatpush1.msra.mxu0 %v2044
    %2909 = vmatprep.subr.mxu0 %v2048
    %2910 = vmatpush1.msra.mxu0 %v2047
    %2911 = vmatprep.subr.mxu0 %v2051
    %2912 = vmatpush1.msra.mxu0 %v2050
    %2913 = vmatprep.subr.mxu0 %v2054
    %2914 = vmatpush1.msra.mxu0 %v2053
    %2915 = vmatprep.subr.mxu0 %v2057
    %2916 = vmatpush1.msra.mxu0 %v2056
    %2917 = vmatprep.subr.mxu0 %v2060
    %2918 = vmatpush1.msra.mxu0 %v2059
    %2919 = vmatprep.subr.mxu0 %v2063
    %2920 = vmatpush1.msra.mxu0 %v2062
    %2921 = vmatprep.subr.mxu0 %v2066
    %2922 = vmatpush1.msra.mxu0 %v2065
    %2923 = vmatprep.subr.mxu0 %v2069
    %2924 = vmatpush1.msra.mxu0 %v2068
    %2925 = vmatprep.subr.mxu0 0.0
    %2926 = vmatpush1.msra.mxu0 0.0
    %2927 = vmatprep.subr.mxu0 0.0
    %2928 = vmatpush1.msra.mxu0 0.0
    %2929 = vmatprep.subr.mxu0 0.0
    %2930 = vmatpush1.msra.mxu0 0.0
    %2931 = vmatprep.subr.mxu0 0.0
    %2932 = vmatpush1.msra.mxu0 0.0
    %2933 = vmatprep.subr.mxu0 0.0
    %2934 = vmatpush1.msra.mxu0 0.0
    %2935 = vmatprep.subr.mxu0 0.0
    %2936 = vmatpush1.msra.mxu0 0.0
    %2937 = vmatprep.subr.mxu0 0.0
    %2938 = vmatpush1.msra.mxu0 0.0
    %2939 = vmatprep.subr.mxu0 0.0
    %2940 = vmatpush1.msra.mxu0 0.0
    %2941 = vmatprep.subr.mxu0 0.0
    %2942 = vmatpush1.msra.mxu0 0.0
    %2943 = vmatprep.subr.mxu0 0.0
    %2944 = vmatpush1.msra.mxu0 0.0
    %2945 = vmatprep.subr.mxu0 0.0
    %2946 = vmatpush1.msra.mxu0 0.0
    %2947 = vmatprep.subr.mxu0 0.0
    %2948 = vmatpush1.msra.mxu0 0.0
    %2949 = vmatprep.subr.mxu0 0.0
    %2950 = vmatpush1.msra.mxu0 0.0
    %2951 = vmatprep.subr.mxu0 0.0
    %2952 = vmatpush1.msra.mxu0 0.0
    %2953 = vmatprep.subr.mxu0 0.0
    %2954 = vmatpush1.msra.mxu0 0.0
    %2955 = vmatprep.subr.mxu0 0.0
    %2956 = vmatpush1.msra.mxu0 0.0
    %2957 = vmatprep.mubr.f32.mxu0 0.0
    %2958 = vmatmul.mubr.f32.gmra.mrb[0].mxu0 %v2891
    %v2959 = vpop.f32.mrb[0].mxu0
    %v2960 = vadd.f32 0.0, %v2959
    %v2961 = vpop.f32.mrb[0].mxu0
    %v2962 = vadd.f32 0.0, %v2961
    %2963 = vdwg.mxu0
    %2964 = vmatprep.subr.mxu0 0.0
    %2965 = vmatpush1.msra.mxu0 %v2025
    %2966 = vmatprep.subr.mxu0 0.0
    %2967 = vmatpush1.msra.mxu0 %v2028
    %2968 = vmatprep.subr.mxu0 0.0
    %2969 = vmatpush1.msra.mxu0 %v2031
    %2970 = vmatprep.subr.mxu0 0.0
    %2971 = vmatpush1.msra.mxu0 %v2034
    %2972 = vmatprep.subr.mxu0 0.0
    %2973 = vmatpush1.msra.mxu0 %v2037
    %2974 = vmatprep.subr.mxu0 0.0
    %2975 = vmatpush1.msra.mxu0 %v2040
    %2976 = vmatprep.subr.mxu0 0.0
    %2977 = vmatpush1.msra.mxu0 %v2043
    %2978 = vmatprep.subr.mxu0 0.0
    %2979 = vmatpush1.msra.mxu0 %v2046
    %2980 = vmatprep.subr.mxu0 0.0
    %2981 = vmatpush1.msra.mxu0 %v2049
    %2982 = vmatprep.subr.mxu0 0.0
    %2983 = vmatpush1.msra.mxu0 %v2052
    %2984 = vmatprep.subr.mxu0 0.0
    %2985 = vmatpush1.msra.mxu0 %v2055
    %2986 = vmatprep.subr.mxu0 0.0
    %2987 = vmatpush1.msra.mxu0 %v2058
    %2988 = vmatprep.subr.mxu0 0.0
    %2989 = vmatpush1.msra.mxu0 %v2061
    %2990 = vmatprep.subr.mxu0 0.0
    %2991 = vmatpush1.msra.mxu0 %v2064
    %2992 = vmatprep.subr.mxu0 0.0
    %2993 = vmatpush1.msra.mxu0 %v2067
    %2994 = vmatprep.subr.mxu0 0.0
    %2995 = vmatpush1.msra.mxu0 %v2070
    %2996 = vmatprep.subr.mxu0 0.0
    %2997 = vmatpush1.msra.mxu0 0.0
    %2998 = vmatprep.subr.mxu0 0.0
    %2999 = vmatpush1.msra.mxu0 0.0
    %3000 = vmatprep.subr.mxu0 0.0
    %3001 = vmatpush1.msra.mxu0 0.0
    %3002 = vmatprep.subr.mxu0 0.0
    %3003 = vmatpush1.msra.mxu0 0.0
    %3004 = vmatprep.subr.mxu0 0.0
    %3005 = vmatpush1.msra.mxu0 0.0
    %3006 = vmatprep.subr.mxu0 0.0
    %3007 = vmatpush1.msra.mxu0 0.0
    %3008 = vmatprep.subr.mxu0 0.0
    %3009 = vmatpush1.msra.mxu0 0.0
    %3010 = vmatprep.subr.mxu0 0.0
    %3011 = vmatpush1.msra.mxu0 0.0
    %3012 = vmatprep.subr.mxu0 0.0
    %3013 = vmatpush1.msra.mxu0 0.0
    %3014 = vmatprep.subr.mxu0 0.0
    %3015 = vmatpush1.msra.mxu0 0.0
    %3016 = vmatprep.subr.mxu0 0.0
    %3017 = vmatpush1.msra.mxu0 0.0
    %3018 = vmatprep.subr.mxu0 0.0
    %3019 = vmatpush1.msra.mxu0 0.0
    %3020 = vmatprep.subr.mxu0 0.0
    %3021 = vmatpush1.msra.mxu0 0.0
    %3022 = vmatprep.subr.mxu0 0.0
    %3023 = vmatpush1.msra.mxu0 0.0
    %3024 = vmatprep.subr.mxu0 0.0
    %3025 = vmatpush1.msra.mxu0 0.0
    %3026 = vmatprep.subr.mxu0 0.0
    %3027 = vmatpush1.msra.mxu0 0.0
    %3028 = vmatprep.mubr.f32.mxu0 0.0
    %3029 = vmatmul.mubr.f32.gmra.mrb[0].mxu0 %v2891
    %v3030 = vpop.f32.mrb[0].mxu0
    %v3031 = vadd.f32 0.0, %v3030
    %v3032 = vpop.f32.mrb[0].mxu0
    %3033 = vdwg.mxu0
    %v3034 = vadd.f32 %v1902, %v2960
    %v3035 = vadd.f32 %v1904, %v2962
    %v3036 = vxor.u32 %v3034, 2147483648
    %v3037 = vxor.u32 %v3035, 2147483648
    %v3038 = vmul.f32 %v3036, 1.442695
    %v3039 = vpow.pop %v3038
    %v3040 = vmul.f32 %v3037, 1.442695
    %v3041 = vpow.pop %v3040
    %v3042 = vadd.f32 %v3039, 1.0
    %v3043 = vadd.f32 %v3041, 1.0
    %v3044 = vrcp.pop %v3042
    %v3045 = vmul.f32 1.0, %v3044
    %v3046 = vrcp.pop %v3043
    %v3047 = vmul.f32 1.0, %v3046
    %v3048 = vadd.f32 %v3031, %v2076
    %v3049 = vmul.f32 %v3045, %v3048
    %v3050 = vadd.f32 %v2010, %v3049
    %v3051 = vtanh.pop %v3050
    %v3052 = vsub.f32 %v2891, %v3051
    %v3053 = vmul.f32 %v3047, %v3052
    %v3054 = vadd.f32 %v3051, %v3053
    %3055 = vst [vmem:[#allocation3 + $0x28] sm:$0xff] %v3054
    %3056 = vmatprep.subr.mxu0 %v2024
    %3057 = vmatpush1.msra.mxu0 %v2023
    %3058 = vmatprep.subr.mxu0 %v2027
    %3059 = vmatpush1.msra.mxu0 %v2026
    %3060 = vmatprep.subr.mxu0 %v2030
    %3061 = vmatpush1.msra.mxu0 %v2029
    %3062 = vmatprep.subr.mxu0 %v2033
    %3063 = vmatpush1.msra.mxu0 %v2032
    %3064 = vmatprep.subr.mxu0 %v2036
    %3065 = vmatpush1.msra.mxu0 %v2035
    %3066 = vmatprep.subr.mxu0 %v2039
    %3067 = vmatpush1.msra.mxu0 %v2038
    %3068 = vmatprep.subr.mxu0 %v2042
    %3069 = vmatpush1.msra.mxu0 %v2041
    %3070 = vmatprep.subr.mxu0 %v2045
    %3071 = vmatpush1.msra.mxu0 %v2044
    %3072 = vmatprep.subr.mxu0 %v2048
    %3073 = vmatpush1.msra.mxu0 %v2047
    %3074 = vmatprep.subr.mxu0 %v2051
    %3075 = vmatpush1.msra.mxu0 %v2050
    %3076 = vmatprep.subr.mxu0 %v2054
    %3077 = vmatpush1.msra.mxu0 %v2053
    %3078 = vmatprep.subr.mxu0 %v2057
    %3079 = vmatpush1.msra.mxu0 %v2056
    %3080 = vmatprep.subr.mxu0 %v2060
    %3081 = vmatpush1.msra.mxu0 %v2059
    %3082 = vmatprep.subr.mxu0 %v2063
    %3083 = vmatpush1.msra.mxu0 %v2062
    %3084 = vmatprep.subr.mxu0 %v2066
    %3085 = vmatpush1.msra.mxu0 %v2065
    %3086 = vmatprep.subr.mxu0 %v2069
    %3087 = vmatpush1.msra.mxu0 %v2068
    %3088 = vmatprep.subr.mxu0 0.0
    %3089 = vmatpush1.msra.mxu0 0.0
    %3090 = vmatprep.subr.mxu0 0.0
    %3091 = vmatpush1.msra.mxu0 0.0
    %3092 = vmatprep.subr.mxu0 0.0
    %3093 = vmatpush1.msra.mxu0 0.0
    %3094 = vmatprep.subr.mxu0 0.0
    %3095 = vmatpush1.msra.mxu0 0.0
    %3096 = vmatprep.subr.mxu0 0.0
    %3097 = vmatpush1.msra.mxu0 0.0
    %3098 = vmatprep.subr.mxu0 0.0
    %3099 = vmatpush1.msra.mxu0 0.0
    %3100 = vmatprep.subr.mxu0 0.0
    %3101 = vmatpush1.msra.mxu0 0.0
    %3102 = vmatprep.subr.mxu0 0.0
    %3103 = vmatpush1.msra.mxu0 0.0
    %3104 = vmatprep.subr.mxu0 0.0
    %3105 = vmatpush1.msra.mxu0 0.0
    %3106 = vmatprep.subr.mxu0 0.0
    %3107 = vmatpush1.msra.mxu0 0.0
    %3108 = vmatprep.subr.mxu0 0.0
    %3109 = vmatpush1.msra.mxu0 0.0
    %3110 = vmatprep.subr.mxu0 0.0
    %3111 = vmatpush1.msra.mxu0 0.0
    %3112 = vmatprep.subr.mxu0 0.0
    %3113 = vmatpush1.msra.mxu0 0.0
    %3114 = vmatprep.subr.mxu0 0.0
    %3115 = vmatpush1.msra.mxu0 0.0
    %3116 = vmatprep.subr.mxu0 0.0
    %3117 = vmatpush1.msra.mxu0 0.0
    %3118 = vmatprep.subr.mxu0 0.0
    %3119 = vmatpush1.msra.mxu0 0.0
    %3120 = vmatprep.mubr.f32.mxu0 0.0
    %3121 = vmatmul.mubr.f32.gmra.mrb[0].mxu0 %v3054
    %v3122 = vpop.f32.mrb[0].mxu0
    %v3123 = vadd.f32 0.0, %v3122
    %v3124 = vpop.f32.mrb[0].mxu0
    %v3125 = vadd.f32 0.0, %v3124
    %3126 = vdwg.mxu0
    %3127 = vmatprep.subr.mxu0 0.0
    %3128 = vmatpush1.msra.mxu0 %v2025
    %3129 = vmatprep.subr.mxu0 0.0
    %3130 = vmatpush1.msra.mxu0 %v2028
    %3131 = vmatprep.subr.mxu0 0.0
    %3132 = vmatpush1.msra.mxu0 %v2031
    %3133 = vmatprep.subr.mxu0 0.0
    %3134 = vmatpush1.msra.mxu0 %v2034
    %3135 = vmatprep.subr.mxu0 0.0
    %3136 = vmatpush1.msra.mxu0 %v2037
    %3137 = vmatprep.subr.mxu0 0.0
    %3138 = vmatpush1.msra.mxu0 %v2040
    %3139 = vmatprep.subr.mxu0 0.0
    %3140 = vmatpush1.msra.mxu0 %v2043
    %3141 = vmatprep.subr.mxu0 0.0
    %3142 = vmatpush1.msra.mxu0 %v2046
    %3143 = vmatprep.subr.mxu0 0.0
    %3144 = vmatpush1.msra.mxu0 %v2049
    %3145 = vmatprep.subr.mxu0 0.0
    %3146 = vmatpush1.msra.mxu0 %v2052
    %3147 = vmatprep.subr.mxu0 0.0
    %3148 = vmatpush1.msra.mxu0 %v2055
    %3149 = vmatprep.subr.mxu0 0.0
    %3150 = vmatpush1.msra.mxu0 %v2058
    %3151 = vmatprep.subr.mxu0 0.0
    %3152 = vmatpush1.msra.mxu0 %v2061
    %3153 = vmatprep.subr.mxu0 0.0
    %3154 = vmatpush1.msra.mxu0 %v2064
    %3155 = vmatprep.subr.mxu0 0.0
    %3156 = vmatpush1.msra.mxu0 %v2067
    %3157 = vmatprep.subr.mxu0 0.0
    %3158 = vmatpush1.msra.mxu0 %v2070
    %3159 = vmatprep.subr.mxu0 0.0
    %3160 = vmatpush1.msra.mxu0 0.0
    %3161 = vmatprep.subr.mxu0 0.0
    %3162 = vmatpush1.msra.mxu0 0.0
    %3163 = vmatprep.subr.mxu0 0.0
    %3164 = vmatpush1.msra.mxu0 0.0
    %3165 = vmatprep.subr.mxu0 0.0
    %3166 = vmatpush1.msra.mxu0 0.0
    %3167 = vmatprep.subr.mxu0 0.0
    %3168 = vmatpush1.msra.mxu0 0.0
    %3169 = vmatprep.subr.mxu0 0.0
    %3170 = vmatpush1.msra.mxu0 0.0
    %3171 = vmatprep.subr.mxu0 0.0
    %3172 = vmatpush1.msra.mxu0 0.0
    %3173 = vmatprep.subr.mxu0 0.0
    %3174 = vmatpush1.msra.mxu0 0.0
    %3175 = vmatprep.subr.mxu0 0.0
    %3176 = vmatpush1.msra.mxu0 0.0
    %3177 = vmatprep.subr.mxu0 0.0
    %3178 = vmatpush1.msra.mxu0 0.0
    %3179 = vmatprep.subr.mxu0 0.0
    %3180 = vmatpush1.msra.mxu0 0.0
    %3181 = vmatprep.subr.mxu0 0.0
    %3182 = vmatpush1.msra.mxu0 0.0
    %3183 = vmatprep.subr.mxu0 0.0
    %3184 = vmatpush1.msra.mxu0 0.0
    %3185 = vmatprep.subr.mxu0 0.0
    %3186 = vmatpush1.msra.mxu0 0.0
    %3187 = vmatprep.subr.mxu0 0.0
    %3188 = vmatpush1.msra.mxu0 0.0
    %3189 = vmatprep.subr.mxu0 0.0
    %3190 = vmatpush1.msra.mxu0 0.0
    %3191 = vmatprep.mubr.f32.mxu0 0.0
    %3192 = vmatmul.mubr.f32.gmra.mrb[0].mxu0 %v3054
    %v3193 = vpop.f32.mrb[0].mxu0
    %v3194 = vadd.f32 0.0, %v3193
    %v3195 = vpop.f32.mrb[0].mxu0
    %3196 = vdwg.mxu0
    %v3197 = vadd.f32 %v1908, %v3123
    %v3198 = vadd.f32 %v1910, %v3125
    %v3199 = vxor.u32 %v3197, 2147483648
    %v3200 = vxor.u32 %v3198, 2147483648
    %v3201 = vmul.f32 %v3199, 1.442695
    %v3202 = vpow.pop %v3201
    %v3203 = vmul.f32 %v3200, 1.442695
    %v3204 = vpow.pop %v3203
    %v3205 = vadd.f32 %v3202, 1.0
    %v3206 = vadd.f32 %v3204, 1.0
    %v3207 = vrcp.pop %v3205
    %v3208 = vmul.f32 1.0, %v3207
    %v3209 = vrcp.pop %v3206
    %v3210 = vmul.f32 1.0, %v3209
    %v3211 = vadd.f32 %v3194, %v2076
    %v3212 = vmul.f32 %v3208, %v3211
    %v3213 = vadd.f32 %v2015, %v3212
    %v3214 = vtanh.pop %v3213
    %v3215 = vsub.f32 %v3054, %v3214
    %v3216 = vmul.f32 %v3210, %v3215
    %v3217 = vadd.f32 %v3214, %v3216
    %3218 = vst [vmem:[#allocation3 + $0x30] sm:$0xff] %v3217
    %3219 = vmatprep.subr.mxu0 %v2024
    %3220 = vmatpush1.msra.mxu0 %v2023
    %3221 = vmatprep.subr.mxu0 %v2027
    %3222 = vmatpush1.msra.mxu0 %v2026
    %3223 = vmatprep.subr.mxu0 %v2030
    %3224 = vmatpush1.msra.mxu0 %v2029
    %3225 = vmatprep.subr.mxu0 %v2033
    %3226 = vmatpush1.msra.mxu0 %v2032
    %3227 = vmatprep.subr.mxu0 %v2036
    %3228 = vmatpush1.msra.mxu0 %v2035
    %3229 = vmatprep.subr.mxu0 %v2039
    %3230 = vmatpush1.msra.mxu0 %v2038
    %3231 = vmatprep.subr.mxu0 %v2042
    %3232 = vmatpush1.msra.mxu0 %v2041
    %3233 = vmatprep.subr.mxu0 %v2045
    %3234 = vmatpush1.msra.mxu0 %v2044
    %3235 = vmatprep.subr.mxu0 %v2048
    %3236 = vmatpush1.msra.mxu0 %v2047
    %3237 = vmatprep.subr.mxu0 %v2051
    %3238 = vmatpush1.msra.mxu0 %v2050
    %3239 = vmatprep.subr.mxu0 %v2054
    %3240 = vmatpush1.msra.mxu0 %v2053
    %3241 = vmatprep.subr.mxu0 %v2057
    %3242 = vmatpush1.msra.mxu0 %v2056
    %3243 = vmatprep.subr.mxu0 %v2060
    %3244 = vmatpush1.msra.mxu0 %v2059
    %3245 = vmatprep.subr.mxu0 %v2063
    %3246 = vmatpush1.msra.mxu0 %v2062
    %3247 = vmatprep.subr.mxu0 %v2066
    %3248 = vmatpush1.msra.mxu0 %v2065
    %3249 = vmatprep.subr.mxu0 %v2069
    %3250 = vmatpush1.msra.mxu0 %v2068
    %3251 = vmatprep.subr.mxu0 0.0
    %3252 = vmatpush1.msra.mxu0 0.0
    %3253 = vmatprep.subr.mxu0 0.0
    %3254 = vmatpush1.msra.mxu0 0.0
    %3255 = vmatprep.subr.mxu0 0.0
    %3256 = vmatpush1.msra.mxu0 0.0
    %3257 = vmatprep.subr.mxu0 0.0
    %3258 = vmatpush1.msra.mxu0 0.0
    %3259 = vmatprep.subr.mxu0 0.0
    %3260 = vmatpush1.msra.mxu0 0.0
    %3261 = vmatprep.subr.mxu0 0.0
    %3262 = vmatpush1.msra.mxu0 0.0
    %3263 = vmatprep.subr.mxu0 0.0
    %3264 = vmatpush1.msra.mxu0 0.0
    %3265 = vmatprep.subr.mxu0 0.0
    %3266 = vmatpush1.msra.mxu0 0.0
    %3267 = vmatprep.subr.mxu0 0.0
    %3268 = vmatpush1.msra.mxu0 0.0
    %3269 = vmatprep.subr.mxu0 0.0
    %3270 = vmatpush1.msra.mxu0 0.0
    %3271 = vmatprep.subr.mxu0 0.0
    %3272 = vmatpush1.msra.mxu0 0.0
    %3273 = vmatprep.subr.mxu0 0.0
    %3274 = vmatpush1.msra.mxu0 0.0
    %3275 = vmatprep.subr.mxu0 0.0
    %3276 = vmatpush1.msra.mxu0 0.0
    %3277 = vmatprep.subr.mxu0 0.0
    %3278 = vmatpush1.msra.mxu0 0.0
    %3279 = vmatprep.subr.mxu0 0.0
    %3280 = vmatpush1.msra.mxu0 0.0
    %3281 = vmatprep.subr.mxu0 0.0
    %3282 = vmatpush1.msra.mxu0 0.0
    %3283 = vmatprep.mubr.f32.mxu0 0.0
    %3284 = vmatmul.mubr.f32.gmra.mrb[0].mxu0 %v3217
    %v3285 = vpop.f32.mrb[0].mxu0
    %v3286 = vadd.f32 0.0, %v3285
    %v3287 = vpop.f32.mrb[0].mxu0
    %v3288 = vadd.f32 0.0, %v3287
    %3289 = vdwg.mxu0
    %3290 = vmatprep.subr.mxu0 0.0
    %3291 = vmatpush1.msra.mxu0 %v2025
    %3292 = vmatprep.subr.mxu0 0.0
    %3293 = vmatpush1.msra.mxu0 %v2028
    %3294 = vmatprep.subr.mxu0 0.0
    %3295 = vmatpush1.msra.mxu0 %v2031
    %3296 = vmatprep.subr.mxu0 0.0
    %3297 = vmatpush1.msra.mxu0 %v2034
    %3298 = vmatprep.subr.mxu0 0.0
    %3299 = vmatpush1.msra.mxu0 %v2037
    %3300 = vmatprep.subr.mxu0 0.0
    %3301 = vmatpush1.msra.mxu0 %v2040
    %3302 = vmatprep.subr.mxu0 0.0
    %3303 = vmatpush1.msra.mxu0 %v2043
    %3304 = vmatprep.subr.mxu0 0.0
    %3305 = vmatpush1.msra.mxu0 %v2046
    %3306 = vmatprep.subr.mxu0 0.0
    %3307 = vmatpush1.msra.mxu0 %v2049
    %3308 = vmatprep.subr.mxu0 0.0
    %3309 = vmatpush1.msra.mxu0 %v2052
    %3310 = vmatprep.subr.mxu0 0.0
    %3311 = vmatpush1.msra.mxu0 %v2055
    %3312 = vmatprep.subr.mxu0 0.0
    %3313 = vmatpush1.msra.mxu0 %v2058
    %3314 = vmatprep.subr.mxu0 0.0
    %3315 = vmatpush1.msra.mxu0 %v2061
    %3316 = vmatprep.subr.mxu0 0.0
    %3317 = vmatpush1.msra.mxu0 %v2064
    %3318 = vmatprep.subr.mxu0 0.0
    %3319 = vmatpush1.msra.mxu0 %v2067
    %3320 = vmatprep.subr.mxu0 0.0
    %3321 = vmatpush1.msra.mxu0 %v2070
    %3322 = vmatprep.subr.mxu0 0.0
    %3323 = vmatpush1.msra.mxu0 0.0
    %3324 = vmatprep.subr.mxu0 0.0
    %3325 = vmatpush1.msra.mxu0 0.0
    %3326 = vmatprep.subr.mxu0 0.0
    %3327 = vmatpush1.msra.mxu0 0.0
    %3328 = vmatprep.subr.mxu0 0.0
    %3329 = vmatpush1.msra.mxu0 0.0
    %3330 = vmatprep.subr.mxu0 0.0
    %3331 = vmatpush1.msra.mxu0 0.0
    %3332 = vmatprep.subr.mxu0 0.0
    %3333 = vmatpush1.msra.mxu0 0.0
    %3334 = vmatprep.subr.mxu0 0.0
    %3335 = vmatpush1.msra.mxu0 0.0
    %3336 = vmatprep.subr.mxu0 0.0
    %3337 = vmatpush1.msra.mxu0 0.0
    %3338 = vmatprep.subr.mxu0 0.0
    %3339 = vmatpush1.msra.mxu0 0.0
    %3340 = vmatprep.subr.mxu0 0.0
    %3341 = vmatpush1.msra.mxu0 0.0
    %3342 = vmatprep.subr.mxu0 0.0
    %3343 = vmatpush1.msra.mxu0 0.0
    %3344 = vmatprep.subr.mxu0 0.0
    %3345 = vmatpush1.msra.mxu0 0.0
    %3346 = vmatprep.subr.mxu0 0.0
    %3347 = vmatpush1.msra.mxu0 0.0
    %3348 = vmatprep.subr.mxu0 0.0
    %3349 = vmatpush1.msra.mxu0 0.0
    %3350 = vmatprep.subr.mxu0 0.0
    %3351 = vmatpush1.msra.mxu0 0.0
    %3352 = vmatprep.subr.mxu0 0.0
    %3353 = vmatpush1.msra.mxu0 0.0
    %3354 = vmatprep.mubr.f32.mxu0 0.0
    %3355 = vmatmul.mubr.f32.gmra.mrb[0].mxu0 %v3217
    %v3356 = vpop.f32.mrb[0].mxu0
    %v3357 = vadd.f32 0.0, %v3356
    %v3358 = vpop.f32.mrb[0].mxu0
    %3359 = vdwg.mxu0
    %v3360 = vadd.f32 %v1914, %v3286
    %v3361 = vadd.f32 %v1916, %v3288
    %v3362 = vxor.u32 %v3360, 2147483648
    %v3363 = vxor.u32 %v3361, 2147483648
    %v3364 = vmul.f32 %v3362, 1.442695
    %v3365 = vpow.pop %v3364
    %v3366 = vmul.f32 %v3363, 1.442695
    %v3367 = vpow.pop %v3366
    %v3368 = vadd.f32 %v3365, 1.0
    %v3369 = vadd.f32 %v3367, 1.0
    %v3370 = vrcp.pop %v3368
    %v3371 = vmul.f32 1.0, %v3370
    %v3372 = vrcp.pop %v3369
    %v3373 = vmul.f32 1.0, %v3372
    %v3374 = vadd.f32 %v3357, %v2076
    %v3375 = vmul.f32 %v3371, %v3374
    %v3376 = vadd.f32 %v2020, %v3375
    %v3377 = vtanh.pop %v3376
    %v3378 = vsub.f32 %v3217, %v3377
    %v3379 = vmul.f32 %v3373, %v3378
    %v3380 = vadd.f32 %v3377, %v3379
    %3381 = vst [vmem:[#allocation3 + $0x38] sm:$0xff] %v3380
    %v3382 = vld [vmem:[#allocation3] sm:$0xff]
    %v3383 = vld [vmem:[#allocation3 + $0x8] sm:$0xff]
    %v3384 = vld [vmem:[#allocation3 + $0x10] sm:$0xff]
    %v3385 = vld [vmem:[#allocation3 + $0x18] sm:$0xff]
    %v3386 = vld [vmem:[#allocation3 + $0x20] sm:$0xff]
    %v3387 = vld [vmem:[#allocation3 + $0x28] sm:$0xff]
    %v3388 = vld [vmem:[#allocation3 + $0x30] sm:$0xff]
    %v3389 = vld [vmem:[#allocation3 + $0x38] sm:$0xff]
    %v3390 = vtanh.pop %v3382
    %v3391 = vtanh.pop %v3383
    %v3392 = vtanh.pop %v3384
    %v3393 = vtanh.pop %v3385
    %v3394 = vtanh.pop %v3386
    %v3395 = vtanh.pop %v3387
    %v3396 = vtanh.pop %v3388
    %v3397 = vtanh.pop %v3389
    %v3398 = vld [vmem:[#allocation9] sm:$0xff]
    %v3399 = vld [vmem:[#allocation9 + $0x8] sm:$0xff]
    %v3400 = vld [vmem:[#allocation9 + $0x10] sm:$0xff]
    %v3401 = vld [vmem:[#allocation9 + $0x18] sm:$0xff]
    %v3402 = vld [vmem:[#allocation9 + $0x20] sm:$0xff]
    %v3403 = vld [vmem:[#allocation9 + $0x28] sm:$0xff]
    %v3404 = vld [vmem:[#allocation9 + $0x30] sm:$0xff]
    %v3405 = vld [vmem:[#allocation9 + $0x38] sm:$0xff]
    %v3406 = vld [vmem:[#allocation9 + $0x40] sm:$0xff]
    %v3407 = vld [vmem:[#allocation9 + $0x48] sm:$0xff]
    %v3408 = vld [vmem:[#allocation9 + $0x50] sm:$0xff]
    %v3409 = vld [vmem:[#allocation9 + $0x58] sm:$0xff]
    %v3410 = vld [vmem:[#allocation9 + $0x60] sm:$0xff]
    %v3411 = vld [vmem:[#allocation9 + $0x68] sm:$0xff]
    %v3412 = vld [vmem:[#allocation9 + $0x70] sm:$0xff]
    %v3413 = vld [vmem:[#allocation9 + $0x78] sm:$0xff]
    %v3414 = vld [vmem:[#allocation9 + $0x80] sm:$0xff]
    %v3415 = vld [vmem:[#allocation9 + $0x88] sm:$0xff]
    %v3416 = vld [vmem:[#allocation9 + $0x90] sm:$0xff]
    %v3417 = vld [vmem:[#allocation9 + $0x98] sm:$0xff]
    %v3418 = vld [vmem:[#allocation9 + $0xa0] sm:$0xff]
    %v3419 = vld [vmem:[#allocation9 + $0xa8] sm:$0xff]
    %v3420 = vld [vmem:[#allocation9 + $0xb0] sm:$0xff]
    %v3421 = vld [vmem:[#allocation9 + $0xb8] sm:$0xff]
    %v3422 = vld [vmem:[#allocation9 + $0xc0] sm:$0xff]
    %v3423 = vld [vmem:[#allocation9 + $0xc8] sm:$0xff]
    %v3424 = vld [vmem:[#allocation9 + $0xd0] sm:$0xff]
    %v3425 = vld [vmem:[#allocation9 + $0xd8] sm:$0xff]
    %v3426 = vld [vmem:[#allocation9 + $0xe0] sm:$0xff]
    %v3427 = vld [vmem:[#allocation9 + $0xe8] sm:$0xff]
    %v3428 = vld [vmem:[#allocation9 + $0xf0] sm:$0xff]
    %v3429 = vld [vmem:[#allocation9 + $0xf8] sm:$0xff]
    %v3430 = vld [vmem:[#allocation9 + $0x100] sm:$0xff]
    %v3431 = vld [vmem:[#allocation9 + $0x108] sm:$0xff]
    %v3432 = vld [vmem:[#allocation9 + $0x110] sm:$0xff]
    %v3433 = vld [vmem:[#allocation9 + $0x118] sm:$0xff]
    %v3434 = vld [vmem:[#allocation9 + $0x120] sm:$0xff]
    %v3435 = vld [vmem:[#allocation9 + $0x128] sm:$0xff]
    %v3436 = vld [vmem:[#allocation9 + $0x130] sm:$0xff]
    %v3437 = vld [vmem:[#allocation9 + $0x138] sm:$0xff]
    %v3438 = vld [vmem:[#allocation9 + $0x140] sm:$0xff]
    %v3439 = vld [vmem:[#allocation9 + $0x148] sm:$0xff]
    %v3440 = vld [vmem:[#allocation9 + $0x150] sm:$0xff]
    %v3441 = vld [vmem:[#allocation9 + $0x158] sm:$0xff]
    %v3442 = vld [vmem:[#allocation9 + $0x160] sm:$0xff]
    %v3443 = vld [vmem:[#allocation9 + $0x168] sm:$0xff]
    %v3444 = vld [vmem:[#allocation9 + $0x170] sm:$0xff]
    %v3445 = vld [vmem:[#allocation9 + $0x178] sm:$0xff]
    %v3446 = vld [vmem:[#allocation9 + $0x180] sm:$0xff]
    %v3447 = vld [vmem:[#allocation9 + $0x188] sm:$0xff]
    %v3448 = vld [vmem:[#allocation9 + $0x190] sm:$0xff]
    %v3449 = vld [vmem:[#allocation9 + $0x198] sm:$0xff]
    %v3450 = vld [vmem:[#allocation9 + $0x1a0] sm:$0xff]
    %v3451 = vld [vmem:[#allocation9 + $0x1a8] sm:$0xff]
    %v3452 = vld [vmem:[#allocation9 + $0x1b0] sm:$0xff]
    %v3453 = vld [vmem:[#allocation9 + $0x1b8] sm:$0xff]
    %v3454 = vld [vmem:[#allocation9 + $0x1c0] sm:$0xff]
    %v3455 = vld [vmem:[#allocation9 + $0x1c8] sm:$0xff]
    %v3456 = vld [vmem:[#allocation9 + $0x1d0] sm:$0xff]
    %v3457 = vld [vmem:[#allocation9 + $0x1d8] sm:$0xff]
    %v3458 = vld [vmem:[#allocation9 + $0x1e0] sm:$0xff]
    %v3459 = vld [vmem:[#allocation9 + $0x1e8] sm:$0xff]
    %v3460 = vld [vmem:[#allocation9 + $0x1f0] sm:$0xff]
    %v3461 = vld [vmem:[#allocation9 + $0x1f8] sm:$0xff]
    %v3462 = vld [vmem:[#allocation9 + $0x200] sm:$0xff]
    %v3463 = vld [vmem:[#allocation9 + $0x208] sm:$0xff]
    %v3464 = vld [vmem:[#allocation9 + $0x210] sm:$0xff]
    %v3465 = vld [vmem:[#allocation9 + $0x218] sm:$0xff]
    %v3466 = vld [vmem:[#allocation9 + $0x220] sm:$0xff]
    %v3467 = vld [vmem:[#allocation9 + $0x228] sm:$0xff]
    %v3468 = vld [vmem:[#allocation9 + $0x230] sm:$0xff]
    %v3469 = vld [vmem:[#allocation9 + $0x238] sm:$0xff]
    %v3470 = vld [vmem:[#allocation9 + $0x240] sm:$0xff]
    %v3471 = vld [vmem:[#allocation9 + $0x248] sm:$0xff]
    %v3472 = vld [vmem:[#allocation9 + $0x250] sm:$0xff]
    %v3473 = vld [vmem:[#allocation9 + $0x258] sm:$0xff]
    %v3474 = vld [vmem:[#allocation9 + $0x260] sm:$0xff]
    %v3475 = vld [vmem:[#allocation9 + $0x268] sm:$0xff]
    %v3476 = vld [vmem:[#allocation9 + $0x270] sm:$0xff]
    %v3477 = vld [vmem:[#allocation9 + $0x278] sm:$0xff]
    %v3478 = vld [vmem:[#allocation9 + $0x280] sm:$0xff]
    %v3479 = vld [vmem:[#allocation9 + $0x288] sm:$0xff]
    %v3480 = vld [vmem:[#allocation9 + $0x290] sm:$0xff]
    %v3481 = vld [vmem:[#allocation9 + $0x298] sm:$0xff]
    %v3482 = vld [vmem:[#allocation9 + $0x2a0] sm:$0xff]
    %v3483 = vld [vmem:[#allocation9 + $0x2a8] sm:$0xff]
    %v3484 = vld [vmem:[#allocation9 + $0x2b0] sm:$0xff]
    %v3485 = vld [vmem:[#allocation9 + $0x2b8] sm:$0xff]
    %v3486 = vld [vmem:[#allocation9 + $0x2c0] sm:$0xff]
    %v3487 = vld [vmem:[#allocation9 + $0x2c8] sm:$0xff]
    %v3488 = vld [vmem:[#allocation9 + $0x2d0] sm:$0xff]
    %v3489 = vld [vmem:[#allocation9 + $0x2d8] sm:$0xff]
    %v3490 = vld [vmem:[#allocation9 + $0x2e0] sm:$0xff]
    %v3491 = vld [vmem:[#allocation9 + $0x2e8] sm:$0xff]
    %v3492 = vld [vmem:[#allocation9 + $0x2f0] sm:$0xff]
    %v3493 = vld [vmem:[#allocation9 + $0x2f8] sm:$0xff]
    %v3494 = vld [vmem:[#allocation9 + $0x300] sm:$0xff]
    %v3495 = vld [vmem:[#allocation9 + $0x308] sm:$0xff]
    %v3496 = vld [vmem:[#allocation9 + $0x310] sm:$0xff]
    %v3497 = vld [vmem:[#allocation9 + $0x318] sm:$0xff]
    %v3498 = vld [vmem:[#allocation9 + $0x320] sm:$0xff]
    %v3499 = vld [vmem:[#allocation9 + $0x328] sm:$0xff]
    %v3500 = vld [vmem:[#allocation9 + $0x330] sm:$0xff]
    %v3501 = vld [vmem:[#allocation9 + $0x338] sm:$0xff]
    %v3502 = vld [vmem:[#allocation9 + $0x340] sm:$0xff]
    %v3503 = vld [vmem:[#allocation9 + $0x348] sm:$0xff]
    %v3504 = vld [vmem:[#allocation9 + $0x350] sm:$0xff]
    %v3505 = vld [vmem:[#allocation9 + $0x358] sm:$0xff]
    %v3506 = vld [vmem:[#allocation9 + $0x360] sm:$0xff]
    %v3507 = vld [vmem:[#allocation9 + $0x368] sm:$0xff]
    %v3508 = vld [vmem:[#allocation9 + $0x370] sm:$0xff]
    %v3509 = vld [vmem:[#allocation9 + $0x378] sm:$0xff]
    %v3510 = vld [vmem:[#allocation9 + $0x380] sm:$0xff]
    %v3511 = vld [vmem:[#allocation9 + $0x388] sm:$0xff]
    %v3512 = vld [vmem:[#allocation9 + $0x390] sm:$0xff]
    %v3513 = vld [vmem:[#allocation9 + $0x398] sm:$0xff]
    %v3514 = vld [vmem:[#allocation9 + $0x3a0] sm:$0xff]
    %v3515 = vld [vmem:[#allocation9 + $0x3a8] sm:$0xff]
    %v3516 = vld [vmem:[#allocation9 + $0x3b0] sm:$0xff]
    %v3517 = vld [vmem:[#allocation9 + $0x3b8] sm:$0xff]
    %v3518 = vld [vmem:[#allocation9 + $0x3c0] sm:$0xff]
    %v3519 = vld [vmem:[#allocation9 + $0x3c8] sm:$0xff]
    %v3520 = vld [vmem:[#allocation9 + $0x3d0] sm:$0xff]
    %v3521 = vld [vmem:[#allocation9 + $0x3d8] sm:$0xff]
    %v3522 = vld [vmem:[#allocation9 + $0x3e0] sm:$0xff]
    %v3523 = vld [vmem:[#allocation9 + $0x3e8] sm:$0xff]
    %v3524 = vld [vmem:[#allocation9 + $0x3f0] sm:$0xff]
    %v3525 = vld [vmem:[#allocation9 + $0x3f8] sm:$0xff]
    %v3526 = vld [vmem:[%s10] sm:$0x1]
    %v3528 = vlaneseq
    %v3529 = vshrl.u32 %v3528, 7
    %v3530 = vsub.s32 0, %v3529
    %v3531 = vrot.slane %v3526, %v3530
    %3533 = vmatprep.subr.mxu0 0.0
    %3534 = vmatpush1.msra.mxu0 %v3398
    %3535 = vmatprep.subr.mxu0 0.0
    %3536 = vmatpush1.msra.mxu0 %v3399
    %3537 = vmatprep.subr.mxu0 0.0
    %3538 = vmatpush1.msra.mxu0 %v3400
    %3539 = vmatprep.subr.mxu0 0.0
    %3540 = vmatpush1.msra.mxu0 %v3401
    %3541 = vmatprep.subr.mxu0 0.0
    %3542 = vmatpush1.msra.mxu0 %v3402
    %3543 = vmatprep.subr.mxu0 0.0
    %3544 = vmatpush1.msra.mxu0 %v3403
    %3545 = vmatprep.subr.mxu0 0.0
    %3546 = vmatpush1.msra.mxu0 %v3404
    %3547 = vmatprep.subr.mxu0 0.0
    %3548 = vmatpush1.msra.mxu0 %v3405
    %3549 = vmatprep.subr.mxu0 0.0
    %3550 = vmatpush1.msra.mxu0 %v3406
    %3551 = vmatprep.subr.mxu0 0.0
    %3552 = vmatpush1.msra.mxu0 %v3407
    %3553 = vmatprep.subr.mxu0 0.0
    %3554 = vmatpush1.msra.mxu0 %v3408
    %3555 = vmatprep.subr.mxu0 0.0
    %3556 = vmatpush1.msra.mxu0 %v3409
    %3557 = vmatprep.subr.mxu0 0.0
    %3558 = vmatpush1.msra.mxu0 %v3410
    %3559 = vmatprep.subr.mxu0 0.0
    %3560 = vmatpush1.msra.mxu0 %v3411
    %3561 = vmatprep.subr.mxu0 0.0
    %3562 = vmatpush1.msra.mxu0 %v3412
    %3563 = vmatprep.subr.mxu0 0.0
    %3564 = vmatpush1.msra.mxu0 %v3413
    %3565 = vmatprep.subr.mxu0 0.0
    %3566 = vmatpush1.msra.mxu0 %v3414
    %3567 = vmatprep.subr.mxu0 0.0
    %3568 = vmatpush1.msra.mxu0 %v3415
    %3569 = vmatprep.subr.mxu0 0.0
    %3570 = vmatpush1.msra.mxu0 %v3416
    %3571 = vmatprep.subr.mxu0 0.0
    %3572 = vmatpush1.msra.mxu0 %v3417
    %3573 = vmatprep.subr.mxu0 0.0
    %3574 = vmatpush1.msra.mxu0 %v3418
    %3575 = vmatprep.subr.mxu0 0.0
    %3576 = vmatpush1.msra.mxu0 %v3419
    %3577 = vmatprep.subr.mxu0 0.0
    %3578 = vmatpush1.msra.mxu0 %v3420
    %3579 = vmatprep.subr.mxu0 0.0
    %3580 = vmatpush1.msra.mxu0 %v3421
    %3581 = vmatprep.subr.mxu0 0.0
    %3582 = vmatpush1.msra.mxu0 %v3422
    %3583 = vmatprep.subr.mxu0 0.0
    %3584 = vmatpush1.msra.mxu0 %v3423
    %3585 = vmatprep.subr.mxu0 0.0
    %3586 = vmatpush1.msra.mxu0 %v3424
    %3587 = vmatprep.subr.mxu0 0.0
    %3588 = vmatpush1.msra.mxu0 %v3425
    %3589 = vmatprep.subr.mxu0 0.0
    %3590 = vmatpush1.msra.mxu0 %v3426
    %3591 = vmatprep.subr.mxu0 0.0
    %3592 = vmatpush1.msra.mxu0 %v3427
    %3593 = vmatprep.subr.mxu0 0.0
    %3594 = vmatpush1.msra.mxu0 %v3428
    %3595 = vmatprep.subr.mxu0 0.0
    %3596 = vmatpush1.msra.mxu0 %v3429
    %3597 = vmatprep.mubr.f32.mxu0 %v3391
    %3598 = vmatmul.mubr.f32.gmra.mrb[0].mxu0 %v3390
    %v3599 = vpop.f32.mrb[0].mxu0
    %v3600 = vadd.f32 %v3531, %v3599
    %v3601 = vpop.f32.mrb[0].mxu0
    %3602 = vdwg.mxu0
    %3603 = vmatprep.subr.mxu0 0.0
    %3604 = vmatpush1.msra.mxu0 %v3430
    %3605 = vmatprep.subr.mxu0 0.0
    %3606 = vmatpush1.msra.mxu0 %v3431
    %3607 = vmatprep.subr.mxu0 0.0
    %3608 = vmatpush1.msra.mxu0 %v3432
    %3609 = vmatprep.subr.mxu0 0.0
    %3610 = vmatpush1.msra.mxu0 %v3433
    %3611 = vmatprep.subr.mxu0 0.0
    %3612 = vmatpush1.msra.mxu0 %v3434
    %3613 = vmatprep.subr.mxu0 0.0
    %3614 = vmatpush1.msra.mxu0 %v3435
    %3615 = vmatprep.subr.mxu0 0.0
    %3616 = vmatpush1.msra.mxu0 %v3436
    %3617 = vmatprep.subr.mxu0 0.0
    %3618 = vmatpush1.msra.mxu0 %v3437
    %3619 = vmatprep.subr.mxu0 0.0
    %3620 = vmatpush1.msra.mxu0 %v3438
    %3621 = vmatprep.subr.mxu0 0.0
    %3622 = vmatpush1.msra.mxu0 %v3439
    %3623 = vmatprep.subr.mxu0 0.0
    %3624 = vmatpush1.msra.mxu0 %v3440
    %3625 = vmatprep.subr.mxu0 0.0
    %3626 = vmatpush1.msra.mxu0 %v3441
    %3627 = vmatprep.subr.mxu0 0.0
    %3628 = vmatpush1.msra.mxu0 %v3442
    %3629 = vmatprep.subr.mxu0 0.0
    %3630 = vmatpush1.msra.mxu0 %v3443
    %3631 = vmatprep.subr.mxu0 0.0
    %3632 = vmatpush1.msra.mxu0 %v3444
    %3633 = vmatprep.subr.mxu0 0.0
    %3634 = vmatpush1.msra.mxu0 %v3445
    %3635 = vmatprep.subr.mxu0 0.0
    %3636 = vmatpush1.msra.mxu0 %v3446
    %3637 = vmatprep.subr.mxu0 0.0
    %3638 = vmatpush1.msra.mxu0 %v3447
    %3639 = vmatprep.subr.mxu0 0.0
    %3640 = vmatpush1.msra.mxu0 %v3448
    %3641 = vmatprep.subr.mxu0 0.0
    %3642 = vmatpush1.msra.mxu0 %v3449
    %3643 = vmatprep.subr.mxu0 0.0
    %3644 = vmatpush1.msra.mxu0 %v3450
    %3645 = vmatprep.subr.mxu0 0.0
    %3646 = vmatpush1.msra.mxu0 %v3451
    %3647 = vmatprep.subr.mxu0 0.0
    %3648 = vmatpush1.msra.mxu0 %v3452
    %3649 = vmatprep.subr.mxu0 0.0
    %3650 = vmatpush1.msra.mxu0 %v3453
    %3651 = vmatprep.subr.mxu0 0.0
    %3652 = vmatpush1.msra.mxu0 %v3454
    %3653 = vmatprep.subr.mxu0 0.0
    %3654 = vmatpush1.msra.mxu0 %v3455
    %3655 = vmatprep.subr.mxu0 0.0
    %3656 = vmatpush1.msra.mxu0 %v3456
    %3657 = vmatprep.subr.mxu0 0.0
    %3658 = vmatpush1.msra.mxu0 %v3457
    %3659 = vmatprep.subr.mxu0 0.0
    %3660 = vmatpush1.msra.mxu0 %v3458
    %3661 = vmatprep.subr.mxu0 0.0
    %3662 = vmatpush1.msra.mxu0 %v3459
    %3663 = vmatprep.subr.mxu0 0.0
    %3664 = vmatpush1.msra.mxu0 %v3460
    %3665 = vmatprep.subr.mxu0 0.0
    %3666 = vmatpush1.msra.mxu0 %v3461
    %3667 = vmatprep.mubr.f32.mxu0 %v3393
    %3668 = vmatmul.mubr.f32.gmra.mrb[0].mxu0 %v3392
    %v3669 = vpop.f32.mrb[0].mxu0
    %v3670 = vadd.f32 %v3600, %v3669
    %v3671 = vpop.f32.mrb[0].mxu0
    %3672 = vdwg.mxu0
    %3673 = vmatprep.subr.mxu0 0.0
    %3674 = vmatpush1.msra.mxu0 %v3462
    %3675 = vmatprep.subr.mxu0 0.0
    %3676 = vmatpush1.msra.mxu0 %v3463
    %3677 = vmatprep.subr.mxu0 0.0
    %3678 = vmatpush1.msra.mxu0 %v3464
    %3679 = vmatprep.subr.mxu0 0.0
    %3680 = vmatpush1.msra.mxu0 %v3465
    %3681 = vmatprep.subr.mxu0 0.0
    %3682 = vmatpush1.msra.mxu0 %v3466
    %3683 = vmatprep.subr.mxu0 0.0
    %3684 = vmatpush1.msra.mxu0 %v3467
    %3685 = vmatprep.subr.mxu0 0.0
    %3686 = vmatpush1.msra.mxu0 %v3468
    %3687 = vmatprep.subr.mxu0 0.0
    %3688 = vmatpush1.msra.mxu0 %v3469
    %3689 = vmatprep.subr.mxu0 0.0
    %3690 = vmatpush1.msra.mxu0 %v3470
    %3691 = vmatprep.subr.mxu0 0.0
    %3692 = vmatpush1.msra.mxu0 %v3471
    %3693 = vmatprep.subr.mxu0 0.0
    %3694 = vmatpush1.msra.mxu0 %v3472
    %3695 = vmatprep.subr.mxu0 0.0
    %3696 = vmatpush1.msra.mxu0 %v3473
    %3697 = vmatprep.subr.mxu0 0.0
    %3698 = vmatpush1.msra.mxu0 %v3474
    %3699 = vmatprep.subr.mxu0 0.0
    %3700 = vmatpush1.msra.mxu0 %v3475
    %3701 = vmatprep.subr.mxu0 0.0
    %3702 = vmatpush1.msra.mxu0 %v3476
    %3703 = vmatprep.subr.mxu0 0.0
    %3704 = vmatpush1.msra.mxu0 %v3477
    %3705 = vmatprep.subr.mxu0 0.0
    %3706 = vmatpush1.msra.mxu0 %v3478
    %3707 = vmatprep.subr.mxu0 0.0
    %3708 = vmatpush1.msra.mxu0 %v3479
    %3709 = vmatprep.subr.mxu0 0.0
    %3710 = vmatpush1.msra.mxu0 %v3480
    %3711 = vmatprep.subr.mxu0 0.0
    %3712 = vmatpush1.msra.mxu0 %v3481
    %3713 = vmatprep.subr.mxu0 0.0
    %3714 = vmatpush1.msra.mxu0 %v3482
    %3715 = vmatprep.subr.mxu0 0.0
    %3716 = vmatpush1.msra.mxu0 %v3483
    %3717 = vmatprep.subr.mxu0 0.0
    %3718 = vmatpush1.msra.mxu0 %v3484
    %3719 = vmatprep.subr.mxu0 0.0
    %3720 = vmatpush1.msra.mxu0 %v3485
    %3721 = vmatprep.subr.mxu0 0.0
    %3722 = vmatpush1.msra.mxu0 %v3486
    %3723 = vmatprep.subr.mxu0 0.0
    %3724 = vmatpush1.msra.mxu0 %v3487
    %3725 = vmatprep.subr.mxu0 0.0
    %3726 = vmatpush1.msra.mxu0 %v3488
    %3727 = vmatprep.subr.mxu0 0.0
    %3728 = vmatpush1.msra.mxu0 %v3489
    %3729 = vmatprep.subr.mxu0 0.0
    %3730 = vmatpush1.msra.mxu0 %v3490
    %3731 = vmatprep.subr.mxu0 0.0
    %3732 = vmatpush1.msra.mxu0 %v3491
    %3733 = vmatprep.subr.mxu0 0.0
    %3734 = vmatpush1.msra.mxu0 %v3492
    %3735 = vmatprep.subr.mxu0 0.0
    %3736 = vmatpush1.msra.mxu0 %v3493
    %3737 = vmatprep.mubr.f32.mxu0 %v3395
    %3738 = vmatmul.mubr.f32.gmra.mrb[0].mxu0 %v3394
    %v3739 = vpop.f32.mrb[0].mxu0
    %v3740 = vadd.f32 %v3670, %v3739
    %v3741 = vpop.f32.mrb[0].mxu0
    %3742 = vdwg.mxu0
    %3743 = vmatprep.subr.mxu0 0.0
    %3744 = vmatpush1.msra.mxu0 %v3494
    %3745 = vmatprep.subr.mxu0 0.0
    %3746 = vmatpush1.msra.mxu0 %v3495
    %3747 = vmatprep.subr.mxu0 0.0
    %3748 = vmatpush1.msra.mxu0 %v3496
    %3749 = vmatprep.subr.mxu0 0.0
    %3750 = vmatpush1.msra.mxu0 %v3497
    %3751 = vmatprep.subr.mxu0 0.0
    %3752 = vmatpush1.msra.mxu0 %v3498
    %3753 = vmatprep.subr.mxu0 0.0
    %3754 = vmatpush1.msra.mxu0 %v3499
    %3755 = vmatprep.subr.mxu0 0.0
    %3756 = vmatpush1.msra.mxu0 %v3500
    %3757 = vmatprep.subr.mxu0 0.0
    %3758 = vmatpush1.msra.mxu0 %v3501
    %3759 = vmatprep.subr.mxu0 0.0
    %3760 = vmatpush1.msra.mxu0 %v3502
    %3761 = vmatprep.subr.mxu0 0.0
    %3762 = vmatpush1.msra.mxu0 %v3503
    %3763 = vmatprep.subr.mxu0 0.0
    %3764 = vmatpush1.msra.mxu0 %v3504
    %3765 = vmatprep.subr.mxu0 0.0
    %3766 = vmatpush1.msra.mxu0 %v3505
    %3767 = vmatprep.subr.mxu0 0.0
    %3768 = vmatpush1.msra.mxu0 %v3506
    %3769 = vmatprep.subr.mxu0 0.0
    %3770 = vmatpush1.msra.mxu0 %v3507
    %3771 = vmatprep.subr.mxu0 0.0
    %3772 = vmatpush1.msra.mxu0 %v3508
    %3773 = vmatprep.subr.mxu0 0.0
    %3774 = vmatpush1.msra.mxu0 %v3509
    %3775 = vmatprep.subr.mxu0 0.0
    %3776 = vmatpush1.msra.mxu0 %v3510
    %3777 = vmatprep.subr.mxu0 0.0
    %3778 = vmatpush1.msra.mxu0 %v3511
    %3779 = vmatprep.subr.mxu0 0.0
    %3780 = vmatpush1.msra.mxu0 %v3512
    %3781 = vmatprep.subr.mxu0 0.0
    %3782 = vmatpush1.msra.mxu0 %v3513
    %3783 = vmatprep.subr.mxu0 0.0
    %3784 = vmatpush1.msra.mxu0 %v3514
    %3785 = vmatprep.subr.mxu0 0.0
    %3786 = vmatpush1.msra.mxu0 %v3515
    %3787 = vmatprep.subr.mxu0 0.0
    %3788 = vmatpush1.msra.mxu0 %v3516
    %3789 = vmatprep.subr.mxu0 0.0
    %3790 = vmatpush1.msra.mxu0 %v3517
    %3791 = vmatprep.subr.mxu0 0.0
    %3792 = vmatpush1.msra.mxu0 %v3518
    %3793 = vmatprep.subr.mxu0 0.0
    %3794 = vmatpush1.msra.mxu0 %v3519
    %3795 = vmatprep.subr.mxu0 0.0
    %3796 = vmatpush1.msra.mxu0 %v3520
    %3797 = vmatprep.subr.mxu0 0.0
    %3798 = vmatpush1.msra.mxu0 %v3521
    %3799 = vmatprep.subr.mxu0 0.0
    %3800 = vmatpush1.msra.mxu0 %v3522
    %3801 = vmatprep.subr.mxu0 0.0
    %3802 = vmatpush1.msra.mxu0 %v3523
    %3803 = vmatprep.subr.mxu0 0.0
    %3804 = vmatpush1.msra.mxu0 %v3524
    %3805 = vmatprep.subr.mxu0 0.0
    %3806 = vmatpush1.msra.mxu0 %v3525
    %3807 = vmatprep.mubr.f32.mxu0 %v3397
    %3808 = vmatmul.mubr.f32.gmra.mrb[0].mxu0 %v3396
    %v3809 = vpop.f32.mrb[0].mxu0
    %v3810 = vadd.f32 %v3740, %v3809
    %v3811 = vpop.f32.mrb[0].mxu0
    %3812 = vdwg.mxu0
    %3813 = vst [vmem:[%s11] sm:$0xff] %v3810
    // Predicated region
    $region62: #{gru_model_forward.1} parent=1 // pred_check
      _
    $region63: #{gru_model_forward.1} parent=1 // pred_check_branch
      %3815 = sbr.rel (0) target = $region65
    $region64: #{gru_model_forward.1} parent=1 // pred_region
      _
    $region65: #{gru_model_forward.1} parent=1 // pred_fallthru
      _
    // Predicated region
    $region66: #{gru_model_forward.1} parent=1 // pred_check
      _
    $region67: #{gru_model_forward.1} parent=1 // pred_check_branch
      %3817 = sbr.rel (0) target = $region69
    $region68: #{gru_model_forward.1} parent=1 // pred_region
      _
    $region69: #{gru_model_forward.1} parent=1 // pred_fallthru
      _
    %3818 = vsyncpa [#allocation5], 1
    %3819 = vsyncpa [#allocation7], 1
    %3820 = vsyncpa [#allocation10], 1

</llo_original>
